<compile_context>
chip_gen: v6e
topology: v6e:2x2x1
jax: 0.10.0
libtpu: 0.0.40
codegen_flags: <defaults>
</compile_context>

<pallas_src>
import jax
import jax.numpy as jnp
from jax.experimental import pallas as pl
from jax.experimental.pallas import tpu as pltpu

_VMEM = pl.BlockSpec(memory_space=pltpu.MemorySpace.VMEM)


# ----------------------------- fused Pallas kernel ---------------------------
def _fused_part_seg_kernel(a_ref, x_ref, *args):
    """args = (w0, b0, w1, b1, ..., w9, b9, o_ref)."""
    o_ref = args[-1]
    p = args[:-1]  # 20 param refs

    def lin(h, w_ref, b_ref, relu=True):
        # y = h @ W + b  (bf16 operands on the MXU, f32 accumulate / epilogue)
        y = jnp.dot(h.astype(jnp.bfloat16), w_ref[...],
                    preferred_element_type=jnp.float32)
        y = y + b_ref[...]
        return jnp.maximum(y, 0.0) if relu else y

    a = a_ref[...]            # (N, N) bf16 normalized adjacency
    h = x_ref[...]            # (N, Cin) f32

    # cnn1..cnn3 (1x1 convs == per-point linears) + ReLU
    h = lin(h, p[0], p[1])
    h = lin(h, p[2], p[3])
    h = lin(h, p[4], p[5])

    # gcn1..gcn3: relu((A_hat @ h) @ W + b)   (reordered: Cin < Cout)
    for k in (6, 8, 10):
        ah = jnp.dot(a, h.astype(jnp.bfloat16),
                     preferred_element_type=jnp.float32)
        h = lin(ah, p[k], p[k + 1])

    # cnnd1..cnnd3 + ReLU
    h = lin(h, p[12], p[13])
    h = lin(h, p[14], p[15])
    h = lin(h, p[16], p[17])

    # cnnd4 (no ReLU, padded to 128 lanes) fused with row-wise softmax.
    # Padding columns have bias -1e30 -> exp() == 0 -> no softmax mass.
    y = lin(h, p[18], p[19], relu=False)
    m = jnp.max(y, axis=-1, keepdims=True)
    e = jnp.exp(y - m)
    o_ref[...] = e / jnp.sum(e, axis=-1, keepdims=True)


# ------------------------------ model pieces --------------------------------
def gcn_norm_adj(edge_index, num_nodes):
    """Dense symmetric GCN normalization: D^-1/2 (A + I) D^-1/2.

    PyG convention: row 0 = source, row 1 = target; messages aggregate at the
    target node, so A[target, source] = 1.
    """
    src, dst = edge_index[0], edge_index[1]
    a = jnp.zeros((num_nodes, num_nodes), jnp.float32)
    a = a.at[dst, src].add(1.0)
    a = a + jnp.eye(num_nodes, dtype=jnp.float32)   # self loops
    deg = jnp.sum(a, axis=1)
    dinv = jnp.where(deg > 0, 1.0 / jnp.sqrt(deg), 0.0)
    return dinv[:, None] * a * dinv[None, :]


def init_params(key, input_dim, output_dim):
    """Deterministic parameter init (Kaiming-uniform-ish, like nn.Conv1d)."""
    layer_dims = [
        (input_dim, 32), (32, 64), (64, 128),                      # cnn1..3
        (128, 256), (256, 512), (512, 1024),                       # gcn1..3
        (1024, 512), (512, 256), (256, 128), (128, output_dim),    # cnnd1..4
    ]
    params = []
    for ci, co in layer_dims:
        key, kw, kb = jax.random.split(key, 3)
        scale = 1.0 / jnp.sqrt(jnp.float32(ci))
        w = jax.random.uniform(kw, (ci, co), jnp.float32, -scale, scale)
        b = jax.random.uniform(kb, (1, co), jnp.float32, -scale, scale)
        params.append((w, b))
    return params


def prepare_params(params, output_dim):
    """bf16 weights for the MXU; pad the final layer to a 128-lane multiple."""
    pad_out = max(128, ((output_dim + 127) // 128) * 128)
    prepped = []
    last = len(params) - 1
    for i, (w, b) in enumerate(params):
        if i == last and pad_out != output_dim:
            ci = w.shape[0]
            w = jnp.concatenate(
                [w, jnp.zeros((ci, pad_out - output_dim), w.dtype)], axis=1)
            b = jnp.concatenate(
                [b, jnp.full((1, pad_out - output_dim), -1e30, b.dtype)], axis=1)
        prepped.append((w.astype(jnp.bfloat16), b.astype(jnp.float32)))
    return prepped, pad_out


def part_seg3_forward(x, edge_index, prepped_params, pad_out, output_dim):
    """Forward pass of part_seg3.  x: (N, input_dim).  Returns (N, output_dim)."""
    n = x.shape[0]
    a_hat = gcn_norm_adj(edge_index, n).astype(jnp.bfloat16)

    flat = []
    for w, b in prepped_params:
        flat.extend([w, b])

    out_pad = pl.pallas_call(
        _fused_part_seg_kernel,
        out_shape=jax.ShapeDtypeStruct((n, pad_out), jnp.float32),
        in_specs=[_VMEM] * (2 + len(flat)),
        out_specs=_VMEM,
    )(a_hat, x.astype(jnp.float32), *flat)

    # drop the (zero-probability) lane padding
    return out_pad[:, :output_dim]


# ----------------------------------- main ------------------------------------
if __name__ == "__main__":
    key = jax.random.PRNGKey(0)
    N, INPUT_DIM, OUTPUT_DIM = 64, 4, 8

    kx, kp = jax.random.split(key)
    x = jax.random.normal(kx, (N, INPUT_DIM), jnp.float32)
    params = init_params(kp, INPUT_DIM, OUTPUT_DIM)
    prepped, pad_out = prepare_params(params, OUTPUT_DIM)

    # deterministic bidirectional ring graph
    idx = jnp.arange(N)
    src = jnp.concatenate([idx, (idx + 1) % N])
    dst = jnp.concatenate([(idx + 1) % N, idx])
    edge_index = jnp.stack([src, dst]).astype(jnp.int32)

    fwd = jax.jit(lambda xx, ei: part_seg3_forward(xx, ei, prepped, pad_out,
                                                   OUTPUT_DIM))
    out = fwd(x, edge_index)
    jax.block_until_ready(out)

    assert out.shape == (N, OUTPUT_DIM)
    assert bool(jnp.all(jnp.isfinite(out)))
    # rows of a softmax must sum to 1 (padded classes carry zero mass)
    assert bool(jnp.allclose(jnp.sum(out, axis=-1), 1.0, atol=1e-5))
    print("KERNEL_OK")
</pallas_src>

<mosaic_0001>
module attributes {stable_mosaic.version = 11 : i64} {
  func.func private @main(%arg0: i32) attributes {dimension_semantics = [#tpu.dimension_semantics<core_parallel>], iteration_bounds = array<i64: 2>, tpu.core_type = #tpu.core_type<sc_scalar_subcore>, window_params = []} {
    return
  }
}

module attributes {stable_mosaic.version = 11 : i64} {
  func.func private @main(%arg0: i32) attributes {dimension_semantics = [#tpu.dimension_semantics<core_parallel>], iteration_bounds = array<i64: 2>, tpu.core_type = #tpu.core_type<sc_scalar_subcore>, window_params = []} {
    return
  }
}

module attributes {stable_mosaic.version = 11 : i64} {
  func.func @_fused_part_seg_kernel(%arg0: memref<64x64xbf16, #tpu.memory_space<vmem>>, %arg1: memref<64x4xf32, #tpu.memory_space<vmem>>, %arg2: memref<4x32xbf16, #tpu.memory_space<vmem>>, %arg3: memref<1x32xf32, #tpu.memory_space<vmem>>, %arg4: memref<32x64xbf16, #tpu.memory_space<vmem>>, %arg5: memref<1x64xf32, #tpu.memory_space<vmem>>, %arg6: memref<64x128xbf16, #tpu.memory_space<vmem>>, %arg7: memref<1x128xf32, #tpu.memory_space<vmem>>, %arg8: memref<128x256xbf16, #tpu.memory_space<vmem>>, %arg9: memref<1x256xf32, #tpu.memory_space<vmem>>, %arg10: memref<256x512xbf16, #tpu.memory_space<vmem>>, %arg11: memref<1x512xf32, #tpu.memory_space<vmem>>, %arg12: memref<512x1024xbf16, #tpu.memory_space<vmem>>, %arg13: memref<1x1024xf32, #tpu.memory_space<vmem>>, %arg14: memref<1024x512xbf16, #tpu.memory_space<vmem>>, %arg15: memref<1x512xf32, #tpu.memory_space<vmem>>, %arg16: memref<512x256xbf16, #tpu.memory_space<vmem>>, %arg17: memref<1x256xf32, #tpu.memory_space<vmem>>, %arg18: memref<256x128xbf16, #tpu.memory_space<vmem>>, %arg19: memref<1x128xf32, #tpu.memory_space<vmem>>, %arg20: memref<128x128xbf16, #tpu.memory_space<vmem>>, %arg21: memref<1x128xf32, #tpu.memory_space<vmem>>, %arg22: memref<64x128xf32, #tpu.memory_space<vmem>>) attributes {dimension_semantics = [], scalar_prefetch = 0 : i64, scratch_operands = 0 : i64, tpu.core_type = #tpu.core_type<tc>} {
    %c0 = arith.constant 0 : index
    %c0_0 = arith.constant 0 : index
    %0 = vector.load %arg0[%c0, %c0_0] : memref<64x64xbf16, #tpu.memory_space<vmem>>, vector<64x64xbf16>
    %c0_1 = arith.constant 0 : index
    %c0_2 = arith.constant 0 : index
    %1 = vector.load %arg1[%c0_1, %c0_2] : memref<64x4xf32, #tpu.memory_space<vmem>>, vector<64x4xf32>
    %2 = arith.truncf %1 : vector<64x4xf32> to vector<64x4xbf16>
    %c0_3 = arith.constant 0 : index
    %c0_4 = arith.constant 0 : index
    %3 = vector.load %arg2[%c0_3, %c0_4] : memref<4x32xbf16, #tpu.memory_space<vmem>>, vector<4x32xbf16>
    %cst = arith.constant dense<0.000000e+00> : vector<64x32xf32>
    %4 = tpu.matmul %2, %3, %cst {dimension_numbers = #tpu.dot_dimension_numbers<[1], [0], [0], [1], [0, 0, 1, 1], [], []>} : vector<64x4xbf16>, vector<4x32xbf16>, vector<64x32xf32> -> vector<64x32xf32>
    %c0_5 = arith.constant 0 : index
    %c0_6 = arith.constant 0 : index
    %5 = vector.load %arg3[%c0_5, %c0_6] : memref<1x32xf32, #tpu.memory_space<vmem>>, vector<1x32xf32>
    %6 = vector.broadcast %5 : vector<1x32xf32> to vector<64x32xf32>
    %7 = arith.addf %4, %6 : vector<64x32xf32>
    %cst_7 = arith.constant 0.000000e+00 : f32
    %8 = vector.broadcast %cst_7 : f32 to vector<64x32xf32>
    %9 = arith.maximumf %7, %8 : vector<64x32xf32>
    %10 = arith.truncf %9 : vector<64x32xf32> to vector<64x32xbf16>
    %c0_8 = arith.constant 0 : index
    %c0_9 = arith.constant 0 : index
    %11 = vector.load %arg4[%c0_8, %c0_9] : memref<32x64xbf16, #tpu.memory_space<vmem>>, vector<32x64xbf16>
    %cst_10 = arith.constant dense<0.000000e+00> : vector<64x64xf32>
    %12 = tpu.matmul %10, %11, %cst_10 {dimension_numbers = #tpu.dot_dimension_numbers<[1], [0], [0], [1], [0, 0, 1, 1], [], []>} : vector<64x32xbf16>, vector<32x64xbf16>, vector<64x64xf32> -> vector<64x64xf32>
    %c0_11 = arith.constant 0 : index
    %c0_12 = arith.constant 0 : index
    %13 = vector.load %arg5[%c0_11, %c0_12] : memref<1x64xf32, #tpu.memory_space<vmem>>, vector<1x64xf32>
    %14 = vector.broadcast %13 : vector<1x64xf32> to vector<64x64xf32>
    %15 = arith.addf %12, %14 : vector<64x64xf32>
    %cst_13 = arith.constant 0.000000e+00 : f32
    %16 = vector.broadcast %cst_13 : f32 to vector<64x64xf32>
    %17 = arith.maximumf %15, %16 : vector<64x64xf32>
    %18 = arith.truncf %17 : vector<64x64xf32> to vector<64x64xbf16>
    %c0_14 = arith.constant 0 : index
    %c0_15 = arith.constant 0 : index
    %19 = vector.load %arg6[%c0_14, %c0_15] : memref<64x128xbf16, #tpu.memory_space<vmem>>, vector<64x128xbf16>
    %cst_16 = arith.constant dense<0.000000e+00> : vector<64x128xf32>
    %20 = tpu.matmul %18, %19, %cst_16 {dimension_numbers = #tpu.dot_dimension_numbers<[1], [0], [0], [1], [0, 0, 1, 1], [], []>} : vector<64x64xbf16>, vector<64x128xbf16>, vector<64x128xf32> -> vector<64x128xf32>
    %c0_17 = arith.constant 0 : index
    %c0_18 = arith.constant 0 : index
    %21 = vector.load %arg7[%c0_17, %c0_18] : memref<1x128xf32, #tpu.memory_space<vmem>>, vector<1x128xf32>
    %22 = vector.broadcast %21 : vector<1x128xf32> to vector<64x128xf32>
    %23 = arith.addf %20, %22 : vector<64x128xf32>
    %cst_19 = arith.constant 0.000000e+00 : f32
    %24 = vector.broadcast %cst_19 : f32 to vector<64x128xf32>
    %25 = arith.maximumf %23, %24 : vector<64x128xf32>
    %26 = arith.truncf %25 : vector<64x128xf32> to vector<64x128xbf16>
    %cst_20 = arith.constant dense<0.000000e+00> : vector<64x128xf32>
    %27 = tpu.matmul %0, %26, %cst_20 {dimension_numbers = #tpu.dot_dimension_numbers<[1], [0], [0], [1], [0, 0, 1, 1], [], []>} : vector<64x64xbf16>, vector<64x128xbf16>, vector<64x128xf32> -> vector<64x128xf32>
    %28 = arith.truncf %27 : vector<64x128xf32> to vector<64x128xbf16>
    %c0_21 = arith.constant 0 : index
    %c0_22 = arith.constant 0 : index
    %29 = vector.load %arg8[%c0_21, %c0_22] : memref<128x256xbf16, #tpu.memory_space<vmem>>, vector<128x256xbf16>
    %cst_23 = arith.constant dense<0.000000e+00> : vector<64x256xf32>
    %30 = tpu.matmul %28, %29, %cst_23 {dimension_numbers = #tpu.dot_dimension_numbers<[1], [0], [0], [1], [0, 0, 1, 1], [], []>} : vector<64x128xbf16>, vector<128x256xbf16>, vector<64x256xf32> -> vector<64x256xf32>
    %c0_24 = arith.constant 0 : index
    %c0_25 = arith.constant 0 : index
    %31 = vector.load %arg9[%c0_24, %c0_25] : memref<1x256xf32, #tpu.memory_space<vmem>>, vector<1x256xf32>
    %32 = vector.broadcast %31 : vector<1x256xf32> to vector<64x256xf32>
    %33 = arith.addf %30, %32 : vector<64x256xf32>
    %cst_26 = arith.constant 0.000000e+00 : f32
    %34 = vector.broadcast %cst_26 : f32 to vector<64x256xf32>
    %35 = arith.maximumf %33, %34 : vector<64x256xf32>
    %36 = arith.truncf %35 : vector<64x256xf32> to vector<64x256xbf16>
    %cst_27 = arith.constant dense<0.000000e+00> : vector<64x256xf32>
    %37 = tpu.matmul %0, %36, %cst_27 {dimension_numbers = #tpu.dot_dimension_numbers<[1], [0], [0], [1], [0, 0, 1, 1], [], []>} : vector<64x64xbf16>, vector<64x256xbf16>, vector<64x256xf32> -> vector<64x256xf32>
    %38 = arith.truncf %37 : vector<64x256xf32> to vector<64x256xbf16>
    %c0_28 = arith.constant 0 : index
    %c0_29 = arith.constant 0 : index
    %39 = vector.load %arg10[%c0_28, %c0_29] : memref<256x512xbf16, #tpu.memory_space<vmem>>, vector<256x512xbf16>
    %cst_30 = arith.constant dense<0.000000e+00> : vector<64x512xf32>
    %40 = tpu.matmul %38, %39, %cst_30 {dimension_numbers = #tpu.dot_dimension_numbers<[1], [0], [0], [1], [0, 0, 1, 1], [], []>} : vector<64x256xbf16>, vector<256x512xbf16>, vector<64x512xf32> -> vector<64x512xf32>
    %c0_31 = arith.constant 0 : index
    %c0_32 = arith.constant 0 : index
    %41 = vector.load %arg11[%c0_31, %c0_32] : memref<1x512xf32, #tpu.memory_space<vmem>>, vector<1x512xf32>
    %42 = vector.broadcast %41 : vector<1x512xf32> to vector<64x512xf32>
    %43 = arith.addf %40, %42 : vector<64x512xf32>
    %cst_33 = arith.constant 0.000000e+00 : f32
    %44 = vector.broadcast %cst_33 : f32 to vector<64x512xf32>
    %45 = arith.maximumf %43, %44 : vector<64x512xf32>
    %46 = arith.truncf %45 : vector<64x512xf32> to vector<64x512xbf16>
    %cst_34 = arith.constant dense<0.000000e+00> : vector<64x512xf32>
    %47 = tpu.matmul %0, %46, %cst_34 {dimension_numbers = #tpu.dot_dimension_numbers<[1], [0], [0], [1], [0, 0, 1, 1], [], []>} : vector<64x64xbf16>, vector<64x512xbf16>, vector<64x512xf32> -> vector<64x512xf32>
    %48 = arith.truncf %47 : vector<64x512xf32> to vector<64x512xbf16>
    %c0_35 = arith.constant 0 : index
    %c0_36 = arith.constant 0 : index
    %49 = vector.load %arg12[%c0_35, %c0_36] : memref<512x1024xbf16, #tpu.memory_space<vmem>>, vector<512x1024xbf16>
    %cst_37 = arith.constant dense<0.000000e+00> : vector<64x1024xf32>
    %50 = tpu.matmul %48, %49, %cst_37 {dimension_numbers = #tpu.dot_dimension_numbers<[1], [0], [0], [1], [0, 0, 1, 1], [], []>} : vector<64x512xbf16>, vector<512x1024xbf16>, vector<64x1024xf32> -> vector<64x1024xf32>
    %c0_38 = arith.constant 0 : index
    %c0_39 = arith.constant 0 : index
    %51 = vector.load %arg13[%c0_38, %c0_39] : memref<1x1024xf32, #tpu.memory_space<vmem>>, vector<1x1024xf32>
    %52 = vector.broadcast %51 : vector<1x1024xf32> to vector<64x1024xf32>
    %53 = arith.addf %50, %52 : vector<64x1024xf32>
    %cst_40 = arith.constant 0.000000e+00 : f32
    %54 = vector.broadcast %cst_40 : f32 to vector<64x1024xf32>
    %55 = arith.maximumf %53, %54 : vector<64x1024xf32>
    %56 = arith.truncf %55 : vector<64x1024xf32> to vector<64x1024xbf16>
    %c0_41 = arith.constant 0 : index
    %c0_42 = arith.constant 0 : index
    %57 = vector.load %arg14[%c0_41, %c0_42] : memref<1024x512xbf16, #tpu.memory_space<vmem>>, vector<1024x512xbf16>
    %cst_43 = arith.constant dense<0.000000e+00> : vector<64x512xf32>
    %58 = tpu.matmul %56, %57, %cst_43 {dimension_numbers = #tpu.dot_dimension_numbers<[1], [0], [0], [1], [0, 0, 1, 1], [], []>} : vector<64x1024xbf16>, vector<1024x512xbf16>, vector<64x512xf32> -> vector<64x512xf32>
    %c0_44 = arith.constant 0 : index
    %c0_45 = arith.constant 0 : index
    %59 = vector.load %arg15[%c0_44, %c0_45] : memref<1x512xf32, #tpu.memory_space<vmem>>, vector<1x512xf32>
    %60 = vector.broadcast %59 : vector<1x512xf32> to vector<64x512xf32>
    %61 = arith.addf %58, %60 : vector<64x512xf32>
    %cst_46 = arith.constant 0.000000e+00 : f32
    %62 = vector.broadcast %cst_46 : f32 to vector<64x512xf32>
    %63 = arith.maximumf %61, %62 : vector<64x512xf32>
    %64 = arith.truncf %63 : vector<64x512xf32> to vector<64x512xbf16>
    %c0_47 = arith.constant 0 : index
    %c0_48 = arith.constant 0 : index
    %65 = vector.load %arg16[%c0_47, %c0_48] : memref<512x256xbf16, #tpu.memory_space<vmem>>, vector<512x256xbf16>
    %cst_49 = arith.constant dense<0.000000e+00> : vector<64x256xf32>
    %66 = tpu.matmul %64, %65, %cst_49 {dimension_numbers = #tpu.dot_dimension_numbers<[1], [0], [0], [1], [0, 0, 1, 1], [], []>} : vector<64x512xbf16>, vector<512x256xbf16>, vector<64x256xf32> -> vector<64x256xf32>
    %c0_50 = arith.constant 0 : index
    %c0_51 = arith.constant 0 : index
    %67 = vector.load %arg17[%c0_50, %c0_51] : memref<1x256xf32, #tpu.memory_space<vmem>>, vector<1x256xf32>
    %68 = vector.broadcast %67 : vector<1x256xf32> to vector<64x256xf32>
    %69 = arith.addf %66, %68 : vector<64x256xf32>
    %cst_52 = arith.constant 0.000000e+00 : f32
    %70 = vector.broadcast %cst_52 : f32 to vector<64x256xf32>
    %71 = arith.maximumf %69, %70 : vector<64x256xf32>
    %72 = arith.truncf %71 : vector<64x256xf32> to vector<64x256xbf16>
    %c0_53 = arith.constant 0 : index
    %c0_54 = arith.constant 0 : index
    %73 = vector.load %arg18[%c0_53, %c0_54] : memref<256x128xbf16, #tpu.memory_space<vmem>>, vector<256x128xbf16>
    %cst_55 = arith.constant dense<0.000000e+00> : vector<64x128xf32>
    %74 = tpu.matmul %72, %73, %cst_55 {dimension_numbers = #tpu.dot_dimension_numbers<[1], [0], [0], [1], [0, 0, 1, 1], [], []>} : vector<64x256xbf16>, vector<256x128xbf16>, vector<64x128xf32> -> vector<64x128xf32>
    %c0_56 = arith.constant 0 : index
    %c0_57 = arith.constant 0 : index
    %75 = vector.load %arg19[%c0_56, %c0_57] : memref<1x128xf32, #tpu.memory_space<vmem>>, vector<1x128xf32>
    %76 = vector.broadcast %75 : vector<1x128xf32> to vector<64x128xf32>
    %77 = arith.addf %74, %76 : vector<64x128xf32>
    %cst_58 = arith.constant 0.000000e+00 : f32
    %78 = vector.broadcast %cst_58 : f32 to vector<64x128xf32>
    %79 = arith.maximumf %77, %78 : vector<64x128xf32>
    %80 = arith.truncf %79 : vector<64x128xf32> to vector<64x128xbf16>
    %c0_59 = arith.constant 0 : index
    %c0_60 = arith.constant 0 : index
    %81 = vector.load %arg20[%c0_59, %c0_60] : memref<128x128xbf16, #tpu.memory_space<vmem>>, vector<128x128xbf16>
    %cst_61 = arith.constant dense<0.000000e+00> : vector<64x128xf32>
    %82 = tpu.matmul %80, %81, %cst_61 {dimension_numbers = #tpu.dot_dimension_numbers<[1], [0], [0], [1], [0, 0, 1, 1], [], []>} : vector<64x128xbf16>, vector<128x128xbf16>, vector<64x128xf32> -> vector<64x128xf32>
    %c0_62 = arith.constant 0 : index
    %c0_63 = arith.constant 0 : index
    %83 = vector.load %arg21[%c0_62, %c0_63] : memref<1x128xf32, #tpu.memory_space<vmem>>, vector<1x128xf32>
    %84 = vector.broadcast %83 : vector<1x128xf32> to vector<64x128xf32>
    %85 = arith.addf %82, %84 : vector<64x128xf32>
    %cst_64 = arith.constant dense<0xFF800000> : vector<64xf32>
    %86 = vector.multi_reduction <maximumf>, %85, %cst_64 [1] : vector<64x128xf32> to vector<64xf32>
    %87 = vector.shape_cast %86 : vector<64xf32> to vector<64x1xf32>
    %88 = vector.broadcast %87 : vector<64x1xf32> to vector<64x128xf32>
    %89 = arith.subf %85, %88 : vector<64x128xf32>
    %90 = math.exp %89 : vector<64x128xf32>
    %cst_65 = arith.constant dense<0.000000e+00> : vector<64xf32>
    %91 = vector.multi_reduction <add>, %90, %cst_65 [1] : vector<64x128xf32> to vector<64xf32>
    %92 = vector.shape_cast %91 : vector<64xf32> to vector<64x1xf32>
    %93 = vector.broadcast %92 : vector<64x1xf32> to vector<64x128xf32>
    %94 = arith.divf %90, %93 : vector<64x128xf32>
    %c0_66 = arith.constant 0 : index
    %c0_67 = arith.constant 0 : index
    %95 = vector.load %arg22[%c0_66, %c0_67] : memref<64x128xf32, #tpu.memory_space<vmem>>, vector<64x128xf32>
    tpu.vector_store %arg22[%c0_66, %c0_67], %94 {strides = array<i32>} : memref<64x128xf32, #tpu.memory_space<vmem>>, vector<64x128xf32>,
    return
  }
}

</mosaic_0001>

<llo_original>
// kernel: _lambda_.1
$region0: #{_lambda_.1}
  #allocation0 [shape = 'u32[]', space=smem, size = 0x4, offset = 0x4, fixed_abs, tag = 'smem constant byte address 0x4 - core index']
  #allocation1 [shape = 'u32[144,128]{1,0:T(1,128)}', space=vmem, size = 0x12000, scoped, tag = 'internal scratch']
  %s0 = inlined_call_operand.vmem [shape: bf16[64,64], index: 0, kind: input, shape index: {}]
  %s1 = inlined_call_operand.vmem [shape: f32[64,4], index: 1, kind: input, shape index: {}]
  %s2 = inlined_call_operand.vmem [shape: bf16[4,32], index: 2, kind: input, shape index: {}]
  %s3 = inlined_call_operand.vmem [shape: f32[1,32], index: 3, kind: input, shape index: {}]
  %s4 = inlined_call_operand.vmem [shape: bf16[32,64], index: 4, kind: input, shape index: {}]
  %s5 = inlined_call_operand.vmem [shape: f32[1,64], index: 5, kind: input, shape index: {}]
  %s6 = inlined_call_operand.vmem [shape: bf16[64,128], index: 6, kind: input, shape index: {}]
  %s7 = inlined_call_operand.vmem [shape: f32[1,128], index: 7, kind: input, shape index: {}]
  %s8 = inlined_call_operand.vmem [shape: bf16[128,256], index: 8, kind: input, shape index: {}]
  %s9 = inlined_call_operand.vmem [shape: f32[1,256], index: 9, kind: input, shape index: {}]
  %s10 = inlined_call_operand.vmem [shape: bf16[256,512], index: 10, kind: input, shape index: {}]
  %s11 = inlined_call_operand.vmem [shape: f32[1,512], index: 11, kind: input, shape index: {}]
  %s12 = inlined_call_operand.vmem [shape: bf16[512,1024], index: 12, kind: input, shape index: {}]
  %s13 = inlined_call_operand.vmem [shape: f32[1,1024], index: 13, kind: input, shape index: {}]
  %s14 = inlined_call_operand.vmem [shape: bf16[1024,512], index: 14, kind: input, shape index: {}]
  %s15 = inlined_call_operand.vmem [shape: f32[1,512], index: 15, kind: input, shape index: {}]
  %s16 = inlined_call_operand.vmem [shape: bf16[512,256], index: 16, kind: input, shape index: {}]
  %s17 = inlined_call_operand.vmem [shape: f32[1,256], index: 17, kind: input, shape index: {}]
  %s18 = inlined_call_operand.vmem [shape: bf16[256,128], index: 18, kind: input, shape index: {}]
  %s19 = inlined_call_operand.vmem [shape: f32[1,128], index: 19, kind: input, shape index: {}]
  %s20 = inlined_call_operand.vmem [shape: bf16[128,128], index: 20, kind: input, shape index: {}]
  %s21 = inlined_call_operand.vmem [shape: f32[1,128], index: 21, kind: input, shape index: {}]
  %s22 = inlined_call_operand.vmem [shape: f32[64,128], index: 22, kind: output, shape index: {}]
  %s23 = sld [smem:[#allocation0]]
  $region98: #{_lambda_.1} parent=0
    _
  %s25 = ssub.s32 1, %s23
  %s26 = scalar_select 0, %s25, %s23
  // Predicated region
  $region2: #{_lambda_.1} parent=0 // pred_check
    _
  $region3: #{_lambda_.1} parent=0 // pred_check_branch
    %28 = sbr.rel (0) target = $region5
  $region4: #{_lambda_.1} parent=0 // pred_region
    _
  $region5: #{_lambda_.1} parent=0 // pred_fallthru
    _
  // Predicated region
  $region6: #{_lambda_.1} parent=0 // pred_check
    _
  $region7: #{_lambda_.1} parent=0 // pred_check_branch
    %30 = sbr.rel (0) target = $region9
  $region8: #{_lambda_.1} parent=0 // pred_region
    _
  $region9: #{_lambda_.1} parent=0 // pred_fallthru
    _
  // Predicated region
  $region10: #{_lambda_.1} parent=0 // pred_check
    _
  $region11: #{_lambda_.1} parent=0 // pred_check_branch
    %32 = sbr.rel (0) target = $region13
  $region12: #{_lambda_.1} parent=0 // pred_region
    _
  $region13: #{_lambda_.1} parent=0 // pred_fallthru
    _
  // Predicated region
  $region14: #{_lambda_.1} parent=0 // pred_check
    _
  $region15: #{_lambda_.1} parent=0 // pred_check_branch
    %34 = sbr.rel (0) target = $region17
  $region16: #{_lambda_.1} parent=0 // pred_region
    _
  $region17: #{_lambda_.1} parent=0 // pred_fallthru
    _
  // Predicated region
  $region18: #{_lambda_.1} parent=0 // pred_check
    _
  $region19: #{_lambda_.1} parent=0 // pred_check_branch
    %36 = sbr.rel (0) target = $region21
  $region20: #{_lambda_.1} parent=0 // pred_region
    _
  $region21: #{_lambda_.1} parent=0 // pred_fallthru
    _
  // Predicated region
  $region22: #{_lambda_.1} parent=0 // pred_check
    _
  $region23: #{_lambda_.1} parent=0 // pred_check_branch
    %38 = sbr.rel (0) target = $region25
  $region24: #{_lambda_.1} parent=0 // pred_region
    _
  $region25: #{_lambda_.1} parent=0 // pred_fallthru
    _
  // Predicated region
  $region26: #{_lambda_.1} parent=0 // pred_check
    _
  $region27: #{_lambda_.1} parent=0 // pred_check_branch
    %40 = sbr.rel (0) target = $region29
  $region28: #{_lambda_.1} parent=0 // pred_region
    _
  $region29: #{_lambda_.1} parent=0 // pred_fallthru
    _
  // Predicated region
  $region30: #{_lambda_.1} parent=0 // pred_check
    _
  $region31: #{_lambda_.1} parent=0 // pred_check_branch
    %42 = sbr.rel (0) target = $region33
  $region32: #{_lambda_.1} parent=0 // pred_region
    _
  $region33: #{_lambda_.1} parent=0 // pred_fallthru
    _
  // Predicated region
  $region34: #{_lambda_.1} parent=0 // pred_check
    _
  $region35: #{_lambda_.1} parent=0 // pred_check_branch
    %44 = sbr.rel (0) target = $region37
  $region36: #{_lambda_.1} parent=0 // pred_region
    _
  $region37: #{_lambda_.1} parent=0 // pred_fallthru
    _
  // Predicated region
  $region38: #{_lambda_.1} parent=0 // pred_check
    _
  $region39: #{_lambda_.1} parent=0 // pred_check_branch
    %46 = sbr.rel (0) target = $region41
  $region40: #{_lambda_.1} parent=0 // pred_region
    _
  $region41: #{_lambda_.1} parent=0 // pred_fallthru
    _
  // Predicated region
  $region42: #{_lambda_.1} parent=0 // pred_check
    _
  $region43: #{_lambda_.1} parent=0 // pred_check_branch
    %48 = sbr.rel (0) target = $region45
  $region44: #{_lambda_.1} parent=0 // pred_region
    _
  $region45: #{_lambda_.1} parent=0 // pred_fallthru
    _
  // Predicated region
  $region46: #{_lambda_.1} parent=0 // pred_check
    _
  $region47: #{_lambda_.1} parent=0 // pred_check_branch
    %50 = sbr.rel (0) target = $region49
  $region48: #{_lambda_.1} parent=0 // pred_region
    _
  $region49: #{_lambda_.1} parent=0 // pred_fallthru
    _
  // Predicated region
  $region50: #{_lambda_.1} parent=0 // pred_check
    _
  $region51: #{_lambda_.1} parent=0 // pred_check_branch
    %52 = sbr.rel (0) target = $region53
  $region52: #{_lambda_.1} parent=0 // pred_region
    _
  $region53: #{_lambda_.1} parent=0 // pred_fallthru
    _
  // Predicated region
  $region54: #{_lambda_.1} parent=0 // pred_check
    _
  $region55: #{_lambda_.1} parent=0 // pred_check_branch
    %54 = sbr.rel (0) target = $region57
  $region56: #{_lambda_.1} parent=0 // pred_region
    _
  $region57: #{_lambda_.1} parent=0 // pred_fallthru
    _
  // Predicated region
  $region58: #{_lambda_.1} parent=0 // pred_check
    _
  $region59: #{_lambda_.1} parent=0 // pred_check_branch
    %56 = sbr.rel (0) target = $region61
  $region60: #{_lambda_.1} parent=0 // pred_region
    _
  $region61: #{_lambda_.1} parent=0 // pred_fallthru
    _
  // Predicated region
  $region62: #{_lambda_.1} parent=0 // pred_check
    _
  $region63: #{_lambda_.1} parent=0 // pred_check_branch
    %58 = sbr.rel (0) target = $region65
  $region64: #{_lambda_.1} parent=0 // pred_region
    _
  $region65: #{_lambda_.1} parent=0 // pred_fallthru
    _
  // Predicated region
  $region66: #{_lambda_.1} parent=0 // pred_check
    _
  $region67: #{_lambda_.1} parent=0 // pred_check_branch
    %60 = sbr.rel (0) target = $region69
  $region68: #{_lambda_.1} parent=0 // pred_region
    _
  $region69: #{_lambda_.1} parent=0 // pred_fallthru
    _
  // Predicated region
  $region70: #{_lambda_.1} parent=0 // pred_check
    _
  $region71: #{_lambda_.1} parent=0 // pred_check_branch
    %62 = sbr.rel (0) target = $region73
  $region72: #{_lambda_.1} parent=0 // pred_region
    _
  $region73: #{_lambda_.1} parent=0 // pred_fallthru
    _
  // Predicated region
  $region74: #{_lambda_.1} parent=0 // pred_check
    _
  $region75: #{_lambda_.1} parent=0 // pred_check_branch
    %64 = sbr.rel (0) target = $region77
  $region76: #{_lambda_.1} parent=0 // pred_region
    _
  $region77: #{_lambda_.1} parent=0 // pred_fallthru
    _
  // Predicated region
  $region78: #{_lambda_.1} parent=0 // pred_check
    _
  $region79: #{_lambda_.1} parent=0 // pred_check_branch
    %66 = sbr.rel (0) target = $region81
  $region80: #{_lambda_.1} parent=0 // pred_region
    _
  $region81: #{_lambda_.1} parent=0 // pred_fallthru
    _
  // Predicated region
  $region82: #{_lambda_.1} parent=0 // pred_check
    _
  $region83: #{_lambda_.1} parent=0 // pred_check_branch
    %68 = sbr.rel (0) target = $region85
  $region84: #{_lambda_.1} parent=0 // pred_region
    _
  $region85: #{_lambda_.1} parent=0 // pred_fallthru
    _
  // Predicated region
  $region86: #{_lambda_.1} parent=0 // pred_check
    _
  $region87: #{_lambda_.1} parent=0 // pred_check_branch
    %70 = sbr.rel (0) target = $region89
  $region88: #{_lambda_.1} parent=0 // pred_region
    _
  $region89: #{_lambda_.1} parent=0 // pred_fallthru
    _
  %v72 = vld [vmem:[%s0] sm:$0xf]
  %v73 = vld [vmem:[%s0 + $0x4] sm:$0xf]
  %v74 = vld [vmem:[%s0 + $0x8] sm:$0xf]
  %v75 = vld [vmem:[%s0 + $0xc] sm:$0xf]
  %v76 = vld [vmem:[%s0 + $0x10] sm:$0xf]
  %v77 = vld [vmem:[%s0 + $0x14] sm:$0xf]
  %v78 = vld [vmem:[%s0 + $0x18] sm:$0xf]
  %v79 = vld [vmem:[%s0 + $0x1c] sm:$0xf]
  %v80 = vld [vmem:[%s1] sm:$0xff]
  %v81 = vld [vmem:[%s1 + $0x8] sm:$0xff]
  %v82 = vld [vmem:[%s1 + $0x10] sm:$0xff]
  %v83 = vld [vmem:[%s1 + $0x18] sm:$0xff]
  %v84 = vld [vmem:[%s1 + $0x20] sm:$0xff]
  %v85 = vld [vmem:[%s1 + $0x28] sm:$0xff]
  %v86 = vld [vmem:[%s1 + $0x30] sm:$0xff]
  %v87 = vld [vmem:[%s1 + $0x38] sm:$0xff]
  %v88 = vpack.c.bf16 %v81, %v80
  %v89 = vpack.c.bf16 %v83, %v82
  %v90 = vpack.c.bf16 %v85, %v84
  %v91 = vpack.c.bf16 %v87, %v86
  %v92 = vld [vmem:[%s2] sm:$0x3]
  %v93 = vld [vmem:[%s3] sm:$0x1]
  %v95 = vlaneseq
  %v96 = vshrl.u32 %v95, 7
  %v97 = vsub.s32 0, %v96
  %v98 = vrot.slane %v93, %v97
  %vm100 = vcmask 31744
  %v102 = vsel %vm100, %v88, 0
  %v105 = vsel %vm100, %v89, 0
  %v108 = vsel %vm100, %v90, 0
  %v111 = vsel %vm100, %v91, 0
  %vm113 = vcmask 1041408
  %v115 = vsel %vm113, %v92, 0
  %117 = vmatprep.subr.bf16.mxu0 0
  %118 = vmatpush1.bf16.msra.mxu0 0
  %119 = vmatprep.subr.bf16.mxu0 0
  %120 = vmatpush1.bf16.msra.mxu0 0
  %121 = vmatprep.subr.bf16.mxu0 0
  %122 = vmatpush1.bf16.msra.mxu0 0
  %123 = vmatprep.subr.bf16.mxu0 0
  %124 = vmatpush1.bf16.msra.mxu0 0
  %125 = vmatprep.subr.bf16.mxu0 0
  %126 = vmatpush1.bf16.msra.mxu0 0
  %127 = vmatprep.subr.bf16.mxu0 0
  %128 = vmatpush1.bf16.msra.mxu0 0
  %129 = vmatprep.subr.bf16.mxu0 0
  %130 = vmatpush1.bf16.msra.mxu0 0
  %131 = vmatprep.subr.bf16.mxu0 0
  %132 = vmatpush1.bf16.msra.mxu0 %v115
  %133 = vmatprep.subr.bf16.mxu0 0
  %134 = vmatpush2.bf16.msra.mxu0 0
  %135 = vmatprep.subr.bf16.mxu0 0
  %136 = vmatpush2.bf16.msra.mxu0 0
  %137 = vmatprep.subr.bf16.mxu0 0
  %138 = vmatpush2.bf16.msra.mxu0 0
  %139 = vmatprep.subr.bf16.mxu0 0
  %140 = vmatpush2.bf16.msra.mxu0 0
  %141 = vmatprep.subr.bf16.mxu0 0
  %142 = vmatpush2.bf16.msra.mxu0 0
  %143 = vmatprep.subr.bf16.mxu0 0
  %144 = vmatpush2.bf16.msra.mxu0 0
  %145 = vmatprep.subr.bf16.mxu0 0
  %146 = vmatpush2.bf16.msra.mxu0 0
  %147 = vmatprep.subr.bf16.mxu0 0
  %148 = vmatpush2.bf16.msra.mxu0 0
  %149 = vmatprep.mubr.bf16.mxu0 0
  %150 = vmatmul.mubr.bf16.gmra.mxu0 %v102
  %v151 = vpop.f32.mrf.mxu0
  %v152 = vadd.f32 %v98, %v151
  %v153 = vpop.f32.mrf.mxu0
  %v154 = vpop.f32.mrf.mxu0
  %v155 = vadd.f32 %v98, %v154
  %v156 = vpop.f32.mrf.mxu0
  %157 = vmatprep.mubr.bf16.mxu0 0
  %158 = vmatmul.mubr.bf16.gmra.mxu0 %v105
  %v159 = vpop.f32.mrf.mxu0
  %v160 = vadd.f32 %v98, %v159
  %v161 = vpop.f32.mrf.mxu0
  %v162 = vpop.f32.mrf.mxu0
  %v163 = vadd.f32 %v98, %v162
  %v164 = vpop.f32.mrf.mxu0
  %165 = vmatprep.mubr.bf16.mxu0 0
  %166 = vmatmul.mubr.bf16.gmra.mxu0 %v108
  %v167 = vpop.f32.mrf.mxu0
  %v168 = vadd.f32 %v98, %v167
  %v169 = vpop.f32.mrf.mxu0
  %v170 = vpop.f32.mrf.mxu0
  %v171 = vadd.f32 %v98, %v170
  %v172 = vpop.f32.mrf.mxu0
  %173 = vmatprep.mubr.bf16.mxu0 0
  %174 = vmatmul.mubr.bf16.gmra.mxu0 %v111
  %v175 = vpop.f32.mrf.mxu0
  %v176 = vadd.f32 %v98, %v175
  %v177 = vpop.f32.mrf.mxu0
  %v178 = vpop.f32.mrf.mxu0
  %v179 = vadd.f32 %v98, %v178
  %v180 = vpop.f32.mrf.mxu0
  %181 = vdwg.mxu0
  %v182 = vmax.f32 %v152, 0.0
  %v183 = vmax.f32 %v155, 0.0
  %v184 = vmax.f32 %v160, 0.0
  %v185 = vmax.f32 %v163, 0.0
  %v186 = vmax.f32 %v168, 0.0
  %v187 = vmax.f32 %v171, 0.0
  %v188 = vmax.f32 %v176, 0.0
  %v189 = vmax.f32 %v179, 0.0
  %v190 = vpack.c.bf16 %v183, %v182
  %v191 = vpack.c.bf16 %v185, %v184
  %v192 = vpack.c.bf16 %v187, %v186
  %v193 = vpack.c.bf16 %v189, %v188
  %v194 = vld [vmem:[%s4] sm:$0xf]
  %v195 = vld [vmem:[%s4 + $0x4] sm:$0xf]
  %v196 = vld [vmem:[%s4 + $0x8] sm:$0xf]
  %v197 = vld [vmem:[%s4 + $0xc] sm:$0xf]
  %v198 = vld [vmem:[%s5] sm:$0x1]
  %v200 = vlaneseq
  %v201 = vshrl.u32 %v200, 7
  %v202 = vsub.s32 0, %v201
  %v203 = vrot.slane %v198, %v202
  %v209 = vunpack.c.l.b16 %v194
  %v210 = vunpack.c.l.b16 %v195
  %v211 = vunpack.c.l.b16 %v196
  %v212 = vunpack.c.l.b16 %v197
  %v213 = vpack.c.b16 %v210, %v209
  %v214 = vpack.c.b16 %v212, %v211
  %vm217 = vcmask 261120
  %v219 = vsel %vm217, %v190, 0
  %v222 = vsel %vm217, %v191, 0
  %v225 = vsel %vm217, %v192, 0
  %v228 = vsel %vm217, %v193, 0
  %230 = vmatprep.subr.bf16.mxu0 0
  %231 = vmatpush1.bf16.msra.mxu0 0
  %232 = vmatprep.subr.bf16.mxu0 0
  %233 = vmatpush1.bf16.msra.mxu0 0
  %234 = vmatprep.subr.bf16.mxu0 0
  %235 = vmatpush1.bf16.msra.mxu0 0
  %236 = vmatprep.subr.bf16.mxu0 0
  %237 = vmatpush1.bf16.msra.mxu0 0
  %238 = vmatprep.subr.bf16.mxu0 0
  %239 = vmatpush1.bf16.msra.mxu0 0
  %240 = vmatprep.subr.bf16.mxu0 0
  %241 = vmatpush1.bf16.msra.mxu0 0
  %242 = vmatprep.subr.bf16.mxu0 0
  %243 = vmatpush1.bf16.msra.mxu0 %v214
  %244 = vmatprep.subr.bf16.mxu0 0
  %245 = vmatpush1.bf16.msra.mxu0 %v213
  %246 = vmatprep.subr.bf16.mxu0 0
  %247 = vmatpush2.bf16.msra.mxu0 0
  %248 = vmatprep.subr.bf16.mxu0 0
  %249 = vmatpush2.bf16.msra.mxu0 0
  %250 = vmatprep.subr.bf16.mxu0 0
  %251 = vmatpush2.bf16.msra.mxu0 0
  %252 = vmatprep.subr.bf16.mxu0 0
  %253 = vmatpush2.bf16.msra.mxu0 0
  %254 = vmatprep.subr.bf16.mxu0 0
  %255 = vmatpush2.bf16.msra.mxu0 0
  %256 = vmatprep.subr.bf16.mxu0 0
  %257 = vmatpush2.bf16.msra.mxu0 0
  %258 = vmatprep.subr.bf16.mxu0 0
  %259 = vmatpush2.bf16.msra.mxu0 0
  %260 = vmatprep.subr.bf16.mxu0 0
  %261 = vmatpush2.bf16.msra.mxu0 0
  %262 = vmatprep.mubr.bf16.mxu0 0
  %263 = vmatmul.mubr.bf16.gmra.mxu0 %v219
  %v264 = vpop.f32.mrf.mxu0
  %v265 = vadd.f32 %v203, %v264
  %v266 = vpop.f32.mrf.mxu0
  %v267 = vpop.f32.mrf.mxu0
  %v268 = vadd.f32 %v203, %v267
  %v269 = vpop.f32.mrf.mxu0
  %270 = vmatprep.mubr.bf16.mxu0 0
  %271 = vmatmul.mubr.bf16.gmra.mxu0 %v222
  %v272 = vpop.f32.mrf.mxu0
  %v273 = vadd.f32 %v203, %v272
  %v274 = vpop.f32.mrf.mxu0
  %v275 = vpop.f32.mrf.mxu0
  %v276 = vadd.f32 %v203, %v275
  %v277 = vpop.f32.mrf.mxu0
  %278 = vmatprep.mubr.bf16.mxu0 0
  %279 = vmatmul.mubr.bf16.gmra.mxu0 %v225
  %v280 = vpop.f32.mrf.mxu0
  %v281 = vadd.f32 %v203, %v280
  %v282 = vpop.f32.mrf.mxu0
  %v283 = vpop.f32.mrf.mxu0
  %v284 = vadd.f32 %v203, %v283
  %v285 = vpop.f32.mrf.mxu0
  %286 = vmatprep.mubr.bf16.mxu0 0
  %287 = vmatmul.mubr.bf16.gmra.mxu0 %v228
  %v288 = vpop.f32.mrf.mxu0
  %v289 = vadd.f32 %v203, %v288
  %v290 = vpop.f32.mrf.mxu0
  %v291 = vpop.f32.mrf.mxu0
  %v292 = vadd.f32 %v203, %v291
  %v293 = vpop.f32.mrf.mxu0
  %294 = vdwg.mxu0
  %v295 = vmax.f32 %v265, 0.0
  %v296 = vmax.f32 %v268, 0.0
  %v297 = vmax.f32 %v273, 0.0
  %v298 = vmax.f32 %v276, 0.0
  %v299 = vmax.f32 %v281, 0.0
  %v300 = vmax.f32 %v284, 0.0
  %v301 = vmax.f32 %v289, 0.0
  %v302 = vmax.f32 %v292, 0.0
  %v303 = vpack.c.bf16 %v296, %v295
  %v304 = vpack.c.bf16 %v298, %v297
  %v305 = vpack.c.bf16 %v300, %v299
  %v306 = vpack.c.bf16 %v302, %v301
  %v307 = vld [vmem:[%s6] sm:$0xf]
  %v308 = vld [vmem:[%s6 + $0x4] sm:$0xf]
  %v309 = vld [vmem:[%s6 + $0x8] sm:$0xf]
  %v310 = vld [vmem:[%s6 + $0xc] sm:$0xf]
  %v311 = vld [vmem:[%s6 + $0x10] sm:$0xf]
  %v312 = vld [vmem:[%s6 + $0x14] sm:$0xf]
  %v313 = vld [vmem:[%s6 + $0x18] sm:$0xf]
  %v314 = vld [vmem:[%s6 + $0x1c] sm:$0xf]
  %v315 = vld [vmem:[%s7] sm:$0x1]
  %v317 = vlaneseq
  %v318 = vshrl.u32 %v317, 7
  %v319 = vsub.s32 0, %v318
  %v320 = vrot.slane %v315, %v319
  %v330 = vunpack.c.l.b16 %v307
  %v331 = vunpack.c.l.b16 %v308
  %v332 = vunpack.c.l.b16 %v309
  %v333 = vunpack.c.l.b16 %v310
  %v334 = vunpack.c.l.b16 %v311
  %v335 = vunpack.c.l.b16 %v312
  %v336 = vunpack.c.l.b16 %v313
  %v337 = vunpack.c.l.b16 %v314
  %v338 = vpack.c.b16 %v331, %v330
  %v339 = vpack.c.b16 %v333, %v332
  %v340 = vpack.c.b16 %v335, %v334
  %v341 = vpack.c.b16 %v337, %v336
  %vm346 = vcmask 523264
  %v348 = vsel %vm346, %v303, 0
  %v351 = vsel %vm346, %v304, 0
  %v354 = vsel %vm346, %v305, 0
  %v357 = vsel %vm346, %v306, 0
  %359 = vmatprep.subr.bf16.mxu0 0
  %360 = vmatpush1.bf16.msra.mxu0 0
  %361 = vmatprep.subr.bf16.mxu0 0
  %362 = vmatpush1.bf16.msra.mxu0 0
  %363 = vmatprep.subr.bf16.mxu0 0
  %364 = vmatpush1.bf16.msra.mxu0 0
  %365 = vmatprep.subr.bf16.mxu0 0
  %366 = vmatpush1.bf16.msra.mxu0 0
  %367 = vmatprep.subr.bf16.mxu0 0
  %368 = vmatpush1.bf16.msra.mxu0 %v341
  %369 = vmatprep.subr.bf16.mxu0 0
  %370 = vmatpush1.bf16.msra.mxu0 %v340
  %371 = vmatprep.subr.bf16.mxu0 0
  %372 = vmatpush1.bf16.msra.mxu0 %v339
  %373 = vmatprep.subr.bf16.mxu0 0
  %374 = vmatpush1.bf16.msra.mxu0 %v338
  %375 = vmatprep.subr.bf16.mxu0 0
  %376 = vmatpush2.bf16.msra.mxu0 0
  %377 = vmatprep.subr.bf16.mxu0 0
  %378 = vmatpush2.bf16.msra.mxu0 0
  %379 = vmatprep.subr.bf16.mxu0 0
  %380 = vmatpush2.bf16.msra.mxu0 0
  %381 = vmatprep.subr.bf16.mxu0 0
  %382 = vmatpush2.bf16.msra.mxu0 0
  %383 = vmatprep.subr.bf16.mxu0 0
  %384 = vmatpush2.bf16.msra.mxu0 0
  %385 = vmatprep.subr.bf16.mxu0 0
  %386 = vmatpush2.bf16.msra.mxu0 0
  %387 = vmatprep.subr.bf16.mxu0 0
  %388 = vmatpush2.bf16.msra.mxu0 0
  %389 = vmatprep.subr.bf16.mxu0 0
  %390 = vmatpush2.bf16.msra.mxu0 0
  %391 = vmatprep.mubr.bf16.mxu0 0
  %392 = vmatmul.mubr.bf16.gmra.mxu0 %v348
  %v393 = vpop.f32.mrf.mxu0
  %v394 = vadd.f32 %v320, %v393
  %v395 = vpop.f32.mrf.mxu0
  %v396 = vpop.f32.mrf.mxu0
  %v397 = vadd.f32 %v320, %v396
  %v398 = vpop.f32.mrf.mxu0
  %399 = vmatprep.mubr.bf16.mxu0 0
  %400 = vmatmul.mubr.bf16.gmra.mxu0 %v351
  %v401 = vpop.f32.mrf.mxu0
  %v402 = vadd.f32 %v320, %v401
  %v403 = vpop.f32.mrf.mxu0
  %v404 = vpop.f32.mrf.mxu0
  %v405 = vadd.f32 %v320, %v404
  %v406 = vpop.f32.mrf.mxu0
  %407 = vmatprep.mubr.bf16.mxu0 0
  %408 = vmatmul.mubr.bf16.gmra.mxu0 %v354
  %v409 = vpop.f32.mrf.mxu0
  %v410 = vadd.f32 %v320, %v409
  %v411 = vpop.f32.mrf.mxu0
  %v412 = vpop.f32.mrf.mxu0
  %v413 = vadd.f32 %v320, %v412
  %v414 = vpop.f32.mrf.mxu0
  %415 = vmatprep.mubr.bf16.mxu0 0
  %416 = vmatmul.mubr.bf16.gmra.mxu0 %v357
  %v417 = vpop.f32.mrf.mxu0
  %v418 = vadd.f32 %v320, %v417
  %v419 = vpop.f32.mrf.mxu0
  %v420 = vpop.f32.mrf.mxu0
  %v421 = vadd.f32 %v320, %v420
  %v422 = vpop.f32.mrf.mxu0
  %423 = vdwg.mxu0
  %v424 = vmax.f32 %v394, 0.0
  %v425 = vmax.f32 %v397, 0.0
  %v426 = vmax.f32 %v402, 0.0
  %v427 = vmax.f32 %v405, 0.0
  %v428 = vmax.f32 %v410, 0.0
  %v429 = vmax.f32 %v413, 0.0
  %v430 = vmax.f32 %v418, 0.0
  %v431 = vmax.f32 %v421, 0.0
  %v432 = vpack.c.bf16 %v425, %v424
  %v433 = vpack.c.bf16 %v427, %v426
  %v434 = vpack.c.bf16 %v429, %v428
  %v435 = vpack.c.bf16 %v431, %v430
  %v444 = vunpack.c.l.b16 %v72
  %v445 = vunpack.c.l.b16 %v73
  %v446 = vunpack.c.l.b16 %v74
  %v447 = vunpack.c.l.b16 %v75
  %v448 = vunpack.c.l.b16 %v76
  %v449 = vunpack.c.l.b16 %v77
  %v450 = vunpack.c.l.b16 %v78
  %v451 = vunpack.c.l.b16 %v79
  %v452 = vpack.c.b16 %v445, %v444
  %v453 = vpack.c.b16 %v447, %v446
  %v454 = vpack.c.b16 %v449, %v448
  %v455 = vpack.c.b16 %v451, %v450
  %v457 = vsel %vm346, %v452, 0
  %v460 = vsel %vm346, %v453, 0
  %v463 = vsel %vm346, %v454, 0
  %v466 = vsel %vm346, %v455, 0
  %468 = vmatprep.subr.bf16.mxu0 0
  %469 = vmatpush1.bf16.msra.mxu0 0
  %470 = vmatprep.subr.bf16.mxu0 0
  %471 = vmatpush1.bf16.msra.mxu0 0
  %472 = vmatprep.subr.bf16.mxu0 0
  %473 = vmatpush1.bf16.msra.mxu0 0
  %474 = vmatprep.subr.bf16.mxu0 0
  %475 = vmatpush1.bf16.msra.mxu0 0
  %476 = vmatprep.subr.bf16.mxu0 0
  %477 = vmatpush1.bf16.msra.mxu0 %v435
  %478 = vmatprep.subr.bf16.mxu0 0
  %479 = vmatpush1.bf16.msra.mxu0 %v434
  %480 = vmatprep.subr.bf16.mxu0 0
  %481 = vmatpush1.bf16.msra.mxu0 %v433
  %482 = vmatprep.subr.bf16.mxu0 0
  %483 = vmatpush1.bf16.msra.mxu0 %v432
  %484 = vmatprep.subr.bf16.mxu0 0
  %485 = vmatpush2.bf16.msra.mxu0 0
  %486 = vmatprep.subr.bf16.mxu0 0
  %487 = vmatpush2.bf16.msra.mxu0 0
  %488 = vmatprep.subr.bf16.mxu0 0
  %489 = vmatpush2.bf16.msra.mxu0 0
  %490 = vmatprep.subr.bf16.mxu0 0
  %491 = vmatpush2.bf16.msra.mxu0 0
  %492 = vmatprep.subr.bf16.mxu0 0
  %493 = vmatpush2.bf16.msra.mxu0 0
  %494 = vmatprep.subr.bf16.mxu0 0
  %495 = vmatpush2.bf16.msra.mxu0 0
  %496 = vmatprep.subr.bf16.mxu0 0
  %497 = vmatpush2.bf16.msra.mxu0 0
  %498 = vmatprep.subr.bf16.mxu0 0
  %499 = vmatpush2.bf16.msra.mxu0 0
  %500 = vmatprep.mubr.bf16.mxu0 0
  %501 = vmatmul.mubr.bf16.gmra.mxu0 %v457
  %v502 = vpop.f32.mrf.mxu0
  %v503 = vadd.f32 0.0, %v502
  %v504 = vpop.f32.mrf.mxu0
  %v505 = vpop.f32.mrf.mxu0
  %v506 = vadd.f32 0.0, %v505
  %v507 = vpop.f32.mrf.mxu0
  %508 = vmatprep.mubr.bf16.mxu0 0
  %509 = vmatmul.mubr.bf16.gmra.mxu0 %v460
  %v510 = vpop.f32.mrf.mxu0
  %v511 = vadd.f32 0.0, %v510
  %v512 = vpop.f32.mrf.mxu0
  %v513 = vpop.f32.mrf.mxu0
  %v514 = vadd.f32 0.0, %v513
  %v515 = vpop.f32.mrf.mxu0
  %516 = vmatprep.mubr.bf16.mxu0 0
  %517 = vmatmul.mubr.bf16.gmra.mxu0 %v463
  %v518 = vpop.f32.mrf.mxu0
  %v519 = vadd.f32 0.0, %v518
  %v520 = vpop.f32.mrf.mxu0
  %v521 = vpop.f32.mrf.mxu0
  %v522 = vadd.f32 0.0, %v521
  %v523 = vpop.f32.mrf.mxu0
  %524 = vmatprep.mubr.bf16.mxu0 0
  %525 = vmatmul.mubr.bf16.gmra.mxu0 %v466
  %v526 = vpop.f32.mrf.mxu0
  %v527 = vadd.f32 0.0, %v526
  %v528 = vpop.f32.mrf.mxu0
  %v529 = vpop.f32.mrf.mxu0
  %v530 = vadd.f32 0.0, %v529
  %v531 = vpop.f32.mrf.mxu0
  %532 = vdwg.mxu0
  %v533 = vpack.c.bf16 %v506, %v503
  %v534 = vpack.c.bf16 %v514, %v511
  %v535 = vpack.c.bf16 %v522, %v519
  %v536 = vpack.c.bf16 %v530, %v527
  %v537 = vld [vmem:[%s8] sm:$0xff]
  %v538 = vld [vmem:[%s8 + $0x8] sm:$0xff]
  %v539 = vld [vmem:[%s8 + $0x10] sm:$0xff]
  %v540 = vld [vmem:[%s8 + $0x18] sm:$0xff]
  %v541 = vld [vmem:[%s8 + $0x20] sm:$0xff]
  %v542 = vld [vmem:[%s8 + $0x28] sm:$0xff]
  %v543 = vld [vmem:[%s8 + $0x30] sm:$0xff]
  %v544 = vld [vmem:[%s8 + $0x38] sm:$0xff]
  %v545 = vld [vmem:[%s8 + $0x40] sm:$0xff]
  %v546 = vld [vmem:[%s8 + $0x48] sm:$0xff]
  %v547 = vld [vmem:[%s8 + $0x50] sm:$0xff]
  %v548 = vld [vmem:[%s8 + $0x58] sm:$0xff]
  %v549 = vld [vmem:[%s8 + $0x60] sm:$0xff]
  %v550 = vld [vmem:[%s8 + $0x68] sm:$0xff]
  %v551 = vld [vmem:[%s8 + $0x70] sm:$0xff]
  %v552 = vld [vmem:[%s8 + $0x78] sm:$0xff]
  %v553 = vld [vmem:[%s9] sm:$0x3]
  %v555 = vlaneseq
  %v556 = vshrl.u32 %v555, 7
  %v557 = vsub.s32 0, %v556
  %v558 = vrot.slane %v553, %v557
  %v559 = vlaneseq
  %v560 = vshrl.u32 %v559, 7
  %v561 = vsub.s32 1, %v560
  %v562 = vrot.slane %v553, %v561
  %v581 = vunpack.c.l.b16 %v537
  %v582 = vunpack.c.h.b16 %v537
  %v583 = vunpack.c.l.b16 %v538
  %v584 = vunpack.c.h.b16 %v538
  %v585 = vunpack.c.l.b16 %v539
  %v586 = vunpack.c.h.b16 %v539
  %v587 = vunpack.c.l.b16 %v540
  %v588 = vunpack.c.h.b16 %v540
  %v589 = vunpack.c.l.b16 %v541
  %v590 = vunpack.c.h.b16 %v541
  %v591 = vunpack.c.l.b16 %v542
  %v592 = vunpack.c.h.b16 %v542
  %v593 = vunpack.c.l.b16 %v543
  %v594 = vunpack.c.h.b16 %v543
  %v595 = vunpack.c.l.b16 %v544
  %v596 = vunpack.c.h.b16 %v544
  %v597 = vunpack.c.l.b16 %v545
  %v598 = vunpack.c.h.b16 %v545
  %v599 = vunpack.c.l.b16 %v546
  %v600 = vunpack.c.h.b16 %v546
  %v601 = vunpack.c.l.b16 %v547
  %v602 = vunpack.c.h.b16 %v547
  %v603 = vunpack.c.l.b16 %v548
  %v604 = vunpack.c.h.b16 %v548
  %v605 = vunpack.c.l.b16 %v549
  %v606 = vunpack.c.h.b16 %v549
  %v607 = vunpack.c.l.b16 %v550
  %v608 = vunpack.c.h.b16 %v550
  %v609 = vunpack.c.l.b16 %v551
  %v610 = vunpack.c.h.b16 %v551
  %v611 = vunpack.c.l.b16 %v552
  %v612 = vunpack.c.h.b16 %v552
  %v613 = vpack.c.b16 %v583, %v581
  %v614 = vpack.c.b16 %v584, %v582
  %v615 = vpack.c.b16 %v587, %v585
  %v616 = vpack.c.b16 %v588, %v586
  %v617 = vpack.c.b16 %v591, %v589
  %v618 = vpack.c.b16 %v592, %v590
  %v619 = vpack.c.b16 %v595, %v593
  %v620 = vpack.c.b16 %v596, %v594
  %v621 = vpack.c.b16 %v599, %v597
  %v622 = vpack.c.b16 %v600, %v598
  %v623 = vpack.c.b16 %v603, %v601
  %v624 = vpack.c.b16 %v604, %v602
  %v625 = vpack.c.b16 %v607, %v605
  %v626 = vpack.c.b16 %v608, %v606
  %v627 = vpack.c.b16 %v611, %v609
  %v628 = vpack.c.b16 %v612, %v610
  %645 = vmatprep.subr.bf16.mxu0 %v628
  %646 = vmatpush1.bf16.msra.mxu0 %v627
  %647 = vmatprep.subr.bf16.mxu0 %v626
  %648 = vmatpush1.bf16.msra.mxu0 %v625
  %649 = vmatprep.subr.bf16.mxu0 %v624
  %650 = vmatpush1.bf16.msra.mxu0 %v623
  %651 = vmatprep.subr.bf16.mxu0 %v622
  %652 = vmatpush1.bf16.msra.mxu0 %v621
  %653 = vmatprep.subr.bf16.mxu0 %v620
  %654 = vmatpush1.bf16.msra.mxu0 %v619
  %655 = vmatprep.subr.bf16.mxu0 %v618
  %656 = vmatpush1.bf16.msra.mxu0 %v617
  %657 = vmatprep.subr.bf16.mxu0 %v616
  %658 = vmatpush1.bf16.msra.mxu0 %v615
  %659 = vmatprep.subr.bf16.mxu0 %v614
  %660 = vmatpush1.bf16.msra.mxu0 %v613
  %661 = vmatprep.subr.bf16.mxu0 0
  %662 = vmatpush2.bf16.msra.mxu0 0
  %663 = vmatprep.subr.bf16.mxu0 0
  %664 = vmatpush2.bf16.msra.mxu0 0
  %665 = vmatprep.subr.bf16.mxu0 0
  %666 = vmatpush2.bf16.msra.mxu0 0
  %667 = vmatprep.subr.bf16.mxu0 0
  %668 = vmatpush2.bf16.msra.mxu0 0
  %669 = vmatprep.subr.bf16.mxu0 0
  %670 = vmatpush2.bf16.msra.mxu0 0
  %671 = vmatprep.subr.bf16.mxu0 0
  %672 = vmatpush2.bf16.msra.mxu0 0
  %673 = vmatprep.subr.bf16.mxu0 0
  %674 = vmatpush2.bf16.msra.mxu0 0
  %675 = vmatprep.subr.bf16.mxu0 0
  %676 = vmatpush2.bf16.msra.mxu0 0
  %677 = vmatprep.mubr.bf16.mxu0 0
  %678 = vmatmul.mubr.bf16.gmra.mxu0 %v533
  %v679 = vpop.f32.mrf.mxu0
  %v680 = vadd.f32 %v558, %v679
  %v681 = vpop.f32.mrf.mxu0
  %v682 = vadd.f32 %v562, %v681
  %v683 = vpop.f32.mrf.mxu0
  %v684 = vadd.f32 %v558, %v683
  %v685 = vpop.f32.mrf.mxu0
  %v686 = vadd.f32 %v562, %v685
  %687 = vmatprep.mubr.bf16.mxu0 0
  %688 = vmatmul.mubr.bf16.gmra.mxu0 %v534
  %v689 = vpop.f32.mrf.mxu0
  %v690 = vadd.f32 %v558, %v689
  %v691 = vpop.f32.mrf.mxu0
  %v692 = vadd.f32 %v562, %v691
  %v693 = vpop.f32.mrf.mxu0
  %v694 = vadd.f32 %v558, %v693
  %v695 = vpop.f32.mrf.mxu0
  %v696 = vadd.f32 %v562, %v695
  %697 = vmatprep.mubr.bf16.mxu0 0
  %698 = vmatmul.mubr.bf16.gmra.mxu0 %v535
  %v699 = vpop.f32.mrf.mxu0
  %v700 = vadd.f32 %v558, %v699
  %v701 = vpop.f32.mrf.mxu0
  %v702 = vadd.f32 %v562, %v701
  %v703 = vpop.f32.mrf.mxu0
  %v704 = vadd.f32 %v558, %v703
  %v705 = vpop.f32.mrf.mxu0
  %v706 = vadd.f32 %v562, %v705
  %707 = vmatprep.mubr.bf16.mxu0 0
  %708 = vmatmul.mubr.bf16.gmra.mxu0 %v536
  %v709 = vpop.f32.mrf.mxu0
  %v710 = vadd.f32 %v558, %v709
  %v711 = vpop.f32.mrf.mxu0
  %v712 = vadd.f32 %v562, %v711
  %v713 = vpop.f32.mrf.mxu0
  %v714 = vadd.f32 %v558, %v713
  %v715 = vpop.f32.mrf.mxu0
  %v716 = vadd.f32 %v562, %v715
  %717 = vdwg.mxu0
  %v718 = vmax.f32 %v680, 0.0
  %v719 = vmax.f32 %v682, 0.0
  %v720 = vmax.f32 %v684, 0.0
  %v721 = vmax.f32 %v686, 0.0
  %v722 = vmax.f32 %v690, 0.0
  %v723 = vmax.f32 %v692, 0.0
  %v724 = vmax.f32 %v694, 0.0
  %v725 = vmax.f32 %v696, 0.0
  %v726 = vmax.f32 %v700, 0.0
  %v727 = vmax.f32 %v702, 0.0
  %v728 = vmax.f32 %v704, 0.0
  %v729 = vmax.f32 %v706, 0.0
  %v730 = vmax.f32 %v710, 0.0
  %v731 = vmax.f32 %v712, 0.0
  %v732 = vmax.f32 %v714, 0.0
  %v733 = vmax.f32 %v716, 0.0
  %v734 = vpack.c.bf16 %v720, %v718
  %v735 = vpack.c.bf16 %v721, %v719
  %v736 = vpack.c.bf16 %v724, %v722
  %v737 = vpack.c.bf16 %v725, %v723
  %v738 = vpack.c.bf16 %v728, %v726
  %v739 = vpack.c.bf16 %v729, %v727
  %v740 = vpack.c.bf16 %v732, %v730
  %v741 = vpack.c.bf16 %v733, %v731
  %742 = vmatprep.subr.bf16.mxu0 0
  %743 = vmatpush1.bf16.msra.mxu0 0
  %744 = vmatprep.subr.bf16.mxu0 0
  %745 = vmatpush1.bf16.msra.mxu0 0
  %746 = vmatprep.subr.bf16.mxu0 0
  %747 = vmatpush1.bf16.msra.mxu0 0
  %748 = vmatprep.subr.bf16.mxu0 0
  %749 = vmatpush1.bf16.msra.mxu0 0
  %750 = vmatprep.subr.bf16.mxu0 %v741
  %751 = vmatpush1.bf16.msra.mxu0 %v740
  %752 = vmatprep.subr.bf16.mxu0 %v739
  %753 = vmatpush1.bf16.msra.mxu0 %v738
  %754 = vmatprep.subr.bf16.mxu0 %v737
  %755 = vmatpush1.bf16.msra.mxu0 %v736
  %756 = vmatprep.subr.bf16.mxu0 %v735
  %757 = vmatpush1.bf16.msra.mxu0 %v734
  %758 = vmatprep.subr.bf16.mxu0 0
  %759 = vmatpush2.bf16.msra.mxu0 0
  %760 = vmatprep.subr.bf16.mxu0 0
  %761 = vmatpush2.bf16.msra.mxu0 0
  %762 = vmatprep.subr.bf16.mxu0 0
  %763 = vmatpush2.bf16.msra.mxu0 0
  %764 = vmatprep.subr.bf16.mxu0 0
  %765 = vmatpush2.bf16.msra.mxu0 0
  %766 = vmatprep.subr.bf16.mxu0 0
  %767 = vmatpush2.bf16.msra.mxu0 0
  %768 = vmatprep.subr.bf16.mxu0 0
  %769 = vmatpush2.bf16.msra.mxu0 0
  %770 = vmatprep.subr.bf16.mxu0 0
  %771 = vmatpush2.bf16.msra.mxu0 0
  %772 = vmatprep.subr.bf16.mxu0 0
  %773 = vmatpush2.bf16.msra.mxu0 0
  %774 = vmatprep.mubr.bf16.mxu0 0
  %775 = vmatmul.mubr.bf16.gmra.mxu0 %v457
  %v776 = vpop.f32.mrf.mxu0
  %v777 = vadd.f32 0.0, %v776
  %v778 = vpop.f32.mrf.mxu0
  %v779 = vadd.f32 0.0, %v778
  %v780 = vpop.f32.mrf.mxu0
  %v781 = vadd.f32 0.0, %v780
  %v782 = vpop.f32.mrf.mxu0
  %v783 = vadd.f32 0.0, %v782
  %784 = vmatprep.mubr.bf16.mxu0 0
  %785 = vmatmul.mubr.bf16.gmra.mxu0 %v460
  %v786 = vpop.f32.mrf.mxu0
  %v787 = vadd.f32 0.0, %v786
  %v788 = vpop.f32.mrf.mxu0
  %v789 = vadd.f32 0.0, %v788
  %v790 = vpop.f32.mrf.mxu0
  %v791 = vadd.f32 0.0, %v790
  %v792 = vpop.f32.mrf.mxu0
  %v793 = vadd.f32 0.0, %v792
  %794 = vmatprep.mubr.bf16.mxu0 0
  %795 = vmatmul.mubr.bf16.gmra.mxu0 %v463
  %v796 = vpop.f32.mrf.mxu0
  %v797 = vadd.f32 0.0, %v796
  %v798 = vpop.f32.mrf.mxu0
  %v799 = vadd.f32 0.0, %v798
  %v800 = vpop.f32.mrf.mxu0
  %v801 = vadd.f32 0.0, %v800
  %v802 = vpop.f32.mrf.mxu0
  %v803 = vadd.f32 0.0, %v802
  %804 = vmatprep.mubr.bf16.mxu0 0
  %805 = vmatmul.mubr.bf16.gmra.mxu0 %v466
  %v806 = vpop.f32.mrf.mxu0
  %v807 = vadd.f32 0.0, %v806
  %v808 = vpop.f32.mrf.mxu0
  %v809 = vadd.f32 0.0, %v808
  %v810 = vpop.f32.mrf.mxu0
  %v811 = vadd.f32 0.0, %v810
  %v812 = vpop.f32.mrf.mxu0
  %v813 = vadd.f32 0.0, %v812
  %814 = vdwg.mxu0
  %v815 = vpack.c.bf16 %v781, %v777
  %v816 = vpack.c.bf16 %v783, %v779
  %v817 = vpack.c.bf16 %v791, %v787
  %v818 = vpack.c.bf16 %v793, %v789
  %v819 = vpack.c.bf16 %v801, %v797
  %v820 = vpack.c.bf16 %v803, %v799
  %v821 = vpack.c.bf16 %v811, %v807
  %v822 = vpack.c.bf16 %v813, %v809
  %v823 = vld [vmem:[%s10] sm:$0xff]
  %v824 = vld [vmem:[%s10 + $0x8] sm:$0xff]
  %v825 = vld [vmem:[%s10 + $0x10] sm:$0xff]
  %v826 = vld [vmem:[%s10 + $0x18] sm:$0xff]
  %v827 = vld [vmem:[%s10 + $0x20] sm:$0xff]
  %v828 = vld [vmem:[%s10 + $0x28] sm:$0xff]
  %v829 = vld [vmem:[%s10 + $0x30] sm:$0xff]
  %v830 = vld [vmem:[%s10 + $0x38] sm:$0xff]
  %v831 = vld [vmem:[%s10 + $0x40] sm:$0xff]
  %v832 = vld [vmem:[%s10 + $0x48] sm:$0xff]
  %v833 = vld [vmem:[%s10 + $0x50] sm:$0xff]
  %v834 = vld [vmem:[%s10 + $0x58] sm:$0xff]
  %v835 = vld [vmem:[%s10 + $0x60] sm:$0xff]
  %v836 = vld [vmem:[%s10 + $0x68] sm:$0xff]
  %v837 = vld [vmem:[%s10 + $0x70] sm:$0xff]
  %v838 = vld [vmem:[%s10 + $0x78] sm:$0xff]
  %v839 = vld [vmem:[%s10 + $0x80] sm:$0xff]
  %v840 = vld [vmem:[%s10 + $0x88] sm:$0xff]
  %v841 = vld [vmem:[%s10 + $0x90] sm:$0xff]
  %v842 = vld [vmem:[%s10 + $0x98] sm:$0xff]
  %v843 = vld [vmem:[%s10 + $0xa0] sm:$0xff]
  %v844 = vld [vmem:[%s10 + $0xa8] sm:$0xff]
  %v845 = vld [vmem:[%s10 + $0xb0] sm:$0xff]
  %v846 = vld [vmem:[%s10 + $0xb8] sm:$0xff]
  %v847 = vld [vmem:[%s10 + $0xc0] sm:$0xff]
  %v848 = vld [vmem:[%s10 + $0xc8] sm:$0xff]
  %v849 = vld [vmem:[%s10 + $0xd0] sm:$0xff]
  %v850 = vld [vmem:[%s10 + $0xd8] sm:$0xff]
  %v851 = vld [vmem:[%s10 + $0xe0] sm:$0xff]
  %v852 = vld [vmem:[%s10 + $0xe8] sm:$0xff]
  %v853 = vld [vmem:[%s10 + $0xf0] sm:$0xff]
  %v854 = vld [vmem:[%s10 + $0xf8] sm:$0xff]
  %v855 = vld [vmem:[%s10 + $0x100] sm:$0xff]
  %v856 = vld [vmem:[%s10 + $0x108] sm:$0xff]
  %v857 = vld [vmem:[%s10 + $0x110] sm:$0xff]
  %v858 = vld [vmem:[%s10 + $0x118] sm:$0xff]
  %v859 = vld [vmem:[%s10 + $0x120] sm:$0xff]
  %v860 = vld [vmem:[%s10 + $0x128] sm:$0xff]
  %v861 = vld [vmem:[%s10 + $0x130] sm:$0xff]
  %v862 = vld [vmem:[%s10 + $0x138] sm:$0xff]
  %v863 = vld [vmem:[%s10 + $0x140] sm:$0xff]
  %v864 = vld [vmem:[%s10 + $0x148] sm:$0xff]
  %v865 = vld [vmem:[%s10 + $0x150] sm:$0xff]
  %v866 = vld [vmem:[%s10 + $0x158] sm:$0xff]
  %v867 = vld [vmem:[%s10 + $0x160] sm:$0xff]
  %v868 = vld [vmem:[%s10 + $0x168] sm:$0xff]
  %v869 = vld [vmem:[%s10 + $0x170] sm:$0xff]
  %v870 = vld [vmem:[%s10 + $0x178] sm:$0xff]
  %v871 = vld [vmem:[%s10 + $0x180] sm:$0xff]
  %v872 = vld [vmem:[%s10 + $0x188] sm:$0xff]
  %v873 = vld [vmem:[%s10 + $0x190] sm:$0xff]
  %v874 = vld [vmem:[%s10 + $0x198] sm:$0xff]
  %v875 = vld [vmem:[%s10 + $0x1a0] sm:$0xff]
  %v876 = vld [vmem:[%s10 + $0x1a8] sm:$0xff]
  %v877 = vld [vmem:[%s10 + $0x1b0] sm:$0xff]
  %v878 = vld [vmem:[%s10 + $0x1b8] sm:$0xff]
  %v879 = vld [vmem:[%s10 + $0x1c0] sm:$0xff]
  %v880 = vld [vmem:[%s10 + $0x1c8] sm:$0xff]
  %v881 = vld [vmem:[%s10 + $0x1d0] sm:$0xff]
  %v882 = vld [vmem:[%s10 + $0x1d8] sm:$0xff]
  %v883 = vld [vmem:[%s10 + $0x1e0] sm:$0xff]
  %v884 = vld [vmem:[%s10 + $0x1e8] sm:$0xff]
  %v885 = vld [vmem:[%s10 + $0x1f0] sm:$0xff]
  %v886 = vld [vmem:[%s10 + $0x1f8] sm:$0xff]
  %v887 = vld [vmem:[%s11] sm:$0xf]
  %v889 = vlaneseq
  %v890 = vshrl.u32 %v889, 7
  %v891 = vsub.s32 0, %v890
  %v892 = vrot.slane %v887, %v891
  %v893 = vlaneseq
  %v894 = vshrl.u32 %v893, 7
  %v895 = vsub.s32 1, %v894
  %v896 = vrot.slane %v887, %v895
  %v897 = vlaneseq
  %v898 = vshrl.u32 %v897, 7
  %v899 = vsub.s32 2, %v898
  %v900 = vrot.slane %v887, %v899
  %v901 = vlaneseq
  %v902 = vshrl.u32 %v901, 7
  %v903 = vsub.s32 3, %v902
  %v904 = vrot.slane %v887, %v903
  %v973 = vunpack.c.l.b16 %v823
  %v974 = vunpack.c.h.b16 %v823
  %v975 = vunpack.c.l.b16 %v824
  %v976 = vunpack.c.h.b16 %v824
  %v977 = vunpack.c.l.b16 %v825
  %v978 = vunpack.c.h.b16 %v825
  %v979 = vunpack.c.l.b16 %v826
  %v980 = vunpack.c.h.b16 %v826
  %v981 = vunpack.c.l.b16 %v827
  %v982 = vunpack.c.h.b16 %v827
  %v983 = vunpack.c.l.b16 %v828
  %v984 = vunpack.c.h.b16 %v828
  %v985 = vunpack.c.l.b16 %v829
  %v986 = vunpack.c.h.b16 %v829
  %v987 = vunpack.c.l.b16 %v830
  %v988 = vunpack.c.h.b16 %v830
  %v989 = vunpack.c.l.b16 %v831
  %v990 = vunpack.c.h.b16 %v831
  %v991 = vunpack.c.l.b16 %v832
  %v992 = vunpack.c.h.b16 %v832
  %v993 = vunpack.c.l.b16 %v833
  %v994 = vunpack.c.h.b16 %v833
  %v995 = vunpack.c.l.b16 %v834
  %v996 = vunpack.c.h.b16 %v834
  %v997 = vunpack.c.l.b16 %v835
  %v998 = vunpack.c.h.b16 %v835
  %v999 = vunpack.c.l.b16 %v836
  %v1000 = vunpack.c.h.b16 %v836
  %v1001 = vunpack.c.l.b16 %v837
  %v1002 = vunpack.c.h.b16 %v837
  %v1003 = vunpack.c.l.b16 %v838
  %v1004 = vunpack.c.h.b16 %v838
  %v1005 = vunpack.c.l.b16 %v839
  %v1006 = vunpack.c.h.b16 %v839
  %v1007 = vunpack.c.l.b16 %v840
  %v1008 = vunpack.c.h.b16 %v840
  %v1009 = vunpack.c.l.b16 %v841
  %v1010 = vunpack.c.h.b16 %v841
  %v1011 = vunpack.c.l.b16 %v842
  %v1012 = vunpack.c.h.b16 %v842
  %v1013 = vunpack.c.l.b16 %v843
  %v1014 = vunpack.c.h.b16 %v843
  %v1015 = vunpack.c.l.b16 %v844
  %v1016 = vunpack.c.h.b16 %v844
  %v1017 = vunpack.c.l.b16 %v845
  %v1018 = vunpack.c.h.b16 %v845
  %v1019 = vunpack.c.l.b16 %v846
  %v1020 = vunpack.c.h.b16 %v846
  %v1021 = vunpack.c.l.b16 %v847
  %v1022 = vunpack.c.h.b16 %v847
  %v1023 = vunpack.c.l.b16 %v848
  %v1024 = vunpack.c.h.b16 %v848
  %v1025 = vunpack.c.l.b16 %v849
  %v1026 = vunpack.c.h.b16 %v849
  %v1027 = vunpack.c.l.b16 %v850
  %v1028 = vunpack.c.h.b16 %v850
  %v1029 = vunpack.c.l.b16 %v851
  %v1030 = vunpack.c.h.b16 %v851
  %v1031 = vunpack.c.l.b16 %v852
  %v1032 = vunpack.c.h.b16 %v852
  %v1033 = vunpack.c.l.b16 %v853
  %v1034 = vunpack.c.h.b16 %v853
  %v1035 = vunpack.c.l.b16 %v854
  %v1036 = vunpack.c.h.b16 %v854
  %v1037 = vunpack.c.l.b16 %v855
  %v1038 = vunpack.c.h.b16 %v855
  %v1039 = vunpack.c.l.b16 %v856
  %v1040 = vunpack.c.h.b16 %v856
  %v1041 = vunpack.c.l.b16 %v857
  %v1042 = vunpack.c.h.b16 %v857
  %v1043 = vunpack.c.l.b16 %v858
  %v1044 = vunpack.c.h.b16 %v858
  %v1045 = vunpack.c.l.b16 %v859
  %v1046 = vunpack.c.h.b16 %v859
  %v1047 = vunpack.c.l.b16 %v860
  %v1048 = vunpack.c.h.b16 %v860
  %v1049 = vunpack.c.l.b16 %v861
  %v1050 = vunpack.c.h.b16 %v861
  %v1051 = vunpack.c.l.b16 %v862
  %v1052 = vunpack.c.h.b16 %v862
  %v1053 = vunpack.c.l.b16 %v863
  %v1054 = vunpack.c.h.b16 %v863
  %v1055 = vunpack.c.l.b16 %v864
  %v1056 = vunpack.c.h.b16 %v864
  %v1057 = vunpack.c.l.b16 %v865
  %v1058 = vunpack.c.h.b16 %v865
  %v1059 = vunpack.c.l.b16 %v866
  %v1060 = vunpack.c.h.b16 %v866
  %v1061 = vunpack.c.l.b16 %v867
  %v1062 = vunpack.c.h.b16 %v867
  %v1063 = vunpack.c.l.b16 %v868
  %v1064 = vunpack.c.h.b16 %v868
  %v1065 = vunpack.c.l.b16 %v869
  %v1066 = vunpack.c.h.b16 %v869
  %v1067 = vunpack.c.l.b16 %v870
  %v1068 = vunpack.c.h.b16 %v870
  %v1069 = vunpack.c.l.b16 %v871
  %v1070 = vunpack.c.h.b16 %v871
  %v1071 = vunpack.c.l.b16 %v872
  %v1072 = vunpack.c.h.b16 %v872
  %v1073 = vunpack.c.l.b16 %v873
  %v1074 = vunpack.c.h.b16 %v873
  %v1075 = vunpack.c.l.b16 %v874
  %v1076 = vunpack.c.h.b16 %v874
  %v1077 = vunpack.c.l.b16 %v875
  %v1078 = vunpack.c.h.b16 %v875
  %v1079 = vunpack.c.l.b16 %v876
  %v1080 = vunpack.c.h.b16 %v876
  %v1081 = vunpack.c.l.b16 %v877
  %v1082 = vunpack.c.h.b16 %v877
  %v1083 = vunpack.c.l.b16 %v878
  %v1084 = vunpack.c.h.b16 %v878
  %v1085 = vunpack.c.l.b16 %v879
  %v1086 = vunpack.c.h.b16 %v879
  %v1087 = vunpack.c.l.b16 %v880
  %v1088 = vunpack.c.h.b16 %v880
  %v1089 = vunpack.c.l.b16 %v881
  %v1090 = vunpack.c.h.b16 %v881
  %v1091 = vunpack.c.l.b16 %v882
  %v1092 = vunpack.c.h.b16 %v882
  %v1093 = vunpack.c.l.b16 %v883
  %v1094 = vunpack.c.h.b16 %v883
  %v1095 = vunpack.c.l.b16 %v884
  %v1096 = vunpack.c.h.b16 %v884
  %v1097 = vunpack.c.l.b16 %v885
  %v1098 = vunpack.c.h.b16 %v885
  %v1099 = vunpack.c.l.b16 %v886
  %v1100 = vunpack.c.h.b16 %v886
  %v1101 = vpack.c.b16 %v977, %v973
  %v1102 = vpack.c.b16 %v978, %v974
  %v1103 = vpack.c.b16 %v979, %v975
  %v1104 = vpack.c.b16 %v980, %v976
  %v1105 = vpack.c.b16 %v985, %v981
  %v1106 = vpack.c.b16 %v986, %v982
  %v1107 = vpack.c.b16 %v987, %v983
  %v1108 = vpack.c.b16 %v988, %v984
  %v1109 = vpack.c.b16 %v993, %v989
  %v1110 = vpack.c.b16 %v994, %v990
  %v1111 = vpack.c.b16 %v995, %v991
  %v1112 = vpack.c.b16 %v996, %v992
  %v1113 = vpack.c.b16 %v1001, %v997
  %v1114 = vpack.c.b16 %v1002, %v998
  %v1115 = vpack.c.b16 %v1003, %v999
  %v1116 = vpack.c.b16 %v1004, %v1000
  %v1117 = vpack.c.b16 %v1009, %v1005
  %v1118 = vpack.c.b16 %v1010, %v1006
  %v1119 = vpack.c.b16 %v1011, %v1007
  %v1120 = vpack.c.b16 %v1012, %v1008
  %v1121 = vpack.c.b16 %v1017, %v1013
  %v1122 = vpack.c.b16 %v1018, %v1014
  %v1123 = vpack.c.b16 %v1019, %v1015
  %v1124 = vpack.c.b16 %v1020, %v1016
  %v1125 = vpack.c.b16 %v1025, %v1021
  %v1126 = vpack.c.b16 %v1026, %v1022
  %v1127 = vpack.c.b16 %v1027, %v1023
  %v1128 = vpack.c.b16 %v1028, %v1024
  %v1129 = vpack.c.b16 %v1033, %v1029
  %v1130 = vpack.c.b16 %v1034, %v1030
  %v1131 = vpack.c.b16 %v1035, %v1031
  %v1132 = vpack.c.b16 %v1036, %v1032
  %v1133 = vpack.c.b16 %v1041, %v1037
  %v1134 = vpack.c.b16 %v1042, %v1038
  %v1135 = vpack.c.b16 %v1043, %v1039
  %v1136 = vpack.c.b16 %v1044, %v1040
  %v1137 = vpack.c.b16 %v1049, %v1045
  %v1138 = vpack.c.b16 %v1050, %v1046
  %v1139 = vpack.c.b16 %v1051, %v1047
  %v1140 = vpack.c.b16 %v1052, %v1048
  %v1141 = vpack.c.b16 %v1057, %v1053
  %v1142 = vpack.c.b16 %v1058, %v1054
  %v1143 = vpack.c.b16 %v1059, %v1055
  %v1144 = vpack.c.b16 %v1060, %v1056
  %v1145 = vpack.c.b16 %v1065, %v1061
  %v1146 = vpack.c.b16 %v1066, %v1062
  %v1147 = vpack.c.b16 %v1067, %v1063
  %v1148 = vpack.c.b16 %v1068, %v1064
  %v1149 = vpack.c.b16 %v1073, %v1069
  %v1150 = vpack.c.b16 %v1074, %v1070
  %v1151 = vpack.c.b16 %v1075, %v1071
  %v1152 = vpack.c.b16 %v1076, %v1072
  %v1153 = vpack.c.b16 %v1081, %v1077
  %v1154 = vpack.c.b16 %v1082, %v1078
  %v1155 = vpack.c.b16 %v1083, %v1079
  %v1156 = vpack.c.b16 %v1084, %v1080
  %v1157 = vpack.c.b16 %v1089, %v1085
  %v1158 = vpack.c.b16 %v1090, %v1086
  %v1159 = vpack.c.b16 %v1091, %v1087
  %v1160 = vpack.c.b16 %v1092, %v1088
  %v1161 = vpack.c.b16 %v1097, %v1093
  %v1162 = vpack.c.b16 %v1098, %v1094
  %v1163 = vpack.c.b16 %v1099, %v1095
  %v1164 = vpack.c.b16 %v1100, %v1096
  %1229 = vmatprep.subr.bf16.mxu0 %v1130
  %1230 = vmatpush1.bf16.msra.mxu0 %v1129
  %1231 = vmatprep.subr.bf16.mxu0 %v1126
  %1232 = vmatpush1.bf16.msra.mxu0 %v1125
  %1233 = vmatprep.subr.bf16.mxu0 %v1122
  %1234 = vmatpush1.bf16.msra.mxu0 %v1121
  %1235 = vmatprep.subr.bf16.mxu0 %v1118
  %1236 = vmatpush1.bf16.msra.mxu0 %v1117
  %1237 = vmatprep.subr.bf16.mxu0 %v1114
  %1238 = vmatpush1.bf16.msra.mxu0 %v1113
  %1239 = vmatprep.subr.bf16.mxu0 %v1110
  %1240 = vmatpush1.bf16.msra.mxu0 %v1109
  %1241 = vmatprep.subr.bf16.mxu0 %v1106
  %1242 = vmatpush1.bf16.msra.mxu0 %v1105
  %1243 = vmatprep.subr.bf16.mxu0 %v1102
  %1244 = vmatpush1.bf16.msra.mxu0 %v1101
  %1245 = vmatprep.subr.bf16.mxu0 %v1162
  %1246 = vmatpush2.bf16.msra.mxu0 %v1161
  %1247 = vmatprep.subr.bf16.mxu0 %v1158
  %1248 = vmatpush2.bf16.msra.mxu0 %v1157
  %1249 = vmatprep.subr.bf16.mxu0 %v1154
  %1250 = vmatpush2.bf16.msra.mxu0 %v1153
  %1251 = vmatprep.subr.bf16.mxu0 %v1150
  %1252 = vmatpush2.bf16.msra.mxu0 %v1149
  %1253 = vmatprep.subr.bf16.mxu0 %v1146
  %1254 = vmatpush2.bf16.msra.mxu0 %v1145
  %1255 = vmatprep.subr.bf16.mxu0 %v1142
  %1256 = vmatpush2.bf16.msra.mxu0 %v1141
  %1257 = vmatprep.subr.bf16.mxu0 %v1138
  %1258 = vmatpush2.bf16.msra.mxu0 %v1137
  %1259 = vmatprep.subr.bf16.mxu0 %v1134
  %1260 = vmatpush2.bf16.msra.mxu0 %v1133
  %1261 = vmatprep.mubr.bf16.mxu0 %v816
  %1262 = vmatmul.mubr.bf16.gmra.mxu0 %v815
  %v1263 = vpop.f32.mrf.mxu0
  %v1264 = vadd.f32 %v892, %v1263
  %v1265 = vpop.f32.mrf.mxu0
  %v1266 = vadd.f32 %v896, %v1265
  %v1267 = vpop.f32.mrf.mxu0
  %v1268 = vadd.f32 %v892, %v1267
  %v1269 = vpop.f32.mrf.mxu0
  %v1270 = vadd.f32 %v896, %v1269
  %1271 = vmatprep.mubr.bf16.mxu0 %v818
  %1272 = vmatmul.mubr.bf16.gmra.mxu0 %v817
  %v1273 = vpop.f32.mrf.mxu0
  %v1274 = vadd.f32 %v892, %v1273
  %v1275 = vpop.f32.mrf.mxu0
  %v1276 = vadd.f32 %v896, %v1275
  %v1277 = vpop.f32.mrf.mxu0
  %v1278 = vadd.f32 %v892, %v1277
  %v1279 = vpop.f32.mrf.mxu0
  %v1280 = vadd.f32 %v896, %v1279
  %1281 = vmatprep.mubr.bf16.mxu0 %v820
  %1282 = vmatmul.mubr.bf16.gmra.mxu0 %v819
  %v1283 = vpop.f32.mrf.mxu0
  %v1284 = vadd.f32 %v892, %v1283
  %v1285 = vpop.f32.mrf.mxu0
  %v1286 = vadd.f32 %v896, %v1285
  %v1287 = vpop.f32.mrf.mxu0
  %v1288 = vadd.f32 %v892, %v1287
  %v1289 = vpop.f32.mrf.mxu0
  %v1290 = vadd.f32 %v896, %v1289
  %1291 = vmatprep.mubr.bf16.mxu0 %v822
  %1292 = vmatmul.mubr.bf16.gmra.mxu0 %v821
  %v1293 = vpop.f32.mrf.mxu0
  %v1294 = vadd.f32 %v892, %v1293
  %v1295 = vpop.f32.mrf.mxu0
  %v1296 = vadd.f32 %v896, %v1295
  %v1297 = vpop.f32.mrf.mxu0
  %v1298 = vadd.f32 %v892, %v1297
  %v1299 = vpop.f32.mrf.mxu0
  %v1300 = vadd.f32 %v896, %v1299
  %1301 = vdwg.mxu0
  %1302 = vmatprep.subr.bf16.mxu0 %v1132
  %1303 = vmatpush1.bf16.msra.mxu0 %v1131
  %1304 = vmatprep.subr.bf16.mxu0 %v1128
  %1305 = vmatpush1.bf16.msra.mxu0 %v1127
  %1306 = vmatprep.subr.bf16.mxu0 %v1124
  %1307 = vmatpush1.bf16.msra.mxu0 %v1123
  %1308 = vmatprep.subr.bf16.mxu0 %v1120
  %1309 = vmatpush1.bf16.msra.mxu0 %v1119
  %1310 = vmatprep.subr.bf16.mxu0 %v1116
  %1311 = vmatpush1.bf16.msra.mxu0 %v1115
  %1312 = vmatprep.subr.bf16.mxu0 %v1112
  %1313 = vmatpush1.bf16.msra.mxu0 %v1111
  %1314 = vmatprep.subr.bf16.mxu0 %v1108
  %1315 = vmatpush1.bf16.msra.mxu0 %v1107
  %1316 = vmatprep.subr.bf16.mxu0 %v1104
  %1317 = vmatpush1.bf16.msra.mxu0 %v1103
  %1318 = vmatprep.subr.bf16.mxu0 %v1164
  %1319 = vmatpush2.bf16.msra.mxu0 %v1163
  %1320 = vmatprep.subr.bf16.mxu0 %v1160
  %1321 = vmatpush2.bf16.msra.mxu0 %v1159
  %1322 = vmatprep.subr.bf16.mxu0 %v1156
  %1323 = vmatpush2.bf16.msra.mxu0 %v1155
  %1324 = vmatprep.subr.bf16.mxu0 %v1152
  %1325 = vmatpush2.bf16.msra.mxu0 %v1151
  %1326 = vmatprep.subr.bf16.mxu0 %v1148
  %1327 = vmatpush2.bf16.msra.mxu0 %v1147
  %1328 = vmatprep.subr.bf16.mxu0 %v1144
  %1329 = vmatpush2.bf16.msra.mxu0 %v1143
  %1330 = vmatprep.subr.bf16.mxu0 %v1140
  %1331 = vmatpush2.bf16.msra.mxu0 %v1139
  %1332 = vmatprep.subr.bf16.mxu0 %v1136
  %1333 = vmatpush2.bf16.msra.mxu0 %v1135
  %1334 = vmatprep.mubr.bf16.mxu0 %v816
  %1335 = vmatmul.mubr.bf16.gmra.mxu0 %v815
  %v1336 = vpop.f32.mrf.mxu0
  %v1337 = vadd.f32 %v900, %v1336
  %v1338 = vpop.f32.mrf.mxu0
  %v1339 = vadd.f32 %v904, %v1338
  %v1340 = vpop.f32.mrf.mxu0
  %v1341 = vadd.f32 %v900, %v1340
  %v1342 = vpop.f32.mrf.mxu0
  %v1343 = vadd.f32 %v904, %v1342
  %1344 = vmatprep.mubr.bf16.mxu0 %v818
  %1345 = vmatmul.mubr.bf16.gmra.mxu0 %v817
  %v1346 = vpop.f32.mrf.mxu0
  %v1347 = vadd.f32 %v900, %v1346
  %v1348 = vpop.f32.mrf.mxu0
  %v1349 = vadd.f32 %v904, %v1348
  %v1350 = vpop.f32.mrf.mxu0
  %v1351 = vadd.f32 %v900, %v1350
  %v1352 = vpop.f32.mrf.mxu0
  %v1353 = vadd.f32 %v904, %v1352
  %1354 = vmatprep.mubr.bf16.mxu0 %v820
  %1355 = vmatmul.mubr.bf16.gmra.mxu0 %v819
  %v1356 = vpop.f32.mrf.mxu0
  %v1357 = vadd.f32 %v900, %v1356
  %v1358 = vpop.f32.mrf.mxu0
  %v1359 = vadd.f32 %v904, %v1358
  %v1360 = vpop.f32.mrf.mxu0
  %v1361 = vadd.f32 %v900, %v1360
  %v1362 = vpop.f32.mrf.mxu0
  %v1363 = vadd.f32 %v904, %v1362
  %1364 = vmatprep.mubr.bf16.mxu0 %v822
  %1365 = vmatmul.mubr.bf16.gmra.mxu0 %v821
  %v1366 = vpop.f32.mrf.mxu0
  %v1367 = vadd.f32 %v900, %v1366
  %v1368 = vpop.f32.mrf.mxu0
  %v1369 = vadd.f32 %v904, %v1368
  %v1370 = vpop.f32.mrf.mxu0
  %v1371 = vadd.f32 %v900, %v1370
  %v1372 = vpop.f32.mrf.mxu0
  %v1373 = vadd.f32 %v904, %v1372
  %1374 = vdwg.mxu0
  %v1375 = vmax.f32 %v1264, 0.0
  %v1376 = vmax.f32 %v1266, 0.0
  %v1377 = vmax.f32 %v1337, 0.0
  %v1378 = vmax.f32 %v1339, 0.0
  %v1379 = vmax.f32 %v1268, 0.0
  %v1380 = vmax.f32 %v1270, 0.0
  %v1381 = vmax.f32 %v1341, 0.0
  %v1382 = vmax.f32 %v1343, 0.0
  %v1383 = vmax.f32 %v1274, 0.0
  %v1384 = vmax.f32 %v1276, 0.0
  %v1385 = vmax.f32 %v1347, 0.0
  %v1386 = vmax.f32 %v1349, 0.0
  %v1387 = vmax.f32 %v1278, 0.0
  %v1388 = vmax.f32 %v1280, 0.0
  %v1389 = vmax.f32 %v1351, 0.0
  %v1390 = vmax.f32 %v1353, 0.0
  %v1391 = vmax.f32 %v1284, 0.0
  %v1392 = vmax.f32 %v1286, 0.0
  %v1393 = vmax.f32 %v1357, 0.0
  %v1394 = vmax.f32 %v1359, 0.0
  %v1395 = vmax.f32 %v1288, 0.0
  %v1396 = vmax.f32 %v1290, 0.0
  %v1397 = vmax.f32 %v1361, 0.0
  %v1398 = vmax.f32 %v1363, 0.0
  %v1399 = vmax.f32 %v1294, 0.0
  %v1400 = vmax.f32 %v1296, 0.0
  %v1401 = vmax.f32 %v1367, 0.0
  %v1402 = vmax.f32 %v1369, 0.0
  %v1403 = vmax.f32 %v1298, 0.0
  %v1404 = vmax.f32 %v1300, 0.0
  %v1405 = vmax.f32 %v1371, 0.0
  %v1406 = vmax.f32 %v1373, 0.0
  %v1407 = vpack.c.bf16 %v1379, %v1375
  %v1408 = vpack.c.bf16 %v1380, %v1376
  %v1409 = vpack.c.bf16 %v1381, %v1377
  %v1410 = vpack.c.bf16 %v1382, %v1378
  %v1411 = vpack.c.bf16 %v1387, %v1383
  %v1412 = vpack.c.bf16 %v1388, %v1384
  %v1413 = vpack.c.bf16 %v1389, %v1385
  %v1414 = vpack.c.bf16 %v1390, %v1386
  %v1415 = vpack.c.bf16 %v1395, %v1391
  %v1416 = vpack.c.bf16 %v1396, %v1392
  %v1417 = vpack.c.bf16 %v1397, %v1393
  %v1418 = vpack.c.bf16 %v1398, %v1394
  %v1419 = vpack.c.bf16 %v1403, %v1399
  %v1420 = vpack.c.bf16 %v1404, %v1400
  %v1421 = vpack.c.bf16 %v1405, %v1401
  %v1422 = vpack.c.bf16 %v1406, %v1402
  %1423 = vmatprep.subr.bf16.mxu0 0
  %1424 = vmatpush1.bf16.msra.mxu0 0
  %1425 = vmatprep.subr.bf16.mxu0 0
  %1426 = vmatpush1.bf16.msra.mxu0 0
  %1427 = vmatprep.subr.bf16.mxu0 0
  %1428 = vmatpush1.bf16.msra.mxu0 0
  %1429 = vmatprep.subr.bf16.mxu0 0
  %1430 = vmatpush1.bf16.msra.mxu0 0
  %1431 = vmatprep.subr.bf16.mxu0 %v1420
  %1432 = vmatpush1.bf16.msra.mxu0 %v1419
  %1433 = vmatprep.subr.bf16.mxu0 %v1416
  %1434 = vmatpush1.bf16.msra.mxu0 %v1415
  %1435 = vmatprep.subr.bf16.mxu0 %v1412
  %1436 = vmatpush1.bf16.msra.mxu0 %v1411
  %1437 = vmatprep.subr.bf16.mxu0 %v1408
  %1438 = vmatpush1.bf16.msra.mxu0 %v1407
  %1439 = vmatprep.subr.bf16.mxu0 0
  %1440 = vmatpush2.bf16.msra.mxu0 0
  %1441 = vmatprep.subr.bf16.mxu0 0
  %1442 = vmatpush2.bf16.msra.mxu0 0
  %1443 = vmatprep.subr.bf16.mxu0 0
  %1444 = vmatpush2.bf16.msra.mxu0 0
  %1445 = vmatprep.subr.bf16.mxu0 0
  %1446 = vmatpush2.bf16.msra.mxu0 0
  %1447 = vmatprep.subr.bf16.mxu0 0
  %1448 = vmatpush2.bf16.msra.mxu0 0
  %1449 = vmatprep.subr.bf16.mxu0 0
  %1450 = vmatpush2.bf16.msra.mxu0 0
  %1451 = vmatprep.subr.bf16.mxu0 0
  %1452 = vmatpush2.bf16.msra.mxu0 0
  %1453 = vmatprep.subr.bf16.mxu0 0
  %1454 = vmatpush2.bf16.msra.mxu0 0
  %1455 = vmatprep.mubr.bf16.mxu0 0
  %1456 = vmatmul.mubr.bf16.gmra.mxu0 %v457
  %v1457 = vpop.f32.mrf.mxu0
  %v1458 = vadd.f32 0.0, %v1457
  %v1459 = vpop.f32.mrf.mxu0
  %v1460 = vadd.f32 0.0, %v1459
  %v1461 = vpop.f32.mrf.mxu0
  %v1462 = vadd.f32 0.0, %v1461
  %v1463 = vpop.f32.mrf.mxu0
  %v1464 = vadd.f32 0.0, %v1463
  %1465 = vmatprep.mubr.bf16.mxu0 0
  %1466 = vmatmul.mubr.bf16.gmra.mxu0 %v460
  %v1467 = vpop.f32.mrf.mxu0
  %v1468 = vadd.f32 0.0, %v1467
  %v1469 = vpop.f32.mrf.mxu0
  %v1470 = vadd.f32 0.0, %v1469
  %v1471 = vpop.f32.mrf.mxu0
  %v1472 = vadd.f32 0.0, %v1471
  %v1473 = vpop.f32.mrf.mxu0
  %v1474 = vadd.f32 0.0, %v1473
  %1475 = vmatprep.mubr.bf16.mxu0 0
  %1476 = vmatmul.mubr.bf16.gmra.mxu0 %v463
  %v1477 = vpop.f32.mrf.mxu0
  %v1478 = vadd.f32 0.0, %v1477
  %v1479 = vpop.f32.mrf.mxu0
  %v1480 = vadd.f32 0.0, %v1479
  %v1481 = vpop.f32.mrf.mxu0
  %v1482 = vadd.f32 0.0, %v1481
  %v1483 = vpop.f32.mrf.mxu0
  %v1484 = vadd.f32 0.0, %v1483
  %1485 = vmatprep.mubr.bf16.mxu0 0
  %1486 = vmatmul.mubr.bf16.gmra.mxu0 %v466
  %v1487 = vpop.f32.mrf.mxu0
  %v1488 = vadd.f32 0.0, %v1487
  %v1489 = vpop.f32.mrf.mxu0
  %v1490 = vadd.f32 0.0, %v1489
  %v1491 = vpop.f32.mrf.mxu0
  %v1492 = vadd.f32 0.0, %v1491
  %v1493 = vpop.f32.mrf.mxu0
  %v1494 = vadd.f32 0.0, %v1493
  %1495 = vdwg.mxu0
  %1496 = vmatprep.subr.bf16.mxu0 0
  %1497 = vmatpush1.bf16.msra.mxu0 0
  %1498 = vmatprep.subr.bf16.mxu0 0
  %1499 = vmatpush1.bf16.msra.mxu0 0
  %1500 = vmatprep.subr.bf16.mxu0 0
  %1501 = vmatpush1.bf16.msra.mxu0 0
  %1502 = vmatprep.subr.bf16.mxu0 0
  %1503 = vmatpush1.bf16.msra.mxu0 0
  %1504 = vmatprep.subr.bf16.mxu0 %v1422
  %1505 = vmatpush1.bf16.msra.mxu0 %v1421
  %1506 = vmatprep.subr.bf16.mxu0 %v1418
  %1507 = vmatpush1.bf16.msra.mxu0 %v1417
  %1508 = vmatprep.subr.bf16.mxu0 %v1414
  %1509 = vmatpush1.bf16.msra.mxu0 %v1413
  %1510 = vmatprep.subr.bf16.mxu0 %v1410
  %1511 = vmatpush1.bf16.msra.mxu0 %v1409
  %1512 = vmatprep.subr.bf16.mxu0 0
  %1513 = vmatpush2.bf16.msra.mxu0 0
  %1514 = vmatprep.subr.bf16.mxu0 0
  %1515 = vmatpush2.bf16.msra.mxu0 0
  %1516 = vmatprep.subr.bf16.mxu0 0
  %1517 = vmatpush2.bf16.msra.mxu0 0
  %1518 = vmatprep.subr.bf16.mxu0 0
  %1519 = vmatpush2.bf16.msra.mxu0 0
  %1520 = vmatprep.subr.bf16.mxu0 0
  %1521 = vmatpush2.bf16.msra.mxu0 0
  %1522 = vmatprep.subr.bf16.mxu0 0
  %1523 = vmatpush2.bf16.msra.mxu0 0
  %1524 = vmatprep.subr.bf16.mxu0 0
  %1525 = vmatpush2.bf16.msra.mxu0 0
  %1526 = vmatprep.subr.bf16.mxu0 0
  %1527 = vmatpush2.bf16.msra.mxu0 0
  %1528 = vmatprep.mubr.bf16.mxu0 0
  %1529 = vmatmul.mubr.bf16.gmra.mxu0 %v457
  %v1530 = vpop.f32.mrf.mxu0
  %v1531 = vadd.f32 0.0, %v1530
  %v1532 = vpop.f32.mrf.mxu0
  %v1533 = vadd.f32 0.0, %v1532
  %v1534 = vpop.f32.mrf.mxu0
  %v1535 = vadd.f32 0.0, %v1534
  %v1536 = vpop.f32.mrf.mxu0
  %v1537 = vadd.f32 0.0, %v1536
  %1538 = vmatprep.mubr.bf16.mxu0 0
  %1539 = vmatmul.mubr.bf16.gmra.mxu0 %v460
  %v1540 = vpop.f32.mrf.mxu0
  %v1541 = vadd.f32 0.0, %v1540
  %v1542 = vpop.f32.mrf.mxu0
  %v1543 = vadd.f32 0.0, %v1542
  %v1544 = vpop.f32.mrf.mxu0
  %v1545 = vadd.f32 0.0, %v1544
  %v1546 = vpop.f32.mrf.mxu0
  %v1547 = vadd.f32 0.0, %v1546
  %1548 = vmatprep.mubr.bf16.mxu0 0
  %1549 = vmatmul.mubr.bf16.gmra.mxu0 %v463
  %v1550 = vpop.f32.mrf.mxu0
  %v1551 = vadd.f32 0.0, %v1550
  %v1552 = vpop.f32.mrf.mxu0
  %v1553 = vadd.f32 0.0, %v1552
  %v1554 = vpop.f32.mrf.mxu0
  %v1555 = vadd.f32 0.0, %v1554
  %v1556 = vpop.f32.mrf.mxu0
  %v1557 = vadd.f32 0.0, %v1556
  %1558 = vmatprep.mubr.bf16.mxu0 0
  %1559 = vmatmul.mubr.bf16.gmra.mxu0 %v466
  %v1560 = vpop.f32.mrf.mxu0
  %v1561 = vadd.f32 0.0, %v1560
  %v1562 = vpop.f32.mrf.mxu0
  %v1563 = vadd.f32 0.0, %v1562
  %v1564 = vpop.f32.mrf.mxu0
  %v1565 = vadd.f32 0.0, %v1564
  %v1566 = vpop.f32.mrf.mxu0
  %v1567 = vadd.f32 0.0, %v1566
  %1568 = vdwg.mxu0
  %v1569 = vpack.c.bf16 %v1462, %v1458
  %v1570 = vpack.c.bf16 %v1464, %v1460
  %v1571 = vpack.c.bf16 %v1535, %v1531
  %v1572 = vpack.c.bf16 %v1537, %v1533
  %v1573 = vpack.c.bf16 %v1472, %v1468
  %v1574 = vpack.c.bf16 %v1474, %v1470
  %v1575 = vpack.c.bf16 %v1545, %v1541
  %v1576 = vpack.c.bf16 %v1547, %v1543
  %v1577 = vpack.c.bf16 %v1482, %v1478
  %v1578 = vpack.c.bf16 %v1484, %v1480
  %v1579 = vpack.c.bf16 %v1555, %v1551
  %v1580 = vpack.c.bf16 %v1557, %v1553
  %v1581 = vpack.c.bf16 %v1492, %v1488
  %v1582 = vpack.c.bf16 %v1494, %v1490
  %v1583 = vpack.c.bf16 %v1565, %v1561
  %v1584 = vpack.c.bf16 %v1567, %v1563
  %v1585 = vld [vmem:[%s12] sm:$0xff]
  %v1586 = vld [vmem:[%s12 + $0x8] sm:$0xff]
  %v1587 = vld [vmem:[%s12 + $0x10] sm:$0xff]
  %v1588 = vld [vmem:[%s12 + $0x18] sm:$0xff]
  %v1589 = vld [vmem:[%s12 + $0x20] sm:$0xff]
  %v1590 = vld [vmem:[%s12 + $0x28] sm:$0xff]
  %v1591 = vld [vmem:[%s12 + $0x30] sm:$0xff]
  %v1592 = vld [vmem:[%s12 + $0x38] sm:$0xff]
  %v1593 = vld [vmem:[%s12 + $0x40] sm:$0xff]
  %v1594 = vld [vmem:[%s12 + $0x48] sm:$0xff]
  %v1595 = vld [vmem:[%s12 + $0x50] sm:$0xff]
  %v1596 = vld [vmem:[%s12 + $0x58] sm:$0xff]
  %v1597 = vld [vmem:[%s12 + $0x60] sm:$0xff]
  %v1598 = vld [vmem:[%s12 + $0x68] sm:$0xff]
  %v1599 = vld [vmem:[%s12 + $0x70] sm:$0xff]
  %v1600 = vld [vmem:[%s12 + $0x78] sm:$0xff]
  %v1601 = vld [vmem:[%s12 + $0x80] sm:$0xff]
  %v1602 = vld [vmem:[%s12 + $0x88] sm:$0xff]
  %v1603 = vld [vmem:[%s12 + $0x90] sm:$0xff]
  %v1604 = vld [vmem:[%s12 + $0x98] sm:$0xff]
  %v1605 = vld [vmem:[%s12 + $0xa0] sm:$0xff]
  %v1606 = vld [vmem:[%s12 + $0xa8] sm:$0xff]
  %v1607 = vld [vmem:[%s12 + $0xb0] sm:$0xff]
  %v1608 = vld [vmem:[%s12 + $0xb8] sm:$0xff]
  %v1609 = vld [vmem:[%s12 + $0xc0] sm:$0xff]
  %v1610 = vld [vmem:[%s12 + $0xc8] sm:$0xff]
  %v1611 = vld [vmem:[%s12 + $0xd0] sm:$0xff]
  %v1612 = vld [vmem:[%s12 + $0xd8] sm:$0xff]
  %v1613 = vld [vmem:[%s12 + $0xe0] sm:$0xff]
  %v1614 = vld [vmem:[%s12 + $0xe8] sm:$0xff]
  %v1615 = vld [vmem:[%s12 + $0xf0] sm:$0xff]
  %v1616 = vld [vmem:[%s12 + $0xf8] sm:$0xff]
  %v1617 = vld [vmem:[%s12 + $0x100] sm:$0xff]
  %v1618 = vld [vmem:[%s12 + $0x108] sm:$0xff]
  %v1619 = vld [vmem:[%s12 + $0x110] sm:$0xff]
  %v1620 = vld [vmem:[%s12 + $0x118] sm:$0xff]
  %v1621 = vld [vmem:[%s12 + $0x120] sm:$0xff]
  %v1622 = vld [vmem:[%s12 + $0x128] sm:$0xff]
  %v1623 = vld [vmem:[%s12 + $0x130] sm:$0xff]
  %v1624 = vld [vmem:[%s12 + $0x138] sm:$0xff]
  %v1625 = vld [vmem:[%s12 + $0x140] sm:$0xff]
  %v1626 = vld [vmem:[%s12 + $0x148] sm:$0xff]
  %v1627 = vld [vmem:[%s12 + $0x150] sm:$0xff]
  %v1628 = vld [vmem:[%s12 + $0x158] sm:$0xff]
  %v1629 = vld [vmem:[%s12 + $0x160] sm:$0xff]
  %v1630 = vld [vmem:[%s12 + $0x168] sm:$0xff]
  %v1631 = vld [vmem:[%s12 + $0x170] sm:$0xff]
  %v1632 = vld [vmem:[%s12 + $0x178] sm:$0xff]
  %v1633 = vld [vmem:[%s12 + $0x180] sm:$0xff]
  %v1634 = vld [vmem:[%s12 + $0x188] sm:$0xff]
  %v1635 = vld [vmem:[%s12 + $0x190] sm:$0xff]
  %v1636 = vld [vmem:[%s12 + $0x198] sm:$0xff]
  %v1637 = vld [vmem:[%s12 + $0x1a0] sm:$0xff]
  %v1638 = vld [vmem:[%s12 + $0x1a8] sm:$0xff]
  %v1639 = vld [vmem:[%s12 + $0x1b0] sm:$0xff]
  %v1640 = vld [vmem:[%s12 + $0x1b8] sm:$0xff]
  %v1641 = vld [vmem:[%s12 + $0x1c0] sm:$0xff]
  %v1642 = vld [vmem:[%s12 + $0x1c8] sm:$0xff]
  %v1643 = vld [vmem:[%s12 + $0x1d0] sm:$0xff]
  %v1644 = vld [vmem:[%s12 + $0x1d8] sm:$0xff]
  %v1645 = vld [vmem:[%s12 + $0x1e0] sm:$0xff]
  %v1646 = vld [vmem:[%s12 + $0x1e8] sm:$0xff]
  %v1647 = vld [vmem:[%s12 + $0x1f0] sm:$0xff]
  %v1648 = vld [vmem:[%s12 + $0x1f8] sm:$0xff]
  %v1649 = vld [vmem:[%s12 + $0x200] sm:$0xff]
  %v1650 = vld [vmem:[%s12 + $0x208] sm:$0xff]
  %v1651 = vld [vmem:[%s12 + $0x210] sm:$0xff]
  %v1652 = vld [vmem:[%s12 + $0x218] sm:$0xff]
  %v1653 = vld [vmem:[%s12 + $0x220] sm:$0xff]
  %v1654 = vld [vmem:[%s12 + $0x228] sm:$0xff]
  %v1655 = vld [vmem:[%s12 + $0x230] sm:$0xff]
  %v1656 = vld [vmem:[%s12 + $0x238] sm:$0xff]
  %v1657 = vld [vmem:[%s12 + $0x240] sm:$0xff]
  %v1658 = vld [vmem:[%s12 + $0x248] sm:$0xff]
  %v1659 = vld [vmem:[%s12 + $0x250] sm:$0xff]
  %v1660 = vld [vmem:[%s12 + $0x258] sm:$0xff]
  %v1661 = vld [vmem:[%s12 + $0x260] sm:$0xff]
  %v1662 = vld [vmem:[%s12 + $0x268] sm:$0xff]
  %v1663 = vld [vmem:[%s12 + $0x270] sm:$0xff]
  %v1664 = vld [vmem:[%s12 + $0x278] sm:$0xff]
  %v1665 = vld [vmem:[%s12 + $0x280] sm:$0xff]
  %v1666 = vld [vmem:[%s12 + $0x288] sm:$0xff]
  %v1667 = vld [vmem:[%s12 + $0x290] sm:$0xff]
  %v1668 = vld [vmem:[%s12 + $0x298] sm:$0xff]
  %v1669 = vld [vmem:[%s12 + $0x2a0] sm:$0xff]
  %v1670 = vld [vmem:[%s12 + $0x2a8] sm:$0xff]
  %v1671 = vld [vmem:[%s12 + $0x2b0] sm:$0xff]
  %v1672 = vld [vmem:[%s12 + $0x2b8] sm:$0xff]
  %v1673 = vld [vmem:[%s12 + $0x2c0] sm:$0xff]
  %v1674 = vld [vmem:[%s12 + $0x2c8] sm:$0xff]
  %v1675 = vld [vmem:[%s12 + $0x2d0] sm:$0xff]
  %v1676 = vld [vmem:[%s12 + $0x2d8] sm:$0xff]
  %v1677 = vld [vmem:[%s12 + $0x2e0] sm:$0xff]
  %v1678 = vld [vmem:[%s12 + $0x2e8] sm:$0xff]
  %v1679 = vld [vmem:[%s12 + $0x2f0] sm:$0xff]
  %v1680 = vld [vmem:[%s12 + $0x2f8] sm:$0xff]
  %v1681 = vld [vmem:[%s12 + $0x300] sm:$0xff]
  %v1682 = vld [vmem:[%s12 + $0x308] sm:$0xff]
  %v1683 = vld [vmem:[%s12 + $0x310] sm:$0xff]
  %v1684 = vld [vmem:[%s12 + $0x318] sm:$0xff]
  %v1685 = vld [vmem:[%s12 + $0x320] sm:$0xff]
  %v1686 = vld [vmem:[%s12 + $0x328] sm:$0xff]
  %v1687 = vld [vmem:[%s12 + $0x330] sm:$0xff]
  %v1688 = vld [vmem:[%s12 + $0x338] sm:$0xff]
  %v1689 = vld [vmem:[%s12 + $0x340] sm:$0xff]
  %v1690 = vld [vmem:[%s12 + $0x348] sm:$0xff]
  %v1691 = vld [vmem:[%s12 + $0x350] sm:$0xff]
  %v1692 = vld [vmem:[%s12 + $0x358] sm:$0xff]
  %v1693 = vld [vmem:[%s12 + $0x360] sm:$0xff]
  %v1694 = vld [vmem:[%s12 + $0x368] sm:$0xff]
  %v1695 = vld [vmem:[%s12 + $0x370] sm:$0xff]
  %v1696 = vld [vmem:[%s12 + $0x378] sm:$0xff]
  %v1697 = vld [vmem:[%s12 + $0x380] sm:$0xff]
  %v1698 = vld [vmem:[%s12 + $0x388] sm:$0xff]
  %v1699 = vld [vmem:[%s12 + $0x390] sm:$0xff]
  %v1700 = vld [vmem:[%s12 + $0x398] sm:$0xff]
  %v1701 = vld [vmem:[%s12 + $0x3a0] sm:$0xff]
  %v1702 = vld [vmem:[%s12 + $0x3a8] sm:$0xff]
  %v1703 = vld [vmem:[%s12 + $0x3b0] sm:$0xff]
  %v1704 = vld [vmem:[%s12 + $0x3b8] sm:$0xff]
  %v1705 = vld [vmem:[%s12 + $0x3c0] sm:$0xff]
  %v1706 = vld [vmem:[%s12 + $0x3c8] sm:$0xff]
  %v1707 = vld [vmem:[%s12 + $0x3d0] sm:$0xff]
  %v1708 = vld [vmem:[%s12 + $0x3d8] sm:$0xff]
  %v1709 = vld [vmem:[%s12 + $0x3e0] sm:$0xff]
  %v1710 = vld [vmem:[%s12 + $0x3e8] sm:$0xff]
  %v1711 = vld [vmem:[%s12 + $0x3f0] sm:$0xff]
  %v1712 = vld [vmem:[%s12 + $0x3f8] sm:$0xff]
  %v1713 = vld [vmem:[%s12 + $0x400] sm:$0xff]
  %v1714 = vld [vmem:[%s12 + $0x408] sm:$0xff]
  %v1715 = vld [vmem:[%s12 + $0x410] sm:$0xff]
  %v1716 = vld [vmem:[%s12 + $0x418] sm:$0xff]
  %v1717 = vld [vmem:[%s12 + $0x420] sm:$0xff]
  %v1718 = vld [vmem:[%s12 + $0x428] sm:$0xff]
  %v1719 = vld [vmem:[%s12 + $0x430] sm:$0xff]
  %v1720 = vld [vmem:[%s12 + $0x438] sm:$0xff]
  %v1721 = vld [vmem:[%s12 + $0x440] sm:$0xff]
  %v1722 = vld [vmem:[%s12 + $0x448] sm:$0xff]
  %v1723 = vld [vmem:[%s12 + $0x450] sm:$0xff]
  %v1724 = vld [vmem:[%s12 + $0x458] sm:$0xff]
  %v1725 = vld [vmem:[%s12 + $0x460] sm:$0xff]
  %v1726 = vld [vmem:[%s12 + $0x468] sm:$0xff]
  %v1727 = vld [vmem:[%s12 + $0x470] sm:$0xff]
  %v1728 = vld [vmem:[%s12 + $0x478] sm:$0xff]
  %v1729 = vld [vmem:[%s12 + $0x480] sm:$0xff]
  %v1730 = vld [vmem:[%s12 + $0x488] sm:$0xff]
  %v1731 = vld [vmem:[%s12 + $0x490] sm:$0xff]
  %v1732 = vld [vmem:[%s12 + $0x498] sm:$0xff]
  %v1733 = vld [vmem:[%s12 + $0x4a0] sm:$0xff]
  %v1734 = vld [vmem:[%s12 + $0x4a8] sm:$0xff]
  %v1735 = vld [vmem:[%s12 + $0x4b0] sm:$0xff]
  %v1736 = vld [vmem:[%s12 + $0x4b8] sm:$0xff]
  %v1737 = vld [vmem:[%s12 + $0x4c0] sm:$0xff]
  %v1738 = vld [vmem:[%s12 + $0x4c8] sm:$0xff]
  %v1739 = vld [vmem:[%s12 + $0x4d0] sm:$0xff]
  %v1740 = vld [vmem:[%s12 + $0x4d8] sm:$0xff]
  %v1741 = vld [vmem:[%s12 + $0x4e0] sm:$0xff]
  %v1742 = vld [vmem:[%s12 + $0x4e8] sm:$0xff]
  %v1743 = vld [vmem:[%s12 + $0x4f0] sm:$0xff]
  %v1744 = vld [vmem:[%s12 + $0x4f8] sm:$0xff]
  %v1745 = vld [vmem:[%s12 + $0x500] sm:$0xff]
  %v1746 = vld [vmem:[%s12 + $0x508] sm:$0xff]
  %v1747 = vld [vmem:[%s12 + $0x510] sm:$0xff]
  %v1748 = vld [vmem:[%s12 + $0x518] sm:$0xff]
  %v1749 = vld [vmem:[%s12 + $0x520] sm:$0xff]
  %v1750 = vld [vmem:[%s12 + $0x528] sm:$0xff]
  %v1751 = vld [vmem:[%s12 + $0x530] sm:$0xff]
  %v1752 = vld [vmem:[%s12 + $0x538] sm:$0xff]
  %v1753 = vld [vmem:[%s12 + $0x540] sm:$0xff]
  %v1754 = vld [vmem:[%s12 + $0x548] sm:$0xff]
  %v1755 = vld [vmem:[%s12 + $0x550] sm:$0xff]
  %v1756 = vld [vmem:[%s12 + $0x558] sm:$0xff]
  %v1757 = vld [vmem:[%s12 + $0x560] sm:$0xff]
  %v1758 = vld [vmem:[%s12 + $0x568] sm:$0xff]
  %v1759 = vld [vmem:[%s12 + $0x570] sm:$0xff]
  %v1760 = vld [vmem:[%s12 + $0x578] sm:$0xff]
  %v1761 = vld [vmem:[%s12 + $0x580] sm:$0xff]
  %v1762 = vld [vmem:[%s12 + $0x588] sm:$0xff]
  %v1763 = vld [vmem:[%s12 + $0x590] sm:$0xff]
  %v1764 = vld [vmem:[%s12 + $0x598] sm:$0xff]
  %v1765 = vld [vmem:[%s12 + $0x5a0] sm:$0xff]
  %v1766 = vld [vmem:[%s12 + $0x5a8] sm:$0xff]
  %v1767 = vld [vmem:[%s12 + $0x5b0] sm:$0xff]
  %v1768 = vld [vmem:[%s12 + $0x5b8] sm:$0xff]
  %v1769 = vld [vmem:[%s12 + $0x5c0] sm:$0xff]
  %v1770 = vld [vmem:[%s12 + $0x5c8] sm:$0xff]
  %v1771 = vld [vmem:[%s12 + $0x5d0] sm:$0xff]
  %v1772 = vld [vmem:[%s12 + $0x5d8] sm:$0xff]
  %v1773 = vld [vmem:[%s12 + $0x5e0] sm:$0xff]
  %v1774 = vld [vmem:[%s12 + $0x5e8] sm:$0xff]
  %v1775 = vld [vmem:[%s12 + $0x5f0] sm:$0xff]
  %v1776 = vld [vmem:[%s12 + $0x5f8] sm:$0xff]
  %v1777 = vld [vmem:[%s12 + $0x600] sm:$0xff]
  %v1778 = vld [vmem:[%s12 + $0x608] sm:$0xff]
  %v1779 = vld [vmem:[%s12 + $0x610] sm:$0xff]
  %v1780 = vld [vmem:[%s12 + $0x618] sm:$0xff]
  %v1781 = vld [vmem:[%s12 + $0x620] sm:$0xff]
  %v1782 = vld [vmem:[%s12 + $0x628] sm:$0xff]
  %v1783 = vld [vmem:[%s12 + $0x630] sm:$0xff]
  %v1784 = vld [vmem:[%s12 + $0x638] sm:$0xff]
  %v1785 = vld [vmem:[%s12 + $0x640] sm:$0xff]
  %v1786 = vld [vmem:[%s12 + $0x648] sm:$0xff]
  %v1787 = vld [vmem:[%s12 + $0x650] sm:$0xff]
  %v1788 = vld [vmem:[%s12 + $0x658] sm:$0xff]
  %v1789 = vld [vmem:[%s12 + $0x660] sm:$0xff]
  %v1790 = vld [vmem:[%s12 + $0x668] sm:$0xff]
  %v1791 = vld [vmem:[%s12 + $0x670] sm:$0xff]
  %v1792 = vld [vmem:[%s12 + $0x678] sm:$0xff]
  %v1793 = vld [vmem:[%s12 + $0x680] sm:$0xff]
  %v1794 = vld [vmem:[%s12 + $0x688] sm:$0xff]
  %v1795 = vld [vmem:[%s12 + $0x690] sm:$0xff]
  %v1796 = vld [vmem:[%s12 + $0x698] sm:$0xff]
  %v1797 = vld [vmem:[%s12 + $0x6a0] sm:$0xff]
  %v1798 = vld [vmem:[%s12 + $0x6a8] sm:$0xff]
  %v1799 = vld [vmem:[%s12 + $0x6b0] sm:$0xff]
  %v1800 = vld [vmem:[%s12 + $0x6b8] sm:$0xff]
  %v1801 = vld [vmem:[%s12 + $0x6c0] sm:$0xff]
  %v1802 = vld [vmem:[%s12 + $0x6c8] sm:$0xff]
  %v1803 = vld [vmem:[%s12 + $0x6d0] sm:$0xff]
  %v1804 = vld [vmem:[%s12 + $0x6d8] sm:$0xff]
  %v1805 = vld [vmem:[%s12 + $0x6e0] sm:$0xff]
  %v1806 = vld [vmem:[%s12 + $0x6e8] sm:$0xff]
  %v1807 = vld [vmem:[%s12 + $0x6f0] sm:$0xff]
  %v1808 = vld [vmem:[%s12 + $0x6f8] sm:$0xff]
  %v1809 = vld [vmem:[%s12 + $0x700] sm:$0xff]
  %v1810 = vld [vmem:[%s12 + $0x708] sm:$0xff]
  %v1811 = vld [vmem:[%s12 + $0x710] sm:$0xff]
  %v1812 = vld [vmem:[%s12 + $0x718] sm:$0xff]
  %v1813 = vld [vmem:[%s12 + $0x720] sm:$0xff]
  %v1814 = vld [vmem:[%s12 + $0x728] sm:$0xff]
  %v1815 = vld [vmem:[%s12 + $0x730] sm:$0xff]
  %v1816 = vld [vmem:[%s12 + $0x738] sm:$0xff]
  %v1817 = vld [vmem:[%s12 + $0x740] sm:$0xff]
  %v1818 = vld [vmem:[%s12 + $0x748] sm:$0xff]
  %v1819 = vld [vmem:[%s12 + $0x750] sm:$0xff]
  %v1820 = vld [vmem:[%s12 + $0x758] sm:$0xff]
  %v1821 = vld [vmem:[%s12 + $0x760] sm:$0xff]
  %v1822 = vld [vmem:[%s12 + $0x768] sm:$0xff]
  %v1823 = vld [vmem:[%s12 + $0x770] sm:$0xff]
  %v1824 = vld [vmem:[%s12 + $0x778] sm:$0xff]
  %v1825 = vld [vmem:[%s12 + $0x780] sm:$0xff]
  %v1826 = vld [vmem:[%s12 + $0x788] sm:$0xff]
  %v1827 = vld [vmem:[%s12 + $0x790] sm:$0xff]
  %v1828 = vld [vmem:[%s12 + $0x798] sm:$0xff]
  %v1829 = vld [vmem:[%s12 + $0x7a0] sm:$0xff]
  %v1830 = vld [vmem:[%s12 + $0x7a8] sm:$0xff]
  %v1831 = vld [vmem:[%s12 + $0x7b0] sm:$0xff]
  %v1832 = vld [vmem:[%s12 + $0x7b8] sm:$0xff]
  %v1833 = vld [vmem:[%s12 + $0x7c0] sm:$0xff]
  %v1834 = vld [vmem:[%s12 + $0x7c8] sm:$0xff]
  %v1835 = vld [vmem:[%s12 + $0x7d0] sm:$0xff]
  %v1836 = vld [vmem:[%s12 + $0x7d8] sm:$0xff]
  %v1837 = vld [vmem:[%s12 + $0x7e0] sm:$0xff]
  %v1838 = vld [vmem:[%s12 + $0x7e8] sm:$0xff]
  %v1839 = vld [vmem:[%s12 + $0x7f0] sm:$0xff]
  %v1840 = vld [vmem:[%s12 + $0x7f8] sm:$0xff]
  %v1841 = vld [vmem:[%s13] sm:$0xff]
  %v1843 = vlaneseq
  %v1844 = vshrl.u32 %v1843, 7
  %v1845 = vsub.s32 0, %v1844
  %v1846 = vrot.slane %v1841, %v1845
  %v1847 = vlaneseq
  %v1848 = vshrl.u32 %v1847, 7
  %v1849 = vsub.s32 1, %v1848
  %v1850 = vrot.slane %v1841, %v1849
  %v1851 = vlaneseq
  %v1852 = vshrl.u32 %v1851, 7
  %v1853 = vsub.s32 2, %v1852
  %v1854 = vrot.slane %v1841, %v1853
  %v1855 = vlaneseq
  %v1856 = vshrl.u32 %v1855, 7
  %v1857 = vsub.s32 3, %v1856
  %v1858 = vrot.slane %v1841, %v1857
  %v1859 = vlaneseq
  %v1860 = vshrl.u32 %v1859, 7
  %v1861 = vsub.s32 4, %v1860
  %v1862 = vrot.slane %v1841, %v1861
  %v1863 = vlaneseq
  %v1864 = vshrl.u32 %v1863, 7
  %v1865 = vsub.s32 5, %v1864
  %v1866 = vrot.slane %v1841, %v1865
  %v1867 = vlaneseq
  %v1868 = vshrl.u32 %v1867, 7
  %v1869 = vsub.s32 6, %v1868
  %v1870 = vrot.slane %v1841, %v1869
  %v1871 = vlaneseq
  %v1872 = vshrl.u32 %v1871, 7
  %v1873 = vsub.s32 7, %v1872
  %v1874 = vrot.slane %v1841, %v1873
  %v2139 = vunpack.c.l.b16 %v1585
  %v2140 = vunpack.c.h.b16 %v1585
  %v2141 = vunpack.c.l.b16 %v1586
  %v2142 = vunpack.c.h.b16 %v1586
  %v2143 = vunpack.c.l.b16 %v1587
  %v2144 = vunpack.c.h.b16 %v1587
  %v2145 = vunpack.c.l.b16 %v1588
  %v2146 = vunpack.c.h.b16 %v1588
  %v2147 = vunpack.c.l.b16 %v1589
  %v2148 = vunpack.c.h.b16 %v1589
  %v2149 = vunpack.c.l.b16 %v1590
  %v2150 = vunpack.c.h.b16 %v1590
  %v2151 = vunpack.c.l.b16 %v1591
  %v2152 = vunpack.c.h.b16 %v1591
  %v2153 = vunpack.c.l.b16 %v1592
  %v2154 = vunpack.c.h.b16 %v1592
  %v2155 = vunpack.c.l.b16 %v1593
  %v2156 = vunpack.c.h.b16 %v1593
  %v2157 = vunpack.c.l.b16 %v1594
  %v2158 = vunpack.c.h.b16 %v1594
  %v2159 = vunpack.c.l.b16 %v1595
  %v2160 = vunpack.c.h.b16 %v1595
  %v2161 = vunpack.c.l.b16 %v1596
  %v2162 = vunpack.c.h.b16 %v1596
  %v2163 = vunpack.c.l.b16 %v1597
  %v2164 = vunpack.c.h.b16 %v1597
  %v2165 = vunpack.c.l.b16 %v1598
  %v2166 = vunpack.c.h.b16 %v1598
  %v2167 = vunpack.c.l.b16 %v1599
  %v2168 = vunpack.c.h.b16 %v1599
  %v2169 = vunpack.c.l.b16 %v1600
  %v2170 = vunpack.c.h.b16 %v1600
  %v2171 = vunpack.c.l.b16 %v1601
  %v2172 = vunpack.c.h.b16 %v1601
  %v2173 = vunpack.c.l.b16 %v1602
  %v2174 = vunpack.c.h.b16 %v1602
  %v2175 = vunpack.c.l.b16 %v1603
  %v2176 = vunpack.c.h.b16 %v1603
  %v2177 = vunpack.c.l.b16 %v1604
  %v2178 = vunpack.c.h.b16 %v1604
  %v2179 = vunpack.c.l.b16 %v1605
  %v2180 = vunpack.c.h.b16 %v1605
  %v2181 = vunpack.c.l.b16 %v1606
  %v2182 = vunpack.c.h.b16 %v1606
  %v2183 = vunpack.c.l.b16 %v1607
  %v2184 = vunpack.c.h.b16 %v1607
  %v2185 = vunpack.c.l.b16 %v1608
  %v2186 = vunpack.c.h.b16 %v1608
  %v2187 = vunpack.c.l.b16 %v1609
  %v2188 = vunpack.c.h.b16 %v1609
  %v2189 = vunpack.c.l.b16 %v1610
  %v2190 = vunpack.c.h.b16 %v1610
  %v2191 = vunpack.c.l.b16 %v1611
  %v2192 = vunpack.c.h.b16 %v1611
  %v2193 = vunpack.c.l.b16 %v1612
  %v2194 = vunpack.c.h.b16 %v1612
  %v2195 = vunpack.c.l.b16 %v1613
  %v2196 = vunpack.c.h.b16 %v1613
  %v2197 = vunpack.c.l.b16 %v1614
  %v2198 = vunpack.c.h.b16 %v1614
  %v2199 = vunpack.c.l.b16 %v1615
  %v2200 = vunpack.c.h.b16 %v1615
  %v2201 = vunpack.c.l.b16 %v1616
  %v2202 = vunpack.c.h.b16 %v1616
  %v2203 = vunpack.c.l.b16 %v1617
  %v2204 = vunpack.c.h.b16 %v1617
  %v2205 = vunpack.c.l.b16 %v1618
  %v2206 = vunpack.c.h.b16 %v1618
  %v2207 = vunpack.c.l.b16 %v1619
  %v2208 = vunpack.c.h.b16 %v1619
  %v2209 = vunpack.c.l.b16 %v1620
  %v2210 = vunpack.c.h.b16 %v1620
  %v2211 = vunpack.c.l.b16 %v1621
  %v2212 = vunpack.c.h.b16 %v1621
  %v2213 = vunpack.c.l.b16 %v1622
  %v2214 = vunpack.c.h.b16 %v1622
  %v2215 = vunpack.c.l.b16 %v1623
  %v2216 = vunpack.c.h.b16 %v1623
  %v2217 = vunpack.c.l.b16 %v1624
  %v2218 = vunpack.c.h.b16 %v1624
  %v2219 = vunpack.c.l.b16 %v1625
  %v2220 = vunpack.c.h.b16 %v1625
  %v2221 = vunpack.c.l.b16 %v1626
  %v2222 = vunpack.c.h.b16 %v1626
  %v2223 = vunpack.c.l.b16 %v1627
  %v2224 = vunpack.c.h.b16 %v1627
  %v2225 = vunpack.c.l.b16 %v1628
  %v2226 = vunpack.c.h.b16 %v1628
  %v2227 = vunpack.c.l.b16 %v1629
  %v2228 = vunpack.c.h.b16 %v1629
  %v2229 = vunpack.c.l.b16 %v1630
  %v2230 = vunpack.c.h.b16 %v1630
  %v2231 = vunpack.c.l.b16 %v1631
  %v2232 = vunpack.c.h.b16 %v1631
  %v2233 = vunpack.c.l.b16 %v1632
  %v2234 = vunpack.c.h.b16 %v1632
  %v2235 = vunpack.c.l.b16 %v1633
  %v2236 = vunpack.c.h.b16 %v1633
  %v2237 = vunpack.c.l.b16 %v1634
  %v2238 = vunpack.c.h.b16 %v1634
  %v2239 = vunpack.c.l.b16 %v1635
  %v2240 = vunpack.c.h.b16 %v1635
  %v2241 = vunpack.c.l.b16 %v1636
  %v2242 = vunpack.c.h.b16 %v1636
  %v2243 = vunpack.c.l.b16 %v1637
  %v2244 = vunpack.c.h.b16 %v1637
  %v2245 = vunpack.c.l.b16 %v1638
  %v2246 = vunpack.c.h.b16 %v1638
  %v2247 = vunpack.c.l.b16 %v1639
  %v2248 = vunpack.c.h.b16 %v1639
  %v2249 = vunpack.c.l.b16 %v1640
  %v2250 = vunpack.c.h.b16 %v1640
  %v2251 = vunpack.c.l.b16 %v1641
  %v2252 = vunpack.c.h.b16 %v1641
  %v2253 = vunpack.c.l.b16 %v1642
  %v2254 = vunpack.c.h.b16 %v1642
  %v2255 = vunpack.c.l.b16 %v1643
  %v2256 = vunpack.c.h.b16 %v1643
  %v2257 = vunpack.c.l.b16 %v1644
  %v2258 = vunpack.c.h.b16 %v1644
  %v2259 = vunpack.c.l.b16 %v1645
  %v2260 = vunpack.c.h.b16 %v1645
  %v2261 = vunpack.c.l.b16 %v1646
  %v2262 = vunpack.c.h.b16 %v1646
  %v2263 = vunpack.c.l.b16 %v1647
  %v2264 = vunpack.c.h.b16 %v1647
  %v2265 = vunpack.c.l.b16 %v1648
  %v2266 = vunpack.c.h.b16 %v1648
  %v2267 = vunpack.c.l.b16 %v1649
  %v2268 = vunpack.c.h.b16 %v1649
  %v2269 = vunpack.c.l.b16 %v1650
  %v2270 = vunpack.c.h.b16 %v1650
  %v2271 = vunpack.c.l.b16 %v1651
  %v2272 = vunpack.c.h.b16 %v1651
  %v2273 = vunpack.c.l.b16 %v1652
  %v2274 = vunpack.c.h.b16 %v1652
  %v2275 = vunpack.c.l.b16 %v1653
  %v2276 = vunpack.c.h.b16 %v1653
  %v2277 = vunpack.c.l.b16 %v1654
  %v2278 = vunpack.c.h.b16 %v1654
  %v2279 = vunpack.c.l.b16 %v1655
  %v2280 = vunpack.c.h.b16 %v1655
  %v2281 = vunpack.c.l.b16 %v1656
  %v2282 = vunpack.c.h.b16 %v1656
  %v2283 = vunpack.c.l.b16 %v1657
  %v2284 = vunpack.c.h.b16 %v1657
  %v2285 = vunpack.c.l.b16 %v1658
  %v2286 = vunpack.c.h.b16 %v1658
  %v2287 = vunpack.c.l.b16 %v1659
  %v2288 = vunpack.c.h.b16 %v1659
  %v2289 = vunpack.c.l.b16 %v1660
  %v2290 = vunpack.c.h.b16 %v1660
  %v2291 = vunpack.c.l.b16 %v1661
  %v2292 = vunpack.c.h.b16 %v1661
  %v2293 = vunpack.c.l.b16 %v1662
  %v2294 = vunpack.c.h.b16 %v1662
  %v2295 = vunpack.c.l.b16 %v1663
  %v2296 = vunpack.c.h.b16 %v1663
  %v2297 = vunpack.c.l.b16 %v1664
  %v2298 = vunpack.c.h.b16 %v1664
  %v2299 = vunpack.c.l.b16 %v1665
  %v2300 = vunpack.c.h.b16 %v1665
  %v2301 = vunpack.c.l.b16 %v1666
  %v2302 = vunpack.c.h.b16 %v1666
  %v2303 = vunpack.c.l.b16 %v1667
  %v2304 = vunpack.c.h.b16 %v1667
  %v2305 = vunpack.c.l.b16 %v1668
  %v2306 = vunpack.c.h.b16 %v1668
  %v2307 = vunpack.c.l.b16 %v1669
  %v2308 = vunpack.c.h.b16 %v1669
  %v2309 = vunpack.c.l.b16 %v1670
  %v2310 = vunpack.c.h.b16 %v1670
  %v2311 = vunpack.c.l.b16 %v1671
  %v2312 = vunpack.c.h.b16 %v1671
  %v2313 = vunpack.c.l.b16 %v1672
  %v2314 = vunpack.c.h.b16 %v1672
  %v2315 = vunpack.c.l.b16 %v1673
  %v2316 = vunpack.c.h.b16 %v1673
  %v2317 = vunpack.c.l.b16 %v1674
  %v2318 = vunpack.c.h.b16 %v1674
  %v2319 = vunpack.c.l.b16 %v1675
  %v2320 = vunpack.c.h.b16 %v1675
  %v2321 = vunpack.c.l.b16 %v1676
  %v2322 = vunpack.c.h.b16 %v1676
  %v2323 = vunpack.c.l.b16 %v1677
  %v2324 = vunpack.c.h.b16 %v1677
  %v2325 = vunpack.c.l.b16 %v1678
  %v2326 = vunpack.c.h.b16 %v1678
  %v2327 = vunpack.c.l.b16 %v1679
  %v2328 = vunpack.c.h.b16 %v1679
  %v2329 = vunpack.c.l.b16 %v1680
  %v2330 = vunpack.c.h.b16 %v1680
  %v2331 = vunpack.c.l.b16 %v1681
  %v2332 = vunpack.c.h.b16 %v1681
  %v2333 = vunpack.c.l.b16 %v1682
  %v2334 = vunpack.c.h.b16 %v1682
  %v2335 = vunpack.c.l.b16 %v1683
  %v2336 = vunpack.c.h.b16 %v1683
  %v2337 = vunpack.c.l.b16 %v1684
  %v2338 = vunpack.c.h.b16 %v1684
  %v2339 = vunpack.c.l.b16 %v1685
  %v2340 = vunpack.c.h.b16 %v1685
  %v2341 = vunpack.c.l.b16 %v1686
  %v2342 = vunpack.c.h.b16 %v1686
  %v2343 = vunpack.c.l.b16 %v1687
  %v2344 = vunpack.c.h.b16 %v1687
  %v2345 = vunpack.c.l.b16 %v1688
  %v2346 = vunpack.c.h.b16 %v1688
  %v2347 = vunpack.c.l.b16 %v1689
  %v2348 = vunpack.c.h.b16 %v1689
  %v2349 = vunpack.c.l.b16 %v1690
  %v2350 = vunpack.c.h.b16 %v1690
  %v2351 = vunpack.c.l.b16 %v1691
  %v2352 = vunpack.c.h.b16 %v1691
  %v2353 = vunpack.c.l.b16 %v1692
  %v2354 = vunpack.c.h.b16 %v1692
  %v2355 = vunpack.c.l.b16 %v1693
  %v2356 = vunpack.c.h.b16 %v1693
  %v2357 = vunpack.c.l.b16 %v1694
  %v2358 = vunpack.c.h.b16 %v1694
  %v2359 = vunpack.c.l.b16 %v1695
  %v2360 = vunpack.c.h.b16 %v1695
  %v2361 = vunpack.c.l.b16 %v1696
  %v2362 = vunpack.c.h.b16 %v1696
  %v2363 = vunpack.c.l.b16 %v1697
  %v2364 = vunpack.c.h.b16 %v1697
  %v2365 = vunpack.c.l.b16 %v1698
  %v2366 = vunpack.c.h.b16 %v1698
  %v2367 = vunpack.c.l.b16 %v1699
  %v2368 = vunpack.c.h.b16 %v1699
  %v2369 = vunpack.c.l.b16 %v1700
  %v2370 = vunpack.c.h.b16 %v1700
  %v2371 = vunpack.c.l.b16 %v1701
  %v2372 = vunpack.c.h.b16 %v1701
  %v2373 = vunpack.c.l.b16 %v1702
  %v2374 = vunpack.c.h.b16 %v1702
  %v2375 = vunpack.c.l.b16 %v1703
  %v2376 = vunpack.c.h.b16 %v1703
  %v2377 = vunpack.c.l.b16 %v1704
  %v2378 = vunpack.c.h.b16 %v1704
  %v2379 = vunpack.c.l.b16 %v1705
  %v2380 = vunpack.c.h.b16 %v1705
  %v2381 = vunpack.c.l.b16 %v1706
  %v2382 = vunpack.c.h.b16 %v1706
  %v2383 = vunpack.c.l.b16 %v1707
  %v2384 = vunpack.c.h.b16 %v1707
  %v2385 = vunpack.c.l.b16 %v1708
  %v2386 = vunpack.c.h.b16 %v1708
  %v2387 = vunpack.c.l.b16 %v1709
  %v2388 = vunpack.c.h.b16 %v1709
  %v2389 = vunpack.c.l.b16 %v1710
  %v2390 = vunpack.c.h.b16 %v1710
  %v2391 = vunpack.c.l.b16 %v1711
  %v2392 = vunpack.c.h.b16 %v1711
  %v2393 = vunpack.c.l.b16 %v1712
  %v2394 = vunpack.c.h.b16 %v1712
  %v2395 = vunpack.c.l.b16 %v1713
  %v2396 = vunpack.c.h.b16 %v1713
  %v2397 = vunpack.c.l.b16 %v1714
  %v2398 = vunpack.c.h.b16 %v1714
  %v2399 = vunpack.c.l.b16 %v1715
  %v2400 = vunpack.c.h.b16 %v1715
  %v2401 = vunpack.c.l.b16 %v1716
  %v2402 = vunpack.c.h.b16 %v1716
  %v2403 = vunpack.c.l.b16 %v1717
  %v2404 = vunpack.c.h.b16 %v1717
  %v2405 = vunpack.c.l.b16 %v1718
  %v2406 = vunpack.c.h.b16 %v1718
  %v2407 = vunpack.c.l.b16 %v1719
  %v2408 = vunpack.c.h.b16 %v1719
  %v2409 = vunpack.c.l.b16 %v1720
  %v2410 = vunpack.c.h.b16 %v1720
  %v2411 = vunpack.c.l.b16 %v1721
  %v2412 = vunpack.c.h.b16 %v1721
  %v2413 = vunpack.c.l.b16 %v1722
  %v2414 = vunpack.c.h.b16 %v1722
  %v2415 = vunpack.c.l.b16 %v1723
  %v2416 = vunpack.c.h.b16 %v1723
  %v2417 = vunpack.c.l.b16 %v1724
  %v2418 = vunpack.c.h.b16 %v1724
  %v2419 = vunpack.c.l.b16 %v1725
  %v2420 = vunpack.c.h.b16 %v1725
  %v2421 = vunpack.c.l.b16 %v1726
  %v2422 = vunpack.c.h.b16 %v1726
  %v2423 = vunpack.c.l.b16 %v1727
  %v2424 = vunpack.c.h.b16 %v1727
  %v2425 = vunpack.c.l.b16 %v1728
  %v2426 = vunpack.c.h.b16 %v1728
  %v2427 = vunpack.c.l.b16 %v1729
  %v2428 = vunpack.c.h.b16 %v1729
  %v2429 = vunpack.c.l.b16 %v1730
  %v2430 = vunpack.c.h.b16 %v1730
  %v2431 = vunpack.c.l.b16 %v1731
  %v2432 = vunpack.c.h.b16 %v1731
  %v2433 = vunpack.c.l.b16 %v1732
  %v2434 = vunpack.c.h.b16 %v1732
  %v2435 = vunpack.c.l.b16 %v1733
  %v2436 = vunpack.c.h.b16 %v1733
  %v2437 = vunpack.c.l.b16 %v1734
  %v2438 = vunpack.c.h.b16 %v1734
  %v2439 = vunpack.c.l.b16 %v1735
  %v2440 = vunpack.c.h.b16 %v1735
  %v2441 = vunpack.c.l.b16 %v1736
  %v2442 = vunpack.c.h.b16 %v1736
  %v2443 = vunpack.c.l.b16 %v1737
  %v2444 = vunpack.c.h.b16 %v1737
  %v2445 = vunpack.c.l.b16 %v1738
  %v2446 = vunpack.c.h.b16 %v1738
  %v2447 = vunpack.c.l.b16 %v1739
  %v2448 = vunpack.c.h.b16 %v1739
  %v2449 = vunpack.c.l.b16 %v1740
  %v2450 = vunpack.c.h.b16 %v1740
  %v2451 = vunpack.c.l.b16 %v1741
  %v2452 = vunpack.c.h.b16 %v1741
  %v2453 = vunpack.c.l.b16 %v1742
  %v2454 = vunpack.c.h.b16 %v1742
  %v2455 = vunpack.c.l.b16 %v1743
  %v2456 = vunpack.c.h.b16 %v1743
  %v2457 = vunpack.c.l.b16 %v1744
  %v2458 = vunpack.c.h.b16 %v1744
  %v2459 = vunpack.c.l.b16 %v1745
  %v2460 = vunpack.c.h.b16 %v1745
  %v2461 = vunpack.c.l.b16 %v1746
  %v2462 = vunpack.c.h.b16 %v1746
  %v2463 = vunpack.c.l.b16 %v1747
  %v2464 = vunpack.c.h.b16 %v1747
  %v2465 = vunpack.c.l.b16 %v1748
  %v2466 = vunpack.c.h.b16 %v1748
  %v2467 = vunpack.c.l.b16 %v1749
  %v2468 = vunpack.c.h.b16 %v1749
  %v2469 = vunpack.c.l.b16 %v1750
  %v2470 = vunpack.c.h.b16 %v1750
  %v2471 = vunpack.c.l.b16 %v1751
  %v2472 = vunpack.c.h.b16 %v1751
  %v2473 = vunpack.c.l.b16 %v1752
  %v2474 = vunpack.c.h.b16 %v1752
  %v2475 = vunpack.c.l.b16 %v1753
  %v2476 = vunpack.c.h.b16 %v1753
  %v2477 = vunpack.c.l.b16 %v1754
  %v2478 = vunpack.c.h.b16 %v1754
  %v2479 = vunpack.c.l.b16 %v1755
  %v2480 = vunpack.c.h.b16 %v1755
  %v2481 = vunpack.c.l.b16 %v1756
  %v2482 = vunpack.c.h.b16 %v1756
  %v2483 = vunpack.c.l.b16 %v1757
  %v2484 = vunpack.c.h.b16 %v1757
  %v2485 = vunpack.c.l.b16 %v1758
  %v2486 = vunpack.c.h.b16 %v1758
  %v2487 = vunpack.c.l.b16 %v1759
  %v2488 = vunpack.c.h.b16 %v1759
  %v2489 = vunpack.c.l.b16 %v1760
  %v2490 = vunpack.c.h.b16 %v1760
  %v2491 = vunpack.c.l.b16 %v1761
  %v2492 = vunpack.c.h.b16 %v1761
  %v2493 = vunpack.c.l.b16 %v1762
  %v2494 = vunpack.c.h.b16 %v1762
  %v2495 = vunpack.c.l.b16 %v1763
  %v2496 = vunpack.c.h.b16 %v1763
  %v2497 = vunpack.c.l.b16 %v1764
  %v2498 = vunpack.c.h.b16 %v1764
  %v2499 = vunpack.c.l.b16 %v1765
  %v2500 = vunpack.c.h.b16 %v1765
  %v2501 = vunpack.c.l.b16 %v1766
  %v2502 = vunpack.c.h.b16 %v1766
  %v2503 = vunpack.c.l.b16 %v1767
  %v2504 = vunpack.c.h.b16 %v1767
  %v2505 = vunpack.c.l.b16 %v1768
  %v2506 = vunpack.c.h.b16 %v1768
  %v2507 = vunpack.c.l.b16 %v1769
  %v2508 = vunpack.c.h.b16 %v1769
  %v2509 = vunpack.c.l.b16 %v1770
  %v2510 = vunpack.c.h.b16 %v1770
  %v2511 = vunpack.c.l.b16 %v1771
  %v2512 = vunpack.c.h.b16 %v1771
  %v2513 = vunpack.c.l.b16 %v1772
  %v2514 = vunpack.c.h.b16 %v1772
  %v2515 = vunpack.c.l.b16 %v1773
  %v2516 = vunpack.c.h.b16 %v1773
  %v2517 = vunpack.c.l.b16 %v1774
  %v2518 = vunpack.c.h.b16 %v1774
  %v2519 = vunpack.c.l.b16 %v1775
  %v2520 = vunpack.c.h.b16 %v1775
  %v2521 = vunpack.c.l.b16 %v1776
  %v2522 = vunpack.c.h.b16 %v1776
  %v2523 = vunpack.c.l.b16 %v1777
  %v2524 = vunpack.c.h.b16 %v1777
  %v2525 = vunpack.c.l.b16 %v1778
  %v2526 = vunpack.c.h.b16 %v1778
  %v2527 = vunpack.c.l.b16 %v1779
  %v2528 = vunpack.c.h.b16 %v1779
  %v2529 = vunpack.c.l.b16 %v1780
  %v2530 = vunpack.c.h.b16 %v1780
  %v2531 = vunpack.c.l.b16 %v1781
  %v2532 = vunpack.c.h.b16 %v1781
  %v2533 = vunpack.c.l.b16 %v1782
  %v2534 = vunpack.c.h.b16 %v1782
  %v2535 = vunpack.c.l.b16 %v1783
  %v2536 = vunpack.c.h.b16 %v1783
  %v2537 = vunpack.c.l.b16 %v1784
  %v2538 = vunpack.c.h.b16 %v1784
  %v2539 = vunpack.c.l.b16 %v1785
  %v2540 = vunpack.c.h.b16 %v1785
  %v2541 = vunpack.c.l.b16 %v1786
  %v2542 = vunpack.c.h.b16 %v1786
  %v2543 = vunpack.c.l.b16 %v1787
  %v2544 = vunpack.c.h.b16 %v1787
  %v2545 = vunpack.c.l.b16 %v1788
  %v2546 = vunpack.c.h.b16 %v1788
  %v2547 = vunpack.c.l.b16 %v1789
  %v2548 = vunpack.c.h.b16 %v1789
  %v2549 = vunpack.c.l.b16 %v1790
  %v2550 = vunpack.c.h.b16 %v1790
  %v2551 = vunpack.c.l.b16 %v1791
  %v2552 = vunpack.c.h.b16 %v1791
  %v2553 = vunpack.c.l.b16 %v1792
  %v2554 = vunpack.c.h.b16 %v1792
  %v2555 = vunpack.c.l.b16 %v1793
  %v2556 = vunpack.c.h.b16 %v1793
  %v2557 = vunpack.c.l.b16 %v1794
  %v2558 = vunpack.c.h.b16 %v1794
  %v2559 = vunpack.c.l.b16 %v1795
  %v2560 = vunpack.c.h.b16 %v1795
  %v2561 = vunpack.c.l.b16 %v1796
  %v2562 = vunpack.c.h.b16 %v1796
  %v2563 = vunpack.c.l.b16 %v1797
  %v2564 = vunpack.c.h.b16 %v1797
  %v2565 = vunpack.c.l.b16 %v1798
  %v2566 = vunpack.c.h.b16 %v1798
  %v2567 = vunpack.c.l.b16 %v1799
  %v2568 = vunpack.c.h.b16 %v1799
  %v2569 = vunpack.c.l.b16 %v1800
  %v2570 = vunpack.c.h.b16 %v1800
  %v2571 = vunpack.c.l.b16 %v1801
  %v2572 = vunpack.c.h.b16 %v1801
  %v2573 = vunpack.c.l.b16 %v1802
  %v2574 = vunpack.c.h.b16 %v1802
  %v2575 = vunpack.c.l.b16 %v1803
  %v2576 = vunpack.c.h.b16 %v1803
  %v2577 = vunpack.c.l.b16 %v1804
  %v2578 = vunpack.c.h.b16 %v1804
  %v2579 = vunpack.c.l.b16 %v1805
  %v2580 = vunpack.c.h.b16 %v1805
  %v2581 = vunpack.c.l.b16 %v1806
  %v2582 = vunpack.c.h.b16 %v1806
  %v2583 = vunpack.c.l.b16 %v1807
  %v2584 = vunpack.c.h.b16 %v1807
  %v2585 = vunpack.c.l.b16 %v1808
  %v2586 = vunpack.c.h.b16 %v1808
  %v2587 = vunpack.c.l.b16 %v1809
  %v2588 = vunpack.c.h.b16 %v1809
  %v2589 = vunpack.c.l.b16 %v1810
  %v2590 = vunpack.c.h.b16 %v1810
  %v2591 = vunpack.c.l.b16 %v1811
  %v2592 = vunpack.c.h.b16 %v1811
  %v2593 = vunpack.c.l.b16 %v1812
  %v2594 = vunpack.c.h.b16 %v1812
  %v2595 = vunpack.c.l.b16 %v1813
  %v2596 = vunpack.c.h.b16 %v1813
  %v2597 = vunpack.c.l.b16 %v1814
  %v2598 = vunpack.c.h.b16 %v1814
  %v2599 = vunpack.c.l.b16 %v1815
  %v2600 = vunpack.c.h.b16 %v1815
  %v2601 = vunpack.c.l.b16 %v1816
  %v2602 = vunpack.c.h.b16 %v1816
  %v2603 = vunpack.c.l.b16 %v1817
  %v2604 = vunpack.c.h.b16 %v1817
  %v2605 = vunpack.c.l.b16 %v1818
  %v2606 = vunpack.c.h.b16 %v1818
  %v2607 = vunpack.c.l.b16 %v1819
  %v2608 = vunpack.c.h.b16 %v1819
  %v2609 = vunpack.c.l.b16 %v1820
  %v2610 = vunpack.c.h.b16 %v1820
  %v2611 = vunpack.c.l.b16 %v1821
  %v2612 = vunpack.c.h.b16 %v1821
  %v2613 = vunpack.c.l.b16 %v1822
  %v2614 = vunpack.c.h.b16 %v1822
  %v2615 = vunpack.c.l.b16 %v1823
  %v2616 = vunpack.c.h.b16 %v1823
  %v2617 = vunpack.c.l.b16 %v1824
  %v2618 = vunpack.c.h.b16 %v1824
  %v2619 = vunpack.c.l.b16 %v1825
  %v2620 = vunpack.c.h.b16 %v1825
  %v2621 = vunpack.c.l.b16 %v1826
  %v2622 = vunpack.c.h.b16 %v1826
  %v2623 = vunpack.c.l.b16 %v1827
  %v2624 = vunpack.c.h.b16 %v1827
  %v2625 = vunpack.c.l.b16 %v1828
  %v2626 = vunpack.c.h.b16 %v1828
  %v2627 = vunpack.c.l.b16 %v1829
  %v2628 = vunpack.c.h.b16 %v1829
  %v2629 = vunpack.c.l.b16 %v1830
  %v2630 = vunpack.c.h.b16 %v1830
  %v2631 = vunpack.c.l.b16 %v1831
  %v2632 = vunpack.c.h.b16 %v1831
  %v2633 = vunpack.c.l.b16 %v1832
  %v2634 = vunpack.c.h.b16 %v1832
  %v2635 = vunpack.c.l.b16 %v1833
  %v2636 = vunpack.c.h.b16 %v1833
  %v2637 = vunpack.c.l.b16 %v1834
  %v2638 = vunpack.c.h.b16 %v1834
  %v2639 = vunpack.c.l.b16 %v1835
  %v2640 = vunpack.c.h.b16 %v1835
  %v2641 = vunpack.c.l.b16 %v1836
  %v2642 = vunpack.c.h.b16 %v1836
  %v2643 = vunpack.c.l.b16 %v1837
  %v2644 = vunpack.c.h.b16 %v1837
  %v2645 = vunpack.c.l.b16 %v1838
  %v2646 = vunpack.c.h.b16 %v1838
  %v2647 = vunpack.c.l.b16 %v1839
  %v2648 = vunpack.c.h.b16 %v1839
  %v2649 = vunpack.c.l.b16 %v1840
  %v2650 = vunpack.c.h.b16 %v1840
  %v2651 = vpack.c.b16 %v2147, %v2139
  %v2652 = vpack.c.b16 %v2148, %v2140
  %v2653 = vpack.c.b16 %v2149, %v2141
  %v2654 = vpack.c.b16 %v2150, %v2142
  %v2655 = vpack.c.b16 %v2151, %v2143
  %v2656 = vpack.c.b16 %v2152, %v2144
  %v2657 = vpack.c.b16 %v2153, %v2145
  %v2658 = vpack.c.b16 %v2154, %v2146
  %v2659 = vpack.c.b16 %v2163, %v2155
  %v2660 = vpack.c.b16 %v2164, %v2156
  %v2661 = vpack.c.b16 %v2165, %v2157
  %v2662 = vpack.c.b16 %v2166, %v2158
  %v2663 = vpack.c.b16 %v2167, %v2159
  %v2664 = vpack.c.b16 %v2168, %v2160
  %v2665 = vpack.c.b16 %v2169, %v2161
  %v2666 = vpack.c.b16 %v2170, %v2162
  %v2667 = vpack.c.b16 %v2179, %v2171
  %v2668 = vpack.c.b16 %v2180, %v2172
  %v2669 = vpack.c.b16 %v2181, %v2173
  %v2670 = vpack.c.b16 %v2182, %v2174
  %v2671 = vpack.c.b16 %v2183, %v2175
  %v2672 = vpack.c.b16 %v2184, %v2176
  %v2673 = vpack.c.b16 %v2185, %v2177
  %v2674 = vpack.c.b16 %v2186, %v2178
  %v2675 = vpack.c.b16 %v2195, %v2187
  %v2676 = vpack.c.b16 %v2196, %v2188
  %v2677 = vpack.c.b16 %v2197, %v2189
  %v2678 = vpack.c.b16 %v2198, %v2190
  %v2679 = vpack.c.b16 %v2199, %v2191
  %v2680 = vpack.c.b16 %v2200, %v2192
  %v2681 = vpack.c.b16 %v2201, %v2193
  %v2682 = vpack.c.b16 %v2202, %v2194
  %v2683 = vpack.c.b16 %v2211, %v2203
  %v2684 = vpack.c.b16 %v2212, %v2204
  %v2685 = vpack.c.b16 %v2213, %v2205
  %v2686 = vpack.c.b16 %v2214, %v2206
  %v2687 = vpack.c.b16 %v2215, %v2207
  %v2688 = vpack.c.b16 %v2216, %v2208
  %v2689 = vpack.c.b16 %v2217, %v2209
  %v2690 = vpack.c.b16 %v2218, %v2210
  %v2691 = vpack.c.b16 %v2227, %v2219
  %v2692 = vpack.c.b16 %v2228, %v2220
  %v2693 = vpack.c.b16 %v2229, %v2221
  %v2694 = vpack.c.b16 %v2230, %v2222
  %v2695 = vpack.c.b16 %v2231, %v2223
  %v2696 = vpack.c.b16 %v2232, %v2224
  %v2697 = vpack.c.b16 %v2233, %v2225
  %v2698 = vpack.c.b16 %v2234, %v2226
  %v2699 = vpack.c.b16 %v2243, %v2235
  %v2700 = vpack.c.b16 %v2244, %v2236
  %v2701 = vpack.c.b16 %v2245, %v2237
  %v2702 = vpack.c.b16 %v2246, %v2238
  %v2703 = vpack.c.b16 %v2247, %v2239
  %v2704 = vpack.c.b16 %v2248, %v2240
  %v2705 = vpack.c.b16 %v2249, %v2241
  %v2706 = vpack.c.b16 %v2250, %v2242
  %v2707 = vpack.c.b16 %v2259, %v2251
  %v2708 = vpack.c.b16 %v2260, %v2252
  %v2709 = vpack.c.b16 %v2261, %v2253
  %v2710 = vpack.c.b16 %v2262, %v2254
  %v2711 = vpack.c.b16 %v2263, %v2255
  %v2712 = vpack.c.b16 %v2264, %v2256
  %v2713 = vpack.c.b16 %v2265, %v2257
  %v2714 = vpack.c.b16 %v2266, %v2258
  %v2715 = vpack.c.b16 %v2275, %v2267
  %v2716 = vpack.c.b16 %v2276, %v2268
  %v2717 = vpack.c.b16 %v2277, %v2269
  %v2718 = vpack.c.b16 %v2278, %v2270
  %v2719 = vpack.c.b16 %v2279, %v2271
  %v2720 = vpack.c.b16 %v2280, %v2272
  %v2721 = vpack.c.b16 %v2281, %v2273
  %v2722 = vpack.c.b16 %v2282, %v2274
  %v2723 = vpack.c.b16 %v2291, %v2283
  %v2724 = vpack.c.b16 %v2292, %v2284
  %v2725 = vpack.c.b16 %v2293, %v2285
  %v2726 = vpack.c.b16 %v2294, %v2286
  %v2727 = vpack.c.b16 %v2295, %v2287
  %v2728 = vpack.c.b16 %v2296, %v2288
  %v2729 = vpack.c.b16 %v2297, %v2289
  %v2730 = vpack.c.b16 %v2298, %v2290
  %v2731 = vpack.c.b16 %v2307, %v2299
  %v2732 = vpack.c.b16 %v2308, %v2300
  %v2733 = vpack.c.b16 %v2309, %v2301
  %v2734 = vpack.c.b16 %v2310, %v2302
  %v2735 = vpack.c.b16 %v2311, %v2303
  %v2736 = vpack.c.b16 %v2312, %v2304
  %v2737 = vpack.c.b16 %v2313, %v2305
  %v2738 = vpack.c.b16 %v2314, %v2306
  %v2739 = vpack.c.b16 %v2323, %v2315
  %v2740 = vpack.c.b16 %v2324, %v2316
  %v2741 = vpack.c.b16 %v2325, %v2317
  %v2742 = vpack.c.b16 %v2326, %v2318
  %v2743 = vpack.c.b16 %v2327, %v2319
  %v2744 = vpack.c.b16 %v2328, %v2320
  %v2745 = vpack.c.b16 %v2329, %v2321
  %v2746 = vpack.c.b16 %v2330, %v2322
  %v2747 = vpack.c.b16 %v2339, %v2331
  %v2748 = vpack.c.b16 %v2340, %v2332
  %v2749 = vpack.c.b16 %v2341, %v2333
  %v2750 = vpack.c.b16 %v2342, %v2334
  %v2751 = vpack.c.b16 %v2343, %v2335
  %v2752 = vpack.c.b16 %v2344, %v2336
  %v2753 = vpack.c.b16 %v2345, %v2337
  %v2754 = vpack.c.b16 %v2346, %v2338
  %v2755 = vpack.c.b16 %v2355, %v2347
  %v2756 = vpack.c.b16 %v2356, %v2348
  %v2757 = vpack.c.b16 %v2357, %v2349
  %v2758 = vpack.c.b16 %v2358, %v2350
  %v2759 = vpack.c.b16 %v2359, %v2351
  %v2760 = vpack.c.b16 %v2360, %v2352
  %v2761 = vpack.c.b16 %v2361, %v2353
  %v2762 = vpack.c.b16 %v2362, %v2354
  %v2763 = vpack.c.b16 %v2371, %v2363
  %v2764 = vpack.c.b16 %v2372, %v2364
  %v2765 = vpack.c.b16 %v2373, %v2365
  %v2766 = vpack.c.b16 %v2374, %v2366
  %v2767 = vpack.c.b16 %v2375, %v2367
  %v2768 = vpack.c.b16 %v2376, %v2368
  %v2769 = vpack.c.b16 %v2377, %v2369
  %v2770 = vpack.c.b16 %v2378, %v2370
  %v2771 = vpack.c.b16 %v2387, %v2379
  %v2772 = vpack.c.b16 %v2388, %v2380
  %v2773 = vpack.c.b16 %v2389, %v2381
  %v2774 = vpack.c.b16 %v2390, %v2382
  %v2775 = vpack.c.b16 %v2391, %v2383
  %v2776 = vpack.c.b16 %v2392, %v2384
  %v2777 = vpack.c.b16 %v2393, %v2385
  %v2778 = vpack.c.b16 %v2394, %v2386
  %v2779 = vpack.c.b16 %v2403, %v2395
  %v2780 = vpack.c.b16 %v2404, %v2396
  %v2781 = vpack.c.b16 %v2405, %v2397
  %v2782 = vpack.c.b16 %v2406, %v2398
  %v2783 = vpack.c.b16 %v2407, %v2399
  %v2784 = vpack.c.b16 %v2408, %v2400
  %v2785 = vpack.c.b16 %v2409, %v2401
  %v2786 = vpack.c.b16 %v2410, %v2402
  %v2787 = vpack.c.b16 %v2419, %v2411
  %v2788 = vpack.c.b16 %v2420, %v2412
  %v2789 = vpack.c.b16 %v2421, %v2413
  %v2790 = vpack.c.b16 %v2422, %v2414
  %v2791 = vpack.c.b16 %v2423, %v2415
  %v2792 = vpack.c.b16 %v2424, %v2416
  %v2793 = vpack.c.b16 %v2425, %v2417
  %v2794 = vpack.c.b16 %v2426, %v2418
  %v2795 = vpack.c.b16 %v2435, %v2427
  %v2796 = vpack.c.b16 %v2436, %v2428
  %v2797 = vpack.c.b16 %v2437, %v2429
  %v2798 = vpack.c.b16 %v2438, %v2430
  %v2799 = vpack.c.b16 %v2439, %v2431
  %v2800 = vpack.c.b16 %v2440, %v2432
  %v2801 = vpack.c.b16 %v2441, %v2433
  %v2802 = vpack.c.b16 %v2442, %v2434
  %v2803 = vpack.c.b16 %v2451, %v2443
  %v2804 = vpack.c.b16 %v2452, %v2444
  %v2805 = vpack.c.b16 %v2453, %v2445
  %v2806 = vpack.c.b16 %v2454, %v2446
  %v2807 = vpack.c.b16 %v2455, %v2447
  %v2808 = vpack.c.b16 %v2456, %v2448
  %v2809 = vpack.c.b16 %v2457, %v2449
  %v2810 = vpack.c.b16 %v2458, %v2450
  %v2811 = vpack.c.b16 %v2467, %v2459
  %v2812 = vpack.c.b16 %v2468, %v2460
  %v2813 = vpack.c.b16 %v2469, %v2461
  %v2814 = vpack.c.b16 %v2470, %v2462
  %v2815 = vpack.c.b16 %v2471, %v2463
  %v2816 = vpack.c.b16 %v2472, %v2464
  %v2817 = vpack.c.b16 %v2473, %v2465
  %v2818 = vpack.c.b16 %v2474, %v2466
  %v2819 = vpack.c.b16 %v2483, %v2475
  %v2820 = vpack.c.b16 %v2484, %v2476
  %v2821 = vpack.c.b16 %v2485, %v2477
  %v2822 = vpack.c.b16 %v2486, %v2478
  %v2823 = vpack.c.b16 %v2487, %v2479
  %v2824 = vpack.c.b16 %v2488, %v2480
  %v2825 = vpack.c.b16 %v2489, %v2481
  %v2826 = vpack.c.b16 %v2490, %v2482
  %v2827 = vpack.c.b16 %v2499, %v2491
  %v2828 = vpack.c.b16 %v2500, %v2492
  %v2829 = vpack.c.b16 %v2501, %v2493
  %v2830 = vpack.c.b16 %v2502, %v2494
  %v2831 = vpack.c.b16 %v2503, %v2495
  %v2832 = vpack.c.b16 %v2504, %v2496
  %v2833 = vpack.c.b16 %v2505, %v2497
  %v2834 = vpack.c.b16 %v2506, %v2498
  %v2835 = vpack.c.b16 %v2515, %v2507
  %v2836 = vpack.c.b16 %v2516, %v2508
  %v2837 = vpack.c.b16 %v2517, %v2509
  %v2838 = vpack.c.b16 %v2518, %v2510
  %v2839 = vpack.c.b16 %v2519, %v2511
  %v2840 = vpack.c.b16 %v2520, %v2512
  %v2841 = vpack.c.b16 %v2521, %v2513
  %v2842 = vpack.c.b16 %v2522, %v2514
  %v2843 = vpack.c.b16 %v2531, %v2523
  %v2844 = vpack.c.b16 %v2532, %v2524
  %v2845 = vpack.c.b16 %v2533, %v2525
  %v2846 = vpack.c.b16 %v2534, %v2526
  %v2847 = vpack.c.b16 %v2535, %v2527
  %v2848 = vpack.c.b16 %v2536, %v2528
  %v2849 = vpack.c.b16 %v2537, %v2529
  %v2850 = vpack.c.b16 %v2538, %v2530
  %v2851 = vpack.c.b16 %v2547, %v2539
  %v2852 = vpack.c.b16 %v2548, %v2540
  %v2853 = vpack.c.b16 %v2549, %v2541
  %v2854 = vpack.c.b16 %v2550, %v2542
  %v2855 = vpack.c.b16 %v2551, %v2543
  %v2856 = vpack.c.b16 %v2552, %v2544
  %v2857 = vpack.c.b16 %v2553, %v2545
  %v2858 = vpack.c.b16 %v2554, %v2546
  %v2859 = vpack.c.b16 %v2563, %v2555
  %v2860 = vpack.c.b16 %v2564, %v2556
  %v2861 = vpack.c.b16 %v2565, %v2557
  %v2862 = vpack.c.b16 %v2566, %v2558
  %v2863 = vpack.c.b16 %v2567, %v2559
  %v2864 = vpack.c.b16 %v2568, %v2560
  %v2865 = vpack.c.b16 %v2569, %v2561
  %v2866 = vpack.c.b16 %v2570, %v2562
  %v2867 = vpack.c.b16 %v2579, %v2571
  %v2868 = vpack.c.b16 %v2580, %v2572
  %v2869 = vpack.c.b16 %v2581, %v2573
  %v2870 = vpack.c.b16 %v2582, %v2574
  %v2871 = vpack.c.b16 %v2583, %v2575
  %v2872 = vpack.c.b16 %v2584, %v2576
  %v2873 = vpack.c.b16 %v2585, %v2577
  %v2874 = vpack.c.b16 %v2586, %v2578
  %v2875 = vpack.c.b16 %v2595, %v2587
  %v2876 = vpack.c.b16 %v2596, %v2588
  %v2877 = vpack.c.b16 %v2597, %v2589
  %v2878 = vpack.c.b16 %v2598, %v2590
  %v2879 = vpack.c.b16 %v2599, %v2591
  %v2880 = vpack.c.b16 %v2600, %v2592
  %v2881 = vpack.c.b16 %v2601, %v2593
  %v2882 = vpack.c.b16 %v2602, %v2594
  %v2883 = vpack.c.b16 %v2611, %v2603
  %v2884 = vpack.c.b16 %v2612, %v2604
  %v2885 = vpack.c.b16 %v2613, %v2605
  %v2886 = vpack.c.b16 %v2614, %v2606
  %v2887 = vpack.c.b16 %v2615, %v2607
  %v2888 = vpack.c.b16 %v2616, %v2608
  %v2889 = vpack.c.b16 %v2617, %v2609
  %v2890 = vpack.c.b16 %v2618, %v2610
  %v2891 = vpack.c.b16 %v2627, %v2619
  %v2892 = vpack.c.b16 %v2628, %v2620
  %v2893 = vpack.c.b16 %v2629, %v2621
  %v2894 = vpack.c.b16 %v2630, %v2622
  %v2895 = vpack.c.b16 %v2631, %v2623
  %v2896 = vpack.c.b16 %v2632, %v2624
  %v2897 = vpack.c.b16 %v2633, %v2625
  %v2898 = vpack.c.b16 %v2634, %v2626
  %v2899 = vpack.c.b16 %v2643, %v2635
  %v2900 = vpack.c.b16 %v2644, %v2636
  %v2901 = vpack.c.b16 %v2645, %v2637
  %v2902 = vpack.c.b16 %v2646, %v2638
  %v2903 = vpack.c.b16 %v2647, %v2639
  %v2904 = vpack.c.b16 %v2648, %v2640
  %v2905 = vpack.c.b16 %v2649, %v2641
  %v2906 = vpack.c.b16 %v2650, %v2642
  %3163 = vmatprep.subr.bf16.mxu0 %v2708
  %3164 = vmatpush1.bf16.msra.mxu0 %v2707
  %3165 = vmatprep.subr.bf16.mxu0 %v2700
  %3166 = vmatpush1.bf16.msra.mxu0 %v2699
  %3167 = vmatprep.subr.bf16.mxu0 %v2692
  %3168 = vmatpush1.bf16.msra.mxu0 %v2691
  %3169 = vmatprep.subr.bf16.mxu0 %v2684
  %3170 = vmatpush1.bf16.msra.mxu0 %v2683
  %3171 = vmatprep.subr.bf16.mxu0 %v2676
  %3172 = vmatpush1.bf16.msra.mxu0 %v2675
  %3173 = vmatprep.subr.bf16.mxu0 %v2668
  %3174 = vmatpush1.bf16.msra.mxu0 %v2667
  %3175 = vmatprep.subr.bf16.mxu0 %v2660
  %3176 = vmatpush1.bf16.msra.mxu0 %v2659
  %3177 = vmatprep.subr.bf16.mxu0 %v2652
  %3178 = vmatpush1.bf16.msra.mxu0 %v2651
  %3179 = vmatprep.subr.bf16.mxu0 %v2772
  %3180 = vmatpush2.bf16.msra.mxu0 %v2771
  %3181 = vmatprep.subr.bf16.mxu0 %v2764
  %3182 = vmatpush2.bf16.msra.mxu0 %v2763
  %3183 = vmatprep.subr.bf16.mxu0 %v2756
  %3184 = vmatpush2.bf16.msra.mxu0 %v2755
  %3185 = vmatprep.subr.bf16.mxu0 %v2748
  %3186 = vmatpush2.bf16.msra.mxu0 %v2747
  %3187 = vmatprep.subr.bf16.mxu0 %v2740
  %3188 = vmatpush2.bf16.msra.mxu0 %v2739
  %3189 = vmatprep.subr.bf16.mxu0 %v2732
  %3190 = vmatpush2.bf16.msra.mxu0 %v2731
  %3191 = vmatprep.subr.bf16.mxu0 %v2724
  %3192 = vmatpush2.bf16.msra.mxu0 %v2723
  %3193 = vmatprep.subr.bf16.mxu0 %v2716
  %3194 = vmatpush2.bf16.msra.mxu0 %v2715
  %3195 = vmatprep.mubr.bf16.mxu0 %v1570
  %3196 = vmatmul.mubr.bf16.gmra.mxu0 %v1569
  %v3197 = vpop.f32.mrf.mxu0
  %v3198 = vadd.f32 %v1846, %v3197
  %v3199 = vpop.f32.mrf.mxu0
  %v3200 = vadd.f32 %v1850, %v3199
  %v3201 = vpop.f32.mrf.mxu0
  %v3202 = vadd.f32 %v1846, %v3201
  %v3203 = vpop.f32.mrf.mxu0
  %v3204 = vadd.f32 %v1850, %v3203
  %3205 = vmatprep.mubr.bf16.mxu0 %v1574
  %3206 = vmatmul.mubr.bf16.gmra.mxu0 %v1573
  %v3207 = vpop.f32.mrf.mxu0
  %v3208 = vadd.f32 %v1846, %v3207
  %v3209 = vpop.f32.mrf.mxu0
  %v3210 = vadd.f32 %v1850, %v3209
  %v3211 = vpop.f32.mrf.mxu0
  %v3212 = vadd.f32 %v1846, %v3211
  %v3213 = vpop.f32.mrf.mxu0
  %v3214 = vadd.f32 %v1850, %v3213
  %3215 = vmatprep.mubr.bf16.mxu0 %v1578
  %3216 = vmatmul.mubr.bf16.gmra.mxu0 %v1577
  %v3217 = vpop.f32.mrf.mxu0
  %v3218 = vadd.f32 %v1846, %v3217
  %v3219 = vpop.f32.mrf.mxu0
  %v3220 = vadd.f32 %v1850, %v3219
  %v3221 = vpop.f32.mrf.mxu0
  %v3222 = vadd.f32 %v1846, %v3221
  %v3223 = vpop.f32.mrf.mxu0
  %v3224 = vadd.f32 %v1850, %v3223
  %3225 = vmatprep.mubr.bf16.mxu0 %v1582
  %3226 = vmatmul.mubr.bf16.gmra.mxu0 %v1581
  %v3227 = vpop.f32.mrf.mxu0
  %v3228 = vadd.f32 %v1846, %v3227
  %v3229 = vpop.f32.mrf.mxu0
  %v3230 = vadd.f32 %v1850, %v3229
  %v3231 = vpop.f32.mrf.mxu0
  %v3232 = vadd.f32 %v1846, %v3231
  %v3233 = vpop.f32.mrf.mxu0
  %v3234 = vadd.f32 %v1850, %v3233
  %3235 = vdwg.mxu0
  %3236 = vmatprep.subr.bf16.mxu0 %v2836
  %3237 = vmatpush1.bf16.msra.mxu0 %v2835
  %3238 = vmatprep.subr.bf16.mxu0 %v2828
  %3239 = vmatpush1.bf16.msra.mxu0 %v2827
  %3240 = vmatprep.subr.bf16.mxu0 %v2820
  %3241 = vmatpush1.bf16.msra.mxu0 %v2819
  %3242 = vmatprep.subr.bf16.mxu0 %v2812
  %3243 = vmatpush1.bf16.msra.mxu0 %v2811
  %3244 = vmatprep.subr.bf16.mxu0 %v2804
  %3245 = vmatpush1.bf16.msra.mxu0 %v2803
  %3246 = vmatprep.subr.bf16.mxu0 %v2796
  %3247 = vmatpush1.bf16.msra.mxu0 %v2795
  %3248 = vmatprep.subr.bf16.mxu0 %v2788
  %3249 = vmatpush1.bf16.msra.mxu0 %v2787
  %3250 = vmatprep.subr.bf16.mxu0 %v2780
  %3251 = vmatpush1.bf16.msra.mxu0 %v2779
  %3252 = vmatprep.subr.bf16.mxu0 %v2900
  %3253 = vmatpush2.bf16.msra.mxu0 %v2899
  %3254 = vmatprep.subr.bf16.mxu0 %v2892
  %3255 = vmatpush2.bf16.msra.mxu0 %v2891
  %3256 = vmatprep.subr.bf16.mxu0 %v2884
  %3257 = vmatpush2.bf16.msra.mxu0 %v2883
  %3258 = vmatprep.subr.bf16.mxu0 %v2876
  %3259 = vmatpush2.bf16.msra.mxu0 %v2875
  %3260 = vmatprep.subr.bf16.mxu0 %v2868
  %3261 = vmatpush2.bf16.msra.mxu0 %v2867
  %3262 = vmatprep.subr.bf16.mxu0 %v2860
  %3263 = vmatpush2.bf16.msra.mxu0 %v2859
  %3264 = vmatprep.subr.bf16.mxu0 %v2852
  %3265 = vmatpush2.bf16.msra.mxu0 %v2851
  %3266 = vmatprep.subr.bf16.mxu0 %v2844
  %3267 = vmatpush2.bf16.msra.mxu0 %v2843
  %3268 = vmatprep.mubr.bf16.mxu0 %v1572
  %3269 = vmatmul.mubr.bf16.gmra.mxu0 %v1571
  %v3270 = vpop.f32.mrf.mxu0
  %v3271 = vadd.f32 %v3198, %v3270
  %v3272 = vpop.f32.mrf.mxu0
  %v3273 = vadd.f32 %v3200, %v3272
  %v3274 = vpop.f32.mrf.mxu0
  %v3275 = vadd.f32 %v3202, %v3274
  %v3276 = vpop.f32.mrf.mxu0
  %v3277 = vadd.f32 %v3204, %v3276
  %3278 = vmatprep.mubr.bf16.mxu0 %v1576
  %3279 = vmatmul.mubr.bf16.gmra.mxu0 %v1575
  %v3280 = vpop.f32.mrf.mxu0
  %v3281 = vadd.f32 %v3208, %v3280
  %v3282 = vpop.f32.mrf.mxu0
  %v3283 = vadd.f32 %v3210, %v3282
  %v3284 = vpop.f32.mrf.mxu0
  %v3285 = vadd.f32 %v3212, %v3284
  %v3286 = vpop.f32.mrf.mxu0
  %v3287 = vadd.f32 %v3214, %v3286
  %3288 = vmatprep.mubr.bf16.mxu0 %v1580
  %3289 = vmatmul.mubr.bf16.gmra.mxu0 %v1579
  %v3290 = vpop.f32.mrf.mxu0
  %v3291 = vadd.f32 %v3218, %v3290
  %v3292 = vpop.f32.mrf.mxu0
  %v3293 = vadd.f32 %v3220, %v3292
  %v3294 = vpop.f32.mrf.mxu0
  %v3295 = vadd.f32 %v3222, %v3294
  %v3296 = vpop.f32.mrf.mxu0
  %v3297 = vadd.f32 %v3224, %v3296
  %3298 = vmatprep.mubr.bf16.mxu0 %v1584
  %3299 = vmatmul.mubr.bf16.gmra.mxu0 %v1583
  %v3300 = vpop.f32.mrf.mxu0
  %v3301 = vadd.f32 %v3228, %v3300
  %v3302 = vpop.f32.mrf.mxu0
  %v3303 = vadd.f32 %v3230, %v3302
  %v3304 = vpop.f32.mrf.mxu0
  %v3305 = vadd.f32 %v3232, %v3304
  %v3306 = vpop.f32.mrf.mxu0
  %v3307 = vadd.f32 %v3234, %v3306
  %3308 = vdwg.mxu0
  %3309 = vmatprep.subr.bf16.mxu0 %v2710
  %3310 = vmatpush1.bf16.msra.mxu0 %v2709
  %3311 = vmatprep.subr.bf16.mxu0 %v2702
  %3312 = vmatpush1.bf16.msra.mxu0 %v2701
  %3313 = vmatprep.subr.bf16.mxu0 %v2694
  %3314 = vmatpush1.bf16.msra.mxu0 %v2693
  %3315 = vmatprep.subr.bf16.mxu0 %v2686
  %3316 = vmatpush1.bf16.msra.mxu0 %v2685
  %3317 = vmatprep.subr.bf16.mxu0 %v2678
  %3318 = vmatpush1.bf16.msra.mxu0 %v2677
  %3319 = vmatprep.subr.bf16.mxu0 %v2670
  %3320 = vmatpush1.bf16.msra.mxu0 %v2669
  %3321 = vmatprep.subr.bf16.mxu0 %v2662
  %3322 = vmatpush1.bf16.msra.mxu0 %v2661
  %3323 = vmatprep.subr.bf16.mxu0 %v2654
  %3324 = vmatpush1.bf16.msra.mxu0 %v2653
  %3325 = vmatprep.subr.bf16.mxu0 %v2774
  %3326 = vmatpush2.bf16.msra.mxu0 %v2773
  %3327 = vmatprep.subr.bf16.mxu0 %v2766
  %3328 = vmatpush2.bf16.msra.mxu0 %v2765
  %3329 = vmatprep.subr.bf16.mxu0 %v2758
  %3330 = vmatpush2.bf16.msra.mxu0 %v2757
  %3331 = vmatprep.subr.bf16.mxu0 %v2750
  %3332 = vmatpush2.bf16.msra.mxu0 %v2749
  %3333 = vmatprep.subr.bf16.mxu0 %v2742
  %3334 = vmatpush2.bf16.msra.mxu0 %v2741
  %3335 = vmatprep.subr.bf16.mxu0 %v2734
  %3336 = vmatpush2.bf16.msra.mxu0 %v2733
  %3337 = vmatprep.subr.bf16.mxu0 %v2726
  %3338 = vmatpush2.bf16.msra.mxu0 %v2725
  %3339 = vmatprep.subr.bf16.mxu0 %v2718
  %3340 = vmatpush2.bf16.msra.mxu0 %v2717
  %3341 = vmatprep.mubr.bf16.mxu0 %v1570
  %3342 = vmatmul.mubr.bf16.gmra.mxu0 %v1569
  %v3343 = vpop.f32.mrf.mxu0
  %v3344 = vadd.f32 %v1854, %v3343
  %v3345 = vpop.f32.mrf.mxu0
  %v3346 = vadd.f32 %v1858, %v3345
  %v3347 = vpop.f32.mrf.mxu0
  %v3348 = vadd.f32 %v1854, %v3347
  %v3349 = vpop.f32.mrf.mxu0
  %v3350 = vadd.f32 %v1858, %v3349
  %3351 = vmatprep.mubr.bf16.mxu0 %v1574
  %3352 = vmatmul.mubr.bf16.gmra.mxu0 %v1573
  %v3353 = vpop.f32.mrf.mxu0
  %v3354 = vadd.f32 %v1854, %v3353
  %v3355 = vpop.f32.mrf.mxu0
  %v3356 = vadd.f32 %v1858, %v3355
  %v3357 = vpop.f32.mrf.mxu0
  %v3358 = vadd.f32 %v1854, %v3357
  %v3359 = vpop.f32.mrf.mxu0
  %v3360 = vadd.f32 %v1858, %v3359
  %3361 = vmatprep.mubr.bf16.mxu0 %v1578
  %3362 = vmatmul.mubr.bf16.gmra.mxu0 %v1577
  %v3363 = vpop.f32.mrf.mxu0
  %v3364 = vadd.f32 %v1854, %v3363
  %v3365 = vpop.f32.mrf.mxu0
  %v3366 = vadd.f32 %v1858, %v3365
  %v3367 = vpop.f32.mrf.mxu0
  %v3368 = vadd.f32 %v1854, %v3367
  %v3369 = vpop.f32.mrf.mxu0
  %v3370 = vadd.f32 %v1858, %v3369
  %3371 = vmatprep.mubr.bf16.mxu0 %v1582
  %3372 = vmatmul.mubr.bf16.gmra.mxu0 %v1581
  %v3373 = vpop.f32.mrf.mxu0
  %v3374 = vadd.f32 %v1854, %v3373
  %v3375 = vpop.f32.mrf.mxu0
  %v3376 = vadd.f32 %v1858, %v3375
  %v3377 = vpop.f32.mrf.mxu0
  %v3378 = vadd.f32 %v1854, %v3377
  %v3379 = vpop.f32.mrf.mxu0
  %v3380 = vadd.f32 %v1858, %v3379
  %3381 = vdwg.mxu0
  %3382 = vmatprep.subr.bf16.mxu0 %v2838
  %3383 = vmatpush1.bf16.msra.mxu0 %v2837
  %3384 = vmatprep.subr.bf16.mxu0 %v2830
  %3385 = vmatpush1.bf16.msra.mxu0 %v2829
  %3386 = vmatprep.subr.bf16.mxu0 %v2822
  %3387 = vmatpush1.bf16.msra.mxu0 %v2821
  %3388 = vmatprep.subr.bf16.mxu0 %v2814
  %3389 = vmatpush1.bf16.msra.mxu0 %v2813
  %3390 = vmatprep.subr.bf16.mxu0 %v2806
  %3391 = vmatpush1.bf16.msra.mxu0 %v2805
  %3392 = vmatprep.subr.bf16.mxu0 %v2798
  %3393 = vmatpush1.bf16.msra.mxu0 %v2797
  %3394 = vmatprep.subr.bf16.mxu0 %v2790
  %3395 = vmatpush1.bf16.msra.mxu0 %v2789
  %3396 = vmatprep.subr.bf16.mxu0 %v2782
  %3397 = vmatpush1.bf16.msra.mxu0 %v2781
  %3398 = vmatprep.subr.bf16.mxu0 %v2902
  %3399 = vmatpush2.bf16.msra.mxu0 %v2901
  %3400 = vmatprep.subr.bf16.mxu0 %v2894
  %3401 = vmatpush2.bf16.msra.mxu0 %v2893
  %3402 = vmatprep.subr.bf16.mxu0 %v2886
  %3403 = vmatpush2.bf16.msra.mxu0 %v2885
  %3404 = vmatprep.subr.bf16.mxu0 %v2878
  %3405 = vmatpush2.bf16.msra.mxu0 %v2877
  %3406 = vmatprep.subr.bf16.mxu0 %v2870
  %3407 = vmatpush2.bf16.msra.mxu0 %v2869
  %3408 = vmatprep.subr.bf16.mxu0 %v2862
  %3409 = vmatpush2.bf16.msra.mxu0 %v2861
  %3410 = vmatprep.subr.bf16.mxu0 %v2854
  %3411 = vmatpush2.bf16.msra.mxu0 %v2853
  %3412 = vmatprep.subr.bf16.mxu0 %v2846
  %3413 = vmatpush2.bf16.msra.mxu0 %v2845
  %3414 = vmatprep.mubr.bf16.mxu0 %v1572
  %3415 = vmatmul.mubr.bf16.gmra.mxu0 %v1571
  %v3416 = vpop.f32.mrf.mxu0
  %v3417 = vadd.f32 %v3344, %v3416
  %v3418 = vpop.f32.mrf.mxu0
  %v3419 = vadd.f32 %v3346, %v3418
  %v3420 = vpop.f32.mrf.mxu0
  %v3421 = vadd.f32 %v3348, %v3420
  %v3422 = vpop.f32.mrf.mxu0
  %v3423 = vadd.f32 %v3350, %v3422
  %3424 = vmatprep.mubr.bf16.mxu0 %v1576
  %3425 = vmatmul.mubr.bf16.gmra.mxu0 %v1575
  %v3426 = vpop.f32.mrf.mxu0
  %v3427 = vadd.f32 %v3354, %v3426
  %v3428 = vpop.f32.mrf.mxu0
  %v3429 = vadd.f32 %v3356, %v3428
  %v3430 = vpop.f32.mrf.mxu0
  %v3431 = vadd.f32 %v3358, %v3430
  %v3432 = vpop.f32.mrf.mxu0
  %v3433 = vadd.f32 %v3360, %v3432
  %3434 = vmatprep.mubr.bf16.mxu0 %v1580
  %3435 = vmatmul.mubr.bf16.gmra.mxu0 %v1579
  %v3436 = vpop.f32.mrf.mxu0
  %v3437 = vadd.f32 %v3364, %v3436
  %v3438 = vpop.f32.mrf.mxu0
  %v3439 = vadd.f32 %v3366, %v3438
  %v3440 = vpop.f32.mrf.mxu0
  %v3441 = vadd.f32 %v3368, %v3440
  %v3442 = vpop.f32.mrf.mxu0
  %v3443 = vadd.f32 %v3370, %v3442
  %3444 = vmatprep.mubr.bf16.mxu0 %v1584
  %3445 = vmatmul.mubr.bf16.gmra.mxu0 %v1583
  %v3446 = vpop.f32.mrf.mxu0
  %v3447 = vadd.f32 %v3374, %v3446
  %v3448 = vpop.f32.mrf.mxu0
  %v3449 = vadd.f32 %v3376, %v3448
  %v3450 = vpop.f32.mrf.mxu0
  %v3451 = vadd.f32 %v3378, %v3450
  %v3452 = vpop.f32.mrf.mxu0
  %v3453 = vadd.f32 %v3380, %v3452
  %3454 = vdwg.mxu0
  %3455 = vmatprep.subr.bf16.mxu0 %v2712
  %3456 = vmatpush1.bf16.msra.mxu0 %v2711
  %3457 = vmatprep.subr.bf16.mxu0 %v2704
  %3458 = vmatpush1.bf16.msra.mxu0 %v2703
  %3459 = vmatprep.subr.bf16.mxu0 %v2696
  %3460 = vmatpush1.bf16.msra.mxu0 %v2695
  %3461 = vmatprep.subr.bf16.mxu0 %v2688
  %3462 = vmatpush1.bf16.msra.mxu0 %v2687
  %3463 = vmatprep.subr.bf16.mxu0 %v2680
  %3464 = vmatpush1.bf16.msra.mxu0 %v2679
  %3465 = vmatprep.subr.bf16.mxu0 %v2672
  %3466 = vmatpush1.bf16.msra.mxu0 %v2671
  %3467 = vmatprep.subr.bf16.mxu0 %v2664
  %3468 = vmatpush1.bf16.msra.mxu0 %v2663
  %3469 = vmatprep.subr.bf16.mxu0 %v2656
  %3470 = vmatpush1.bf16.msra.mxu0 %v2655
  %3471 = vmatprep.subr.bf16.mxu0 %v2776
  %3472 = vmatpush2.bf16.msra.mxu0 %v2775
  %3473 = vmatprep.subr.bf16.mxu0 %v2768
  %3474 = vmatpush2.bf16.msra.mxu0 %v2767
  %3475 = vmatprep.subr.bf16.mxu0 %v2760
  %3476 = vmatpush2.bf16.msra.mxu0 %v2759
  %3477 = vmatprep.subr.bf16.mxu0 %v2752
  %3478 = vmatpush2.bf16.msra.mxu0 %v2751
  %3479 = vmatprep.subr.bf16.mxu0 %v2744
  %3480 = vmatpush2.bf16.msra.mxu0 %v2743
  %3481 = vmatprep.subr.bf16.mxu0 %v2736
  %3482 = vmatpush2.bf16.msra.mxu0 %v2735
  %3483 = vmatprep.subr.bf16.mxu0 %v2728
  %3484 = vmatpush2.bf16.msra.mxu0 %v2727
  %3485 = vmatprep.subr.bf16.mxu0 %v2720
  %3486 = vmatpush2.bf16.msra.mxu0 %v2719
  %3487 = vmatprep.mubr.bf16.mxu0 %v1570
  %3488 = vmatmul.mubr.bf16.gmra.mxu0 %v1569
  %v3489 = vpop.f32.mrf.mxu0
  %v3490 = vadd.f32 %v1862, %v3489
  %v3491 = vpop.f32.mrf.mxu0
  %v3492 = vadd.f32 %v1866, %v3491
  %v3493 = vpop.f32.mrf.mxu0
  %v3494 = vadd.f32 %v1862, %v3493
  %v3495 = vpop.f32.mrf.mxu0
  %v3496 = vadd.f32 %v1866, %v3495
  %3497 = vmatprep.mubr.bf16.mxu0 %v1574
  %3498 = vmatmul.mubr.bf16.gmra.mxu0 %v1573
  %v3499 = vpop.f32.mrf.mxu0
  %v3500 = vadd.f32 %v1862, %v3499
  %v3501 = vpop.f32.mrf.mxu0
  %v3502 = vadd.f32 %v1866, %v3501
  %v3503 = vpop.f32.mrf.mxu0
  %v3504 = vadd.f32 %v1862, %v3503
  %v3505 = vpop.f32.mrf.mxu0
  %v3506 = vadd.f32 %v1866, %v3505
  %3507 = vmatprep.mubr.bf16.mxu0 %v1578
  %3508 = vmatmul.mubr.bf16.gmra.mxu0 %v1577
  %v3509 = vpop.f32.mrf.mxu0
  %v3510 = vadd.f32 %v1862, %v3509
  %v3511 = vpop.f32.mrf.mxu0
  %v3512 = vadd.f32 %v1866, %v3511
  %v3513 = vpop.f32.mrf.mxu0
  %v3514 = vadd.f32 %v1862, %v3513
  %v3515 = vpop.f32.mrf.mxu0
  %v3516 = vadd.f32 %v1866, %v3515
  %3517 = vmatprep.mubr.bf16.mxu0 %v1582
  %3518 = vmatmul.mubr.bf16.gmra.mxu0 %v1581
  %v3519 = vpop.f32.mrf.mxu0
  %v3520 = vadd.f32 %v1862, %v3519
  %v3521 = vpop.f32.mrf.mxu0
  %v3522 = vadd.f32 %v1866, %v3521
  %v3523 = vpop.f32.mrf.mxu0
  %v3524 = vadd.f32 %v1862, %v3523
  %v3525 = vpop.f32.mrf.mxu0
  %v3526 = vadd.f32 %v1866, %v3525
  %3527 = vdwg.mxu0
  %3528 = vmatprep.subr.bf16.mxu0 %v2840
  %3529 = vmatpush1.bf16.msra.mxu0 %v2839
  %3530 = vmatprep.subr.bf16.mxu0 %v2832
  %3531 = vmatpush1.bf16.msra.mxu0 %v2831
  %3532 = vmatprep.subr.bf16.mxu0 %v2824
  %3533 = vmatpush1.bf16.msra.mxu0 %v2823
  %3534 = vmatprep.subr.bf16.mxu0 %v2816
  %3535 = vmatpush1.bf16.msra.mxu0 %v2815
  %3536 = vmatprep.subr.bf16.mxu0 %v2808
  %3537 = vmatpush1.bf16.msra.mxu0 %v2807
  %3538 = vmatprep.subr.bf16.mxu0 %v2800
  %3539 = vmatpush1.bf16.msra.mxu0 %v2799
  %3540 = vmatprep.subr.bf16.mxu0 %v2792
  %3541 = vmatpush1.bf16.msra.mxu0 %v2791
  %3542 = vmatprep.subr.bf16.mxu0 %v2784
  %3543 = vmatpush1.bf16.msra.mxu0 %v2783
  %3544 = vmatprep.subr.bf16.mxu0 %v2904
  %3545 = vmatpush2.bf16.msra.mxu0 %v2903
  %3546 = vmatprep.subr.bf16.mxu0 %v2896
  %3547 = vmatpush2.bf16.msra.mxu0 %v2895
  %3548 = vmatprep.subr.bf16.mxu0 %v2888
  %3549 = vmatpush2.bf16.msra.mxu0 %v2887
  %3550 = vmatprep.subr.bf16.mxu0 %v2880
  %3551 = vmatpush2.bf16.msra.mxu0 %v2879
  %3552 = vmatprep.subr.bf16.mxu0 %v2872
  %3553 = vmatpush2.bf16.msra.mxu0 %v2871
  %3554 = vmatprep.subr.bf16.mxu0 %v2864
  %3555 = vmatpush2.bf16.msra.mxu0 %v2863
  %3556 = vmatprep.subr.bf16.mxu0 %v2856
  %3557 = vmatpush2.bf16.msra.mxu0 %v2855
  %3558 = vmatprep.subr.bf16.mxu0 %v2848
  %3559 = vmatpush2.bf16.msra.mxu0 %v2847
  %3560 = vmatprep.mubr.bf16.mxu0 %v1572
  %3561 = vmatmul.mubr.bf16.gmra.mxu0 %v1571
  %v3562 = vpop.f32.mrf.mxu0
  %v3563 = vadd.f32 %v3490, %v3562
  %v3564 = vpop.f32.mrf.mxu0
  %v3565 = vadd.f32 %v3492, %v3564
  %v3566 = vpop.f32.mrf.mxu0
  %v3567 = vadd.f32 %v3494, %v3566
  %v3568 = vpop.f32.mrf.mxu0
  %v3569 = vadd.f32 %v3496, %v3568
  %3570 = vmatprep.mubr.bf16.mxu0 %v1576
  %3571 = vmatmul.mubr.bf16.gmra.mxu0 %v1575
  %v3572 = vpop.f32.mrf.mxu0
  %v3573 = vadd.f32 %v3500, %v3572
  %v3574 = vpop.f32.mrf.mxu0
  %v3575 = vadd.f32 %v3502, %v3574
  %v3576 = vpop.f32.mrf.mxu0
  %v3577 = vadd.f32 %v3504, %v3576
  %v3578 = vpop.f32.mrf.mxu0
  %v3579 = vadd.f32 %v3506, %v3578
  %3580 = vmatprep.mubr.bf16.mxu0 %v1580
  %3581 = vmatmul.mubr.bf16.gmra.mxu0 %v1579
  %v3582 = vpop.f32.mrf.mxu0
  %v3583 = vadd.f32 %v3510, %v3582
  %v3584 = vpop.f32.mrf.mxu0
  %v3585 = vadd.f32 %v3512, %v3584
  %v3586 = vpop.f32.mrf.mxu0
  %v3587 = vadd.f32 %v3514, %v3586
  %v3588 = vpop.f32.mrf.mxu0
  %v3589 = vadd.f32 %v3516, %v3588
  %3590 = vmatprep.mubr.bf16.mxu0 %v1584
  %3591 = vmatmul.mubr.bf16.gmra.mxu0 %v1583
  %v3592 = vpop.f32.mrf.mxu0
  %v3593 = vadd.f32 %v3520, %v3592
  %v3594 = vpop.f32.mrf.mxu0
  %v3595 = vadd.f32 %v3522, %v3594
  %v3596 = vpop.f32.mrf.mxu0
  %v3597 = vadd.f32 %v3524, %v3596
  %v3598 = vpop.f32.mrf.mxu0
  %v3599 = vadd.f32 %v3526, %v3598
  %3600 = vdwg.mxu0
  %3601 = vmatprep.subr.bf16.mxu0 %v2714
  %3602 = vmatpush1.bf16.msra.mxu0 %v2713
  %3603 = vmatprep.subr.bf16.mxu0 %v2706
  %3604 = vmatpush1.bf16.msra.mxu0 %v2705
  %3605 = vmatprep.subr.bf16.mxu0 %v2698
  %3606 = vmatpush1.bf16.msra.mxu0 %v2697
  %3607 = vmatprep.subr.bf16.mxu0 %v2690
  %3608 = vmatpush1.bf16.msra.mxu0 %v2689
  %3609 = vmatprep.subr.bf16.mxu0 %v2682
  %3610 = vmatpush1.bf16.msra.mxu0 %v2681
  %3611 = vmatprep.subr.bf16.mxu0 %v2674
  %3612 = vmatpush1.bf16.msra.mxu0 %v2673
  %3613 = vmatprep.subr.bf16.mxu0 %v2666
  %3614 = vmatpush1.bf16.msra.mxu0 %v2665
  %3615 = vmatprep.subr.bf16.mxu0 %v2658
  %3616 = vmatpush1.bf16.msra.mxu0 %v2657
  %3617 = vmatprep.subr.bf16.mxu0 %v2778
  %3618 = vmatpush2.bf16.msra.mxu0 %v2777
  %3619 = vmatprep.subr.bf16.mxu0 %v2770
  %3620 = vmatpush2.bf16.msra.mxu0 %v2769
  %3621 = vmatprep.subr.bf16.mxu0 %v2762
  %3622 = vmatpush2.bf16.msra.mxu0 %v2761
  %3623 = vmatprep.subr.bf16.mxu0 %v2754
  %3624 = vmatpush2.bf16.msra.mxu0 %v2753
  %3625 = vmatprep.subr.bf16.mxu0 %v2746
  %3626 = vmatpush2.bf16.msra.mxu0 %v2745
  %3627 = vmatprep.subr.bf16.mxu0 %v2738
  %3628 = vmatpush2.bf16.msra.mxu0 %v2737
  %3629 = vmatprep.subr.bf16.mxu0 %v2730
  %3630 = vmatpush2.bf16.msra.mxu0 %v2729
  %3631 = vmatprep.subr.bf16.mxu0 %v2722
  %3632 = vmatpush2.bf16.msra.mxu0 %v2721
  %3633 = vmatprep.mubr.bf16.mxu0 %v1570
  %3634 = vmatmul.mubr.bf16.gmra.mxu0 %v1569
  %v3635 = vpop.f32.mrf.mxu0
  %v3636 = vadd.f32 %v1870, %v3635
  %v3637 = vpop.f32.mrf.mxu0
  %v3638 = vadd.f32 %v1874, %v3637
  %v3639 = vpop.f32.mrf.mxu0
  %v3640 = vadd.f32 %v1870, %v3639
  %v3641 = vpop.f32.mrf.mxu0
  %v3642 = vadd.f32 %v1874, %v3641
  %3643 = vmatprep.mubr.bf16.mxu0 %v1574
  %3644 = vmatmul.mubr.bf16.gmra.mxu0 %v1573
  %v3645 = vpop.f32.mrf.mxu0
  %v3646 = vadd.f32 %v1870, %v3645
  %v3647 = vpop.f32.mrf.mxu0
  %v3648 = vadd.f32 %v1874, %v3647
  %v3649 = vpop.f32.mrf.mxu0
  %v3650 = vadd.f32 %v1870, %v3649
  %v3651 = vpop.f32.mrf.mxu0
  %v3652 = vadd.f32 %v1874, %v3651
  %3653 = vmatprep.mubr.bf16.mxu0 %v1578
  %3654 = vmatmul.mubr.bf16.gmra.mxu0 %v1577
  %v3655 = vpop.f32.mrf.mxu0
  %v3656 = vadd.f32 %v1870, %v3655
  %v3657 = vpop.f32.mrf.mxu0
  %v3658 = vadd.f32 %v1874, %v3657
  %v3659 = vpop.f32.mrf.mxu0
  %v3660 = vadd.f32 %v1870, %v3659
  %v3661 = vpop.f32.mrf.mxu0
  %v3662 = vadd.f32 %v1874, %v3661
  %3663 = vmatprep.mubr.bf16.mxu0 %v1582
  %3664 = vmatmul.mubr.bf16.gmra.mxu0 %v1581
  %v3665 = vpop.f32.mrf.mxu0
  %v3666 = vadd.f32 %v1870, %v3665
  %v3667 = vpop.f32.mrf.mxu0
  %v3668 = vadd.f32 %v1874, %v3667
  %v3669 = vpop.f32.mrf.mxu0
  %v3670 = vadd.f32 %v1870, %v3669
  %v3671 = vpop.f32.mrf.mxu0
  %v3672 = vadd.f32 %v1874, %v3671
  %3673 = vdwg.mxu0
  %3674 = vmatprep.subr.bf16.mxu0 %v2842
  %3675 = vmatpush1.bf16.msra.mxu0 %v2841
  %3676 = vmatprep.subr.bf16.mxu0 %v2834
  %3677 = vmatpush1.bf16.msra.mxu0 %v2833
  %3678 = vmatprep.subr.bf16.mxu0 %v2826
  %3679 = vmatpush1.bf16.msra.mxu0 %v2825
  %3680 = vmatprep.subr.bf16.mxu0 %v2818
  %3681 = vmatpush1.bf16.msra.mxu0 %v2817
  %3682 = vmatprep.subr.bf16.mxu0 %v2810
  %3683 = vmatpush1.bf16.msra.mxu0 %v2809
  %3684 = vmatprep.subr.bf16.mxu0 %v2802
  %3685 = vmatpush1.bf16.msra.mxu0 %v2801
  %3686 = vmatprep.subr.bf16.mxu0 %v2794
  %3687 = vmatpush1.bf16.msra.mxu0 %v2793
  %3688 = vmatprep.subr.bf16.mxu0 %v2786
  %3689 = vmatpush1.bf16.msra.mxu0 %v2785
  %3690 = vmatprep.subr.bf16.mxu0 %v2906
  %3691 = vmatpush2.bf16.msra.mxu0 %v2905
  %3692 = vmatprep.subr.bf16.mxu0 %v2898
  %3693 = vmatpush2.bf16.msra.mxu0 %v2897
  %3694 = vmatprep.subr.bf16.mxu0 %v2890
  %3695 = vmatpush2.bf16.msra.mxu0 %v2889
  %3696 = vmatprep.subr.bf16.mxu0 %v2882
  %3697 = vmatpush2.bf16.msra.mxu0 %v2881
  %3698 = vmatprep.subr.bf16.mxu0 %v2874
  %3699 = vmatpush2.bf16.msra.mxu0 %v2873
  %3700 = vmatprep.subr.bf16.mxu0 %v2866
  %3701 = vmatpush2.bf16.msra.mxu0 %v2865
  %3702 = vmatprep.subr.bf16.mxu0 %v2858
  %3703 = vmatpush2.bf16.msra.mxu0 %v2857
  %3704 = vmatprep.subr.bf16.mxu0 %v2850
  %3705 = vmatpush2.bf16.msra.mxu0 %v2849
  %3706 = vmatprep.mubr.bf16.mxu0 %v1572
  %3707 = vmatmul.mubr.bf16.gmra.mxu0 %v1571
  %v3708 = vpop.f32.mrf.mxu0
  %v3709 = vadd.f32 %v3636, %v3708
  %v3710 = vpop.f32.mrf.mxu0
  %v3711 = vadd.f32 %v3638, %v3710
  %v3712 = vpop.f32.mrf.mxu0
  %v3713 = vadd.f32 %v3640, %v3712
  %v3714 = vpop.f32.mrf.mxu0
  %v3715 = vadd.f32 %v3642, %v3714
  %3716 = vmatprep.mubr.bf16.mxu0 %v1576
  %3717 = vmatmul.mubr.bf16.gmra.mxu0 %v1575
  %v3718 = vpop.f32.mrf.mxu0
  %v3719 = vadd.f32 %v3646, %v3718
  %v3720 = vpop.f32.mrf.mxu0
  %v3721 = vadd.f32 %v3648, %v3720
  %v3722 = vpop.f32.mrf.mxu0
  %v3723 = vadd.f32 %v3650, %v3722
  %v3724 = vpop.f32.mrf.mxu0
  %v3725 = vadd.f32 %v3652, %v3724
  %3726 = vmatprep.mubr.bf16.mxu0 %v1580
  %3727 = vmatmul.mubr.bf16.gmra.mxu0 %v1579
  %v3728 = vpop.f32.mrf.mxu0
  %v3729 = vadd.f32 %v3656, %v3728
  %v3730 = vpop.f32.mrf.mxu0
  %v3731 = vadd.f32 %v3658, %v3730
  %v3732 = vpop.f32.mrf.mxu0
  %v3733 = vadd.f32 %v3660, %v3732
  %v3734 = vpop.f32.mrf.mxu0
  %v3735 = vadd.f32 %v3662, %v3734
  %3736 = vmatprep.mubr.bf16.mxu0 %v1584
  %3737 = vmatmul.mubr.bf16.gmra.mxu0 %v1583
  %v3738 = vpop.f32.mrf.mxu0
  %v3739 = vadd.f32 %v3666, %v3738
  %v3740 = vpop.f32.mrf.mxu0
  %v3741 = vadd.f32 %v3668, %v3740
  %v3742 = vpop.f32.mrf.mxu0
  %v3743 = vadd.f32 %v3670, %v3742
  %v3744 = vpop.f32.mrf.mxu0
  %v3745 = vadd.f32 %v3672, %v3744
  %3746 = vdwg.mxu0
  %v3747 = vmax.f32 %v3271, 0.0
  %v3748 = vmax.f32 %v3273, 0.0
  %v3749 = vmax.f32 %v3417, 0.0
  %v3750 = vmax.f32 %v3419, 0.0
  %v3751 = vmax.f32 %v3563, 0.0
  %v3752 = vmax.f32 %v3565, 0.0
  %v3753 = vmax.f32 %v3709, 0.0
  %v3754 = vmax.f32 %v3711, 0.0
  %v3755 = vmax.f32 %v3275, 0.0
  %v3756 = vmax.f32 %v3277, 0.0
  %v3757 = vmax.f32 %v3421, 0.0
  %v3758 = vmax.f32 %v3423, 0.0
  %v3759 = vmax.f32 %v3567, 0.0
  %v3760 = vmax.f32 %v3569, 0.0
  %v3761 = vmax.f32 %v3713, 0.0
  %v3762 = vmax.f32 %v3715, 0.0
  %v3763 = vmax.f32 %v3281, 0.0
  %v3764 = vmax.f32 %v3283, 0.0
  %v3765 = vmax.f32 %v3427, 0.0
  %v3766 = vmax.f32 %v3429, 0.0
  %v3767 = vmax.f32 %v3573, 0.0
  %v3768 = vmax.f32 %v3575, 0.0
  %v3769 = vmax.f32 %v3719, 0.0
  %v3770 = vmax.f32 %v3721, 0.0
  %v3771 = vmax.f32 %v3285, 0.0
  %v3772 = vmax.f32 %v3287, 0.0
  %v3773 = vmax.f32 %v3431, 0.0
  %v3774 = vmax.f32 %v3433, 0.0
  %v3775 = vmax.f32 %v3577, 0.0
  %v3776 = vmax.f32 %v3579, 0.0
  %v3777 = vmax.f32 %v3723, 0.0
  %v3778 = vmax.f32 %v3725, 0.0
  %v3779 = vmax.f32 %v3291, 0.0
  %v3780 = vmax.f32 %v3293, 0.0
  %v3781 = vmax.f32 %v3437, 0.0
  %v3782 = vmax.f32 %v3439, 0.0
  %v3783 = vmax.f32 %v3583, 0.0
  %v3784 = vmax.f32 %v3585, 0.0
  %v3785 = vmax.f32 %v3729, 0.0
  %v3786 = vmax.f32 %v3731, 0.0
  %v3787 = vmax.f32 %v3295, 0.0
  %v3788 = vmax.f32 %v3297, 0.0
  %v3789 = vmax.f32 %v3441, 0.0
  %v3790 = vmax.f32 %v3443, 0.0
  %v3791 = vmax.f32 %v3587, 0.0
  %v3792 = vmax.f32 %v3589, 0.0
  %v3793 = vmax.f32 %v3733, 0.0
  %v3794 = vmax.f32 %v3735, 0.0
  %v3795 = vmax.f32 %v3301, 0.0
  %v3796 = vmax.f32 %v3303, 0.0
  %v3797 = vmax.f32 %v3447, 0.0
  %v3798 = vmax.f32 %v3449, 0.0
  %v3799 = vmax.f32 %v3593, 0.0
  %v3800 = vmax.f32 %v3595, 0.0
  %v3801 = vmax.f32 %v3739, 0.0
  %v3802 = vmax.f32 %v3741, 0.0
  %v3803 = vmax.f32 %v3305, 0.0
  %v3804 = vmax.f32 %v3307, 0.0
  %v3805 = vmax.f32 %v3451, 0.0
  %v3806 = vmax.f32 %v3453, 0.0
  %v3807 = vmax.f32 %v3597, 0.0
  %v3808 = vmax.f32 %v3599, 0.0
  %v3809 = vmax.f32 %v3743, 0.0
  %v3810 = vmax.f32 %v3745, 0.0
  %v3811 = vpack.c.bf16 %v3755, %v3747
  %v3812 = vpack.c.bf16 %v3756, %v3748
  %v3813 = vpack.c.bf16 %v3757, %v3749
  %v3814 = vpack.c.bf16 %v3758, %v3750
  %v3815 = vpack.c.bf16 %v3759, %v3751
  %v3816 = vpack.c.bf16 %v3760, %v3752
  %v3817 = vpack.c.bf16 %v3761, %v3753
  %v3818 = vpack.c.bf16 %v3762, %v3754
  %v3819 = vpack.c.bf16 %v3771, %v3763
  %v3820 = vpack.c.bf16 %v3772, %v3764
  %v3821 = vpack.c.bf16 %v3773, %v3765
  %v3822 = vpack.c.bf16 %v3774, %v3766
  %v3823 = vpack.c.bf16 %v3775, %v3767
  %v3824 = vpack.c.bf16 %v3776, %v3768
  %v3825 = vpack.c.bf16 %v3777, %v3769
  %v3826 = vpack.c.bf16 %v3778, %v3770
  %v3827 = vpack.c.bf16 %v3787, %v3779
  %v3828 = vpack.c.bf16 %v3788, %v3780
  %v3829 = vpack.c.bf16 %v3789, %v3781
  %v3830 = vpack.c.bf16 %v3790, %v3782
  %v3831 = vpack.c.bf16 %v3791, %v3783
  %v3832 = vpack.c.bf16 %v3792, %v3784
  %v3833 = vpack.c.bf16 %v3793, %v3785
  %v3834 = vpack.c.bf16 %v3794, %v3786
  %v3835 = vpack.c.bf16 %v3803, %v3795
  %v3836 = vpack.c.bf16 %v3804, %v3796
  %v3837 = vpack.c.bf16 %v3805, %v3797
  %v3838 = vpack.c.bf16 %v3806, %v3798
  %v3839 = vpack.c.bf16 %v3807, %v3799
  %v3840 = vpack.c.bf16 %v3808, %v3800
  %v3841 = vpack.c.bf16 %v3809, %v3801
  %v3842 = vpack.c.bf16 %v3810, %v3802
  %v3843 = vld [vmem:[%s14] sm:$0xff]
  %v3844 = vld [vmem:[%s14 + $0x8] sm:$0xff]
  %v3845 = vld [vmem:[%s14 + $0x10] sm:$0xff]
  %v3846 = vld [vmem:[%s14 + $0x18] sm:$0xff]
  %v3847 = vld [vmem:[%s14 + $0x20] sm:$0xff]
  %v3848 = vld [vmem:[%s14 + $0x28] sm:$0xff]
  %v3849 = vld [vmem:[%s14 + $0x30] sm:$0xff]
  %v3850 = vld [vmem:[%s14 + $0x38] sm:$0xff]
  %v3851 = vld [vmem:[%s14 + $0x40] sm:$0xff]
  %v3852 = vld [vmem:[%s14 + $0x48] sm:$0xff]
  %v3853 = vld [vmem:[%s14 + $0x50] sm:$0xff]
  %v3854 = vld [vmem:[%s14 + $0x58] sm:$0xff]
  %v3855 = vld [vmem:[%s14 + $0x60] sm:$0xff]
  %v3856 = vld [vmem:[%s14 + $0x68] sm:$0xff]
  %v3857 = vld [vmem:[%s14 + $0x70] sm:$0xff]
  %v3858 = vld [vmem:[%s14 + $0x78] sm:$0xff]
  %v3859 = vld [vmem:[%s14 + $0x80] sm:$0xff]
  %v3860 = vld [vmem:[%s14 + $0x88] sm:$0xff]
  %v3861 = vld [vmem:[%s14 + $0x90] sm:$0xff]
  %v3862 = vld [vmem:[%s14 + $0x98] sm:$0xff]
  %v3863 = vld [vmem:[%s14 + $0xa0] sm:$0xff]
  %v3864 = vld [vmem:[%s14 + $0xa8] sm:$0xff]
  %v3865 = vld [vmem:[%s14 + $0xb0] sm:$0xff]
  %v3866 = vld [vmem:[%s14 + $0xb8] sm:$0xff]
  %v3867 = vld [vmem:[%s14 + $0xc0] sm:$0xff]
  %v3868 = vld [vmem:[%s14 + $0xc8] sm:$0xff]
  %v3869 = vld [vmem:[%s14 + $0xd0] sm:$0xff]
  %v3870 = vld [vmem:[%s14 + $0xd8] sm:$0xff]
  %v3871 = vld [vmem:[%s14 + $0xe0] sm:$0xff]
  %v3872 = vld [vmem:[%s14 + $0xe8] sm:$0xff]
  %v3873 = vld [vmem:[%s14 + $0xf0] sm:$0xff]
  %v3874 = vld [vmem:[%s14 + $0xf8] sm:$0xff]
  %v3875 = vld [vmem:[%s14 + $0x100] sm:$0xff]
  %v3876 = vld [vmem:[%s14 + $0x108] sm:$0xff]
  %v3877 = vld [vmem:[%s14 + $0x110] sm:$0xff]
  %v3878 = vld [vmem:[%s14 + $0x118] sm:$0xff]
  %v3879 = vld [vmem:[%s14 + $0x120] sm:$0xff]
  %v3880 = vld [vmem:[%s14 + $0x128] sm:$0xff]
  %v3881 = vld [vmem:[%s14 + $0x130] sm:$0xff]
  %v3882 = vld [vmem:[%s14 + $0x138] sm:$0xff]
  %v3883 = vld [vmem:[%s14 + $0x140] sm:$0xff]
  %v3884 = vld [vmem:[%s14 + $0x148] sm:$0xff]
  %v3885 = vld [vmem:[%s14 + $0x150] sm:$0xff]
  %v3886 = vld [vmem:[%s14 + $0x158] sm:$0xff]
  %v3887 = vld [vmem:[%s14 + $0x160] sm:$0xff]
  %v3888 = vld [vmem:[%s14 + $0x168] sm:$0xff]
  %v3889 = vld [vmem:[%s14 + $0x170] sm:$0xff]
  %v3890 = vld [vmem:[%s14 + $0x178] sm:$0xff]
  %v3891 = vld [vmem:[%s14 + $0x180] sm:$0xff]
  %v3892 = vld [vmem:[%s14 + $0x188] sm:$0xff]
  %v3893 = vld [vmem:[%s14 + $0x190] sm:$0xff]
  %v3894 = vld [vmem:[%s14 + $0x198] sm:$0xff]
  %v3895 = vld [vmem:[%s14 + $0x1a0] sm:$0xff]
  %v3896 = vld [vmem:[%s14 + $0x1a8] sm:$0xff]
  %v3897 = vld [vmem:[%s14 + $0x1b0] sm:$0xff]
  %v3898 = vld [vmem:[%s14 + $0x1b8] sm:$0xff]
  %v3899 = vld [vmem:[%s14 + $0x1c0] sm:$0xff]
  %v3900 = vld [vmem:[%s14 + $0x1c8] sm:$0xff]
  %v3901 = vld [vmem:[%s14 + $0x1d0] sm:$0xff]
  %v3902 = vld [vmem:[%s14 + $0x1d8] sm:$0xff]
  %v3903 = vld [vmem:[%s14 + $0x1e0] sm:$0xff]
  %v3904 = vld [vmem:[%s14 + $0x1e8] sm:$0xff]
  %v3905 = vld [vmem:[%s14 + $0x1f0] sm:$0xff]
  %v3906 = vld [vmem:[%s14 + $0x1f8] sm:$0xff]
  %v3907 = vld [vmem:[%s14 + $0x200] sm:$0xff]
  %v3908 = vld [vmem:[%s14 + $0x208] sm:$0xff]
  %v3909 = vld [vmem:[%s14 + $0x210] sm:$0xff]
  %v3910 = vld [vmem:[%s14 + $0x218] sm:$0xff]
  %v3911 = vld [vmem:[%s14 + $0x220] sm:$0xff]
  %v3912 = vld [vmem:[%s14 + $0x228] sm:$0xff]
  %v3913 = vld [vmem:[%s14 + $0x230] sm:$0xff]
  %v3914 = vld [vmem:[%s14 + $0x238] sm:$0xff]
  %v3915 = vld [vmem:[%s14 + $0x240] sm:$0xff]
  %v3916 = vld [vmem:[%s14 + $0x248] sm:$0xff]
  %v3917 = vld [vmem:[%s14 + $0x250] sm:$0xff]
  %v3918 = vld [vmem:[%s14 + $0x258] sm:$0xff]
  %v3919 = vld [vmem:[%s14 + $0x260] sm:$0xff]
  %v3920 = vld [vmem:[%s14 + $0x268] sm:$0xff]
  %v3921 = vld [vmem:[%s14 + $0x270] sm:$0xff]
  %v3922 = vld [vmem:[%s14 + $0x278] sm:$0xff]
  %v3923 = vld [vmem:[%s14 + $0x280] sm:$0xff]
  %v3924 = vld [vmem:[%s14 + $0x288] sm:$0xff]
  %v3925 = vld [vmem:[%s14 + $0x290] sm:$0xff]
  %v3926 = vld [vmem:[%s14 + $0x298] sm:$0xff]
  %v3927 = vld [vmem:[%s14 + $0x2a0] sm:$0xff]
  %v3928 = vld [vmem:[%s14 + $0x2a8] sm:$0xff]
  %v3929 = vld [vmem:[%s14 + $0x2b0] sm:$0xff]
  %v3930 = vld [vmem:[%s14 + $0x2b8] sm:$0xff]
  %v3931 = vld [vmem:[%s14 + $0x2c0] sm:$0xff]
  %v3932 = vld [vmem:[%s14 + $0x2c8] sm:$0xff]
  %v3933 = vld [vmem:[%s14 + $0x2d0] sm:$0xff]
  %v3934 = vld [vmem:[%s14 + $0x2d8] sm:$0xff]
  %v3935 = vld [vmem:[%s14 + $0x2e0] sm:$0xff]
  %v3936 = vld [vmem:[%s14 + $0x2e8] sm:$0xff]
  %v3937 = vld [vmem:[%s14 + $0x2f0] sm:$0xff]
  %v3938 = vld [vmem:[%s14 + $0x2f8] sm:$0xff]
  %v3939 = vld [vmem:[%s14 + $0x300] sm:$0xff]
  %v3940 = vld [vmem:[%s14 + $0x308] sm:$0xff]
  %v3941 = vld [vmem:[%s14 + $0x310] sm:$0xff]
  %v3942 = vld [vmem:[%s14 + $0x318] sm:$0xff]
  %v3943 = vld [vmem:[%s14 + $0x320] sm:$0xff]
  %v3944 = vld [vmem:[%s14 + $0x328] sm:$0xff]
  %v3945 = vld [vmem:[%s14 + $0x330] sm:$0xff]
  %v3946 = vld [vmem:[%s14 + $0x338] sm:$0xff]
  %v3947 = vld [vmem:[%s14 + $0x340] sm:$0xff]
  %v3948 = vld [vmem:[%s14 + $0x348] sm:$0xff]
  %v3949 = vld [vmem:[%s14 + $0x350] sm:$0xff]
  %v3950 = vld [vmem:[%s14 + $0x358] sm:$0xff]
  %v3951 = vld [vmem:[%s14 + $0x360] sm:$0xff]
  %v3952 = vld [vmem:[%s14 + $0x368] sm:$0xff]
  %v3953 = vld [vmem:[%s14 + $0x370] sm:$0xff]
  %v3954 = vld [vmem:[%s14 + $0x378] sm:$0xff]
  %v3955 = vld [vmem:[%s14 + $0x380] sm:$0xff]
  %v3956 = vld [vmem:[%s14 + $0x388] sm:$0xff]
  %v3957 = vld [vmem:[%s14 + $0x390] sm:$0xff]
  %v3958 = vld [vmem:[%s14 + $0x398] sm:$0xff]
  %v3959 = vld [vmem:[%s14 + $0x3a0] sm:$0xff]
  %v3960 = vld [vmem:[%s14 + $0x3a8] sm:$0xff]
  %v3961 = vld [vmem:[%s14 + $0x3b0] sm:$0xff]
  %v3962 = vld [vmem:[%s14 + $0x3b8] sm:$0xff]
  %v3963 = vld [vmem:[%s14 + $0x3c0] sm:$0xff]
  %v3964 = vld [vmem:[%s14 + $0x3c8] sm:$0xff]
  %v3965 = vld [vmem:[%s14 + $0x3d0] sm:$0xff]
  %v3966 = vld [vmem:[%s14 + $0x3d8] sm:$0xff]
  %v3967 = vld [vmem:[%s14 + $0x3e0] sm:$0xff]
  %v3968 = vld [vmem:[%s14 + $0x3e8] sm:$0xff]
  %v3969 = vld [vmem:[%s14 + $0x3f0] sm:$0xff]
  %v3970 = vld [vmem:[%s14 + $0x3f8] sm:$0xff]
  %v3971 = vld [vmem:[%s14 + $0x400] sm:$0xff]
  %v3972 = vld [vmem:[%s14 + $0x408] sm:$0xff]
  %v3973 = vld [vmem:[%s14 + $0x410] sm:$0xff]
  %v3974 = vld [vmem:[%s14 + $0x418] sm:$0xff]
  %v3975 = vld [vmem:[%s14 + $0x420] sm:$0xff]
  %v3976 = vld [vmem:[%s14 + $0x428] sm:$0xff]
  %v3977 = vld [vmem:[%s14 + $0x430] sm:$0xff]
  %v3978 = vld [vmem:[%s14 + $0x438] sm:$0xff]
  %v3979 = vld [vmem:[%s14 + $0x440] sm:$0xff]
  %v3980 = vld [vmem:[%s14 + $0x448] sm:$0xff]
  %v3981 = vld [vmem:[%s14 + $0x450] sm:$0xff]
  %v3982 = vld [vmem:[%s14 + $0x458] sm:$0xff]
  %v3983 = vld [vmem:[%s14 + $0x460] sm:$0xff]
  %v3984 = vld [vmem:[%s14 + $0x468] sm:$0xff]
  %v3985 = vld [vmem:[%s14 + $0x470] sm:$0xff]
  %v3986 = vld [vmem:[%s14 + $0x478] sm:$0xff]
  %v3987 = vld [vmem:[%s14 + $0x480] sm:$0xff]
  %v3988 = vld [vmem:[%s14 + $0x488] sm:$0xff]
  %v3989 = vld [vmem:[%s14 + $0x490] sm:$0xff]
  %v3990 = vld [vmem:[%s14 + $0x498] sm:$0xff]
  %v3991 = vld [vmem:[%s14 + $0x4a0] sm:$0xff]
  %v3992 = vld [vmem:[%s14 + $0x4a8] sm:$0xff]
  %v3993 = vld [vmem:[%s14 + $0x4b0] sm:$0xff]
  %v3994 = vld [vmem:[%s14 + $0x4b8] sm:$0xff]
  %v3995 = vld [vmem:[%s14 + $0x4c0] sm:$0xff]
  %v3996 = vld [vmem:[%s14 + $0x4c8] sm:$0xff]
  %v3997 = vld [vmem:[%s14 + $0x4d0] sm:$0xff]
  %v3998 = vld [vmem:[%s14 + $0x4d8] sm:$0xff]
  %v3999 = vld [vmem:[%s14 + $0x4e0] sm:$0xff]
  %v4000 = vld [vmem:[%s14 + $0x4e8] sm:$0xff]
  %v4001 = vld [vmem:[%s14 + $0x4f0] sm:$0xff]
  %v4002 = vld [vmem:[%s14 + $0x4f8] sm:$0xff]
  %v4003 = vld [vmem:[%s14 + $0x500] sm:$0xff]
  %v4004 = vld [vmem:[%s14 + $0x508] sm:$0xff]
  %v4005 = vld [vmem:[%s14 + $0x510] sm:$0xff]
  %v4006 = vld [vmem:[%s14 + $0x518] sm:$0xff]
  %v4007 = vld [vmem:[%s14 + $0x520] sm:$0xff]
  %v4008 = vld [vmem:[%s14 + $0x528] sm:$0xff]
  %v4009 = vld [vmem:[%s14 + $0x530] sm:$0xff]
  %v4010 = vld [vmem:[%s14 + $0x538] sm:$0xff]
  %v4011 = vld [vmem:[%s14 + $0x540] sm:$0xff]
  %v4012 = vld [vmem:[%s14 + $0x548] sm:$0xff]
  %v4013 = vld [vmem:[%s14 + $0x550] sm:$0xff]
  %v4014 = vld [vmem:[%s14 + $0x558] sm:$0xff]
  %v4015 = vld [vmem:[%s14 + $0x560] sm:$0xff]
  %v4016 = vld [vmem:[%s14 + $0x568] sm:$0xff]
  %v4017 = vld [vmem:[%s14 + $0x570] sm:$0xff]
  %v4018 = vld [vmem:[%s14 + $0x578] sm:$0xff]
  %v4019 = vld [vmem:[%s14 + $0x580] sm:$0xff]
  %v4020 = vld [vmem:[%s14 + $0x588] sm:$0xff]
  %v4021 = vld [vmem:[%s14 + $0x590] sm:$0xff]
  %v4022 = vld [vmem:[%s14 + $0x598] sm:$0xff]
  %v4023 = vld [vmem:[%s14 + $0x5a0] sm:$0xff]
  %v4024 = vld [vmem:[%s14 + $0x5a8] sm:$0xff]
  %v4025 = vld [vmem:[%s14 + $0x5b0] sm:$0xff]
  %v4026 = vld [vmem:[%s14 + $0x5b8] sm:$0xff]
  %v4027 = vld [vmem:[%s14 + $0x5c0] sm:$0xff]
  %v4028 = vld [vmem:[%s14 + $0x5c8] sm:$0xff]
  %v4029 = vld [vmem:[%s14 + $0x5d0] sm:$0xff]
  %v4030 = vld [vmem:[%s14 + $0x5d8] sm:$0xff]
  %v4031 = vld [vmem:[%s14 + $0x5e0] sm:$0xff]
  %v4032 = vld [vmem:[%s14 + $0x5e8] sm:$0xff]
  %v4033 = vld [vmem:[%s14 + $0x5f0] sm:$0xff]
  %v4034 = vld [vmem:[%s14 + $0x5f8] sm:$0xff]
  %v4035 = vld [vmem:[%s14 + $0x600] sm:$0xff]
  %v4036 = vld [vmem:[%s14 + $0x608] sm:$0xff]
  %v4037 = vld [vmem:[%s14 + $0x610] sm:$0xff]
  %v4038 = vld [vmem:[%s14 + $0x618] sm:$0xff]
  %v4039 = vld [vmem:[%s14 + $0x620] sm:$0xff]
  %v4040 = vld [vmem:[%s14 + $0x628] sm:$0xff]
  %v4041 = vld [vmem:[%s14 + $0x630] sm:$0xff]
  %v4042 = vld [vmem:[%s14 + $0x638] sm:$0xff]
  %v4043 = vld [vmem:[%s14 + $0x640] sm:$0xff]
  %v4044 = vld [vmem:[%s14 + $0x648] sm:$0xff]
  %v4045 = vld [vmem:[%s14 + $0x650] sm:$0xff]
  %v4046 = vld [vmem:[%s14 + $0x658] sm:$0xff]
  %v4047 = vld [vmem:[%s14 + $0x660] sm:$0xff]
  %v4048 = vld [vmem:[%s14 + $0x668] sm:$0xff]
  %v4049 = vld [vmem:[%s14 + $0x670] sm:$0xff]
  %v4050 = vld [vmem:[%s14 + $0x678] sm:$0xff]
  %v4051 = vld [vmem:[%s14 + $0x680] sm:$0xff]
  %v4052 = vld [vmem:[%s14 + $0x688] sm:$0xff]
  %v4053 = vld [vmem:[%s14 + $0x690] sm:$0xff]
  %v4054 = vld [vmem:[%s14 + $0x698] sm:$0xff]
  %v4055 = vld [vmem:[%s14 + $0x6a0] sm:$0xff]
  %v4056 = vld [vmem:[%s14 + $0x6a8] sm:$0xff]
  %v4057 = vld [vmem:[%s14 + $0x6b0] sm:$0xff]
  %v4058 = vld [vmem:[%s14 + $0x6b8] sm:$0xff]
  %v4059 = vld [vmem:[%s14 + $0x6c0] sm:$0xff]
  %v4060 = vld [vmem:[%s14 + $0x6c8] sm:$0xff]
  %v4061 = vld [vmem:[%s14 + $0x6d0] sm:$0xff]
  %v4062 = vld [vmem:[%s14 + $0x6d8] sm:$0xff]
  %v4063 = vld [vmem:[%s14 + $0x6e0] sm:$0xff]
  %v4064 = vld [vmem:[%s14 + $0x6e8] sm:$0xff]
  %v4065 = vld [vmem:[%s14 + $0x6f0] sm:$0xff]
  %v4066 = vld [vmem:[%s14 + $0x6f8] sm:$0xff]
  %v4067 = vld [vmem:[%s14 + $0x700] sm:$0xff]
  %v4068 = vld [vmem:[%s14 + $0x708] sm:$0xff]
  %v4069 = vld [vmem:[%s14 + $0x710] sm:$0xff]
  %v4070 = vld [vmem:[%s14 + $0x718] sm:$0xff]
  %v4071 = vld [vmem:[%s14 + $0x720] sm:$0xff]
  %v4072 = vld [vmem:[%s14 + $0x728] sm:$0xff]
  %v4073 = vld [vmem:[%s14 + $0x730] sm:$0xff]
  %v4074 = vld [vmem:[%s14 + $0x738] sm:$0xff]
  %v4075 = vld [vmem:[%s14 + $0x740] sm:$0xff]
  %v4076 = vld [vmem:[%s14 + $0x748] sm:$0xff]
  %v4077 = vld [vmem:[%s14 + $0x750] sm:$0xff]
  %v4078 = vld [vmem:[%s14 + $0x758] sm:$0xff]
  %v4079 = vld [vmem:[%s14 + $0x760] sm:$0xff]
  %v4080 = vld [vmem:[%s14 + $0x768] sm:$0xff]
  %v4081 = vld [vmem:[%s14 + $0x770] sm:$0xff]
  %v4082 = vld [vmem:[%s14 + $0x778] sm:$0xff]
  %v4083 = vld [vmem:[%s14 + $0x780] sm:$0xff]
  %v4084 = vld [vmem:[%s14 + $0x788] sm:$0xff]
  %v4085 = vld [vmem:[%s14 + $0x790] sm:$0xff]
  %v4086 = vld [vmem:[%s14 + $0x798] sm:$0xff]
  %v4087 = vld [vmem:[%s14 + $0x7a0] sm:$0xff]
  %v4088 = vld [vmem:[%s14 + $0x7a8] sm:$0xff]
  %v4089 = vld [vmem:[%s14 + $0x7b0] sm:$0xff]
  %v4090 = vld [vmem:[%s14 + $0x7b8] sm:$0xff]
  %v4091 = vld [vmem:[%s14 + $0x7c0] sm:$0xff]
  %v4092 = vld [vmem:[%s14 + $0x7c8] sm:$0xff]
  %v4093 = vld [vmem:[%s14 + $0x7d0] sm:$0xff]
  %v4094 = vld [vmem:[%s14 + $0x7d8] sm:$0xff]
  %v4095 = vld [vmem:[%s14 + $0x7e0] sm:$0xff]
  %v4096 = vld [vmem:[%s14 + $0x7e8] sm:$0xff]
  %v4097 = vld [vmem:[%s14 + $0x7f0] sm:$0xff]
  %v4098 = vld [vmem:[%s14 + $0x7f8] sm:$0xff]
  %v4099 = vld [vmem:[%s15] sm:$0xf]
  %v4101 = vlaneseq
  %v4102 = vshrl.u32 %v4101, 7
  %v4103 = vsub.s32 0, %v4102
  %v4104 = vrot.slane %v4099, %v4103
  %v4105 = vlaneseq
  %v4106 = vshrl.u32 %v4105, 7
  %v4107 = vsub.s32 1, %v4106
  %v4108 = vrot.slane %v4099, %v4107
  %v4109 = vlaneseq
  %v4110 = vshrl.u32 %v4109, 7
  %v4111 = vsub.s32 2, %v4110
  %v4112 = vrot.slane %v4099, %v4111
  %v4113 = vlaneseq
  %v4114 = vshrl.u32 %v4113, 7
  %v4115 = vsub.s32 3, %v4114
  %v4116 = vrot.slane %v4099, %v4115
  %v4377 = vunpack.c.l.b16 %v3843
  %v4378 = vunpack.c.h.b16 %v3843
  %v4379 = vunpack.c.l.b16 %v3844
  %v4380 = vunpack.c.h.b16 %v3844
  %v4381 = vunpack.c.l.b16 %v3845
  %v4382 = vunpack.c.h.b16 %v3845
  %v4383 = vunpack.c.l.b16 %v3846
  %v4384 = vunpack.c.h.b16 %v3846
  %v4385 = vunpack.c.l.b16 %v3847
  %v4386 = vunpack.c.h.b16 %v3847
  %v4387 = vunpack.c.l.b16 %v3848
  %v4388 = vunpack.c.h.b16 %v3848
  %v4389 = vunpack.c.l.b16 %v3849
  %v4390 = vunpack.c.h.b16 %v3849
  %v4391 = vunpack.c.l.b16 %v3850
  %v4392 = vunpack.c.h.b16 %v3850
  %v4393 = vunpack.c.l.b16 %v3851
  %v4394 = vunpack.c.h.b16 %v3851
  %v4395 = vunpack.c.l.b16 %v3852
  %v4396 = vunpack.c.h.b16 %v3852
  %v4397 = vunpack.c.l.b16 %v3853
  %v4398 = vunpack.c.h.b16 %v3853
  %v4399 = vunpack.c.l.b16 %v3854
  %v4400 = vunpack.c.h.b16 %v3854
  %v4401 = vunpack.c.l.b16 %v3855
  %v4402 = vunpack.c.h.b16 %v3855
  %v4403 = vunpack.c.l.b16 %v3856
  %v4404 = vunpack.c.h.b16 %v3856
  %v4405 = vunpack.c.l.b16 %v3857
  %v4406 = vunpack.c.h.b16 %v3857
  %v4407 = vunpack.c.l.b16 %v3858
  %v4408 = vunpack.c.h.b16 %v3858
  %v4409 = vunpack.c.l.b16 %v3859
  %v4410 = vunpack.c.h.b16 %v3859
  %v4411 = vunpack.c.l.b16 %v3860
  %v4412 = vunpack.c.h.b16 %v3860
  %v4413 = vunpack.c.l.b16 %v3861
  %v4414 = vunpack.c.h.b16 %v3861
  %v4415 = vunpack.c.l.b16 %v3862
  %v4416 = vunpack.c.h.b16 %v3862
  %v4417 = vunpack.c.l.b16 %v3863
  %v4418 = vunpack.c.h.b16 %v3863
  %v4419 = vunpack.c.l.b16 %v3864
  %v4420 = vunpack.c.h.b16 %v3864
  %v4421 = vunpack.c.l.b16 %v3865
  %v4422 = vunpack.c.h.b16 %v3865
  %v4423 = vunpack.c.l.b16 %v3866
  %v4424 = vunpack.c.h.b16 %v3866
  %v4425 = vunpack.c.l.b16 %v3867
  %v4426 = vunpack.c.h.b16 %v3867
  %v4427 = vunpack.c.l.b16 %v3868
  %v4428 = vunpack.c.h.b16 %v3868
  %v4429 = vunpack.c.l.b16 %v3869
  %v4430 = vunpack.c.h.b16 %v3869
  %v4431 = vunpack.c.l.b16 %v3870
  %v4432 = vunpack.c.h.b16 %v3870
  %v4433 = vunpack.c.l.b16 %v3871
  %v4434 = vunpack.c.h.b16 %v3871
  %v4435 = vunpack.c.l.b16 %v3872
  %v4436 = vunpack.c.h.b16 %v3872
  %v4437 = vunpack.c.l.b16 %v3873
  %v4438 = vunpack.c.h.b16 %v3873
  %v4439 = vunpack.c.l.b16 %v3874
  %v4440 = vunpack.c.h.b16 %v3874
  %v4441 = vunpack.c.l.b16 %v3875
  %v4442 = vunpack.c.h.b16 %v3875
  %v4443 = vunpack.c.l.b16 %v3876
  %v4444 = vunpack.c.h.b16 %v3876
  %v4445 = vunpack.c.l.b16 %v3877
  %v4446 = vunpack.c.h.b16 %v3877
  %v4447 = vunpack.c.l.b16 %v3878
  %v4448 = vunpack.c.h.b16 %v3878
  %v4449 = vunpack.c.l.b16 %v3879
  %v4450 = vunpack.c.h.b16 %v3879
  %v4451 = vunpack.c.l.b16 %v3880
  %v4452 = vunpack.c.h.b16 %v3880
  %v4453 = vunpack.c.l.b16 %v3881
  %v4454 = vunpack.c.h.b16 %v3881
  %v4455 = vunpack.c.l.b16 %v3882
  %v4456 = vunpack.c.h.b16 %v3882
  %v4457 = vunpack.c.l.b16 %v3883
  %v4458 = vunpack.c.h.b16 %v3883
  %v4459 = vunpack.c.l.b16 %v3884
  %v4460 = vunpack.c.h.b16 %v3884
  %v4461 = vunpack.c.l.b16 %v3885
  %v4462 = vunpack.c.h.b16 %v3885
  %v4463 = vunpack.c.l.b16 %v3886
  %v4464 = vunpack.c.h.b16 %v3886
  %v4465 = vunpack.c.l.b16 %v3887
  %v4466 = vunpack.c.h.b16 %v3887
  %v4467 = vunpack.c.l.b16 %v3888
  %v4468 = vunpack.c.h.b16 %v3888
  %v4469 = vunpack.c.l.b16 %v3889
  %v4470 = vunpack.c.h.b16 %v3889
  %v4471 = vunpack.c.l.b16 %v3890
  %v4472 = vunpack.c.h.b16 %v3890
  %v4473 = vunpack.c.l.b16 %v3891
  %v4474 = vunpack.c.h.b16 %v3891
  %v4475 = vunpack.c.l.b16 %v3892
  %v4476 = vunpack.c.h.b16 %v3892
  %v4477 = vunpack.c.l.b16 %v3893
  %v4478 = vunpack.c.h.b16 %v3893
  %v4479 = vunpack.c.l.b16 %v3894
  %v4480 = vunpack.c.h.b16 %v3894
  %v4481 = vunpack.c.l.b16 %v3895
  %v4482 = vunpack.c.h.b16 %v3895
  %v4483 = vunpack.c.l.b16 %v3896
  %v4484 = vunpack.c.h.b16 %v3896
  %v4485 = vunpack.c.l.b16 %v3897
  %v4486 = vunpack.c.h.b16 %v3897
  %v4487 = vunpack.c.l.b16 %v3898
  %v4488 = vunpack.c.h.b16 %v3898
  %v4489 = vunpack.c.l.b16 %v3899
  %v4490 = vunpack.c.h.b16 %v3899
  %v4491 = vunpack.c.l.b16 %v3900
  %v4492 = vunpack.c.h.b16 %v3900
  %v4493 = vunpack.c.l.b16 %v3901
  %v4494 = vunpack.c.h.b16 %v3901
  %v4495 = vunpack.c.l.b16 %v3902
  %v4496 = vunpack.c.h.b16 %v3902
  %v4497 = vunpack.c.l.b16 %v3903
  %v4498 = vunpack.c.h.b16 %v3903
  %v4499 = vunpack.c.l.b16 %v3904
  %v4500 = vunpack.c.h.b16 %v3904
  %v4501 = vunpack.c.l.b16 %v3905
  %v4502 = vunpack.c.h.b16 %v3905
  %v4503 = vunpack.c.l.b16 %v3906
  %v4504 = vunpack.c.h.b16 %v3906
  %v4505 = vunpack.c.l.b16 %v3907
  %v4506 = vunpack.c.h.b16 %v3907
  %v4507 = vunpack.c.l.b16 %v3908
  %v4508 = vunpack.c.h.b16 %v3908
  %v4509 = vunpack.c.l.b16 %v3909
  %v4510 = vunpack.c.h.b16 %v3909
  %v4511 = vunpack.c.l.b16 %v3910
  %v4512 = vunpack.c.h.b16 %v3910
  %v4513 = vunpack.c.l.b16 %v3911
  %v4514 = vunpack.c.h.b16 %v3911
  %v4515 = vunpack.c.l.b16 %v3912
  %v4516 = vunpack.c.h.b16 %v3912
  %v4517 = vunpack.c.l.b16 %v3913
  %v4518 = vunpack.c.h.b16 %v3913
  %v4519 = vunpack.c.l.b16 %v3914
  %v4520 = vunpack.c.h.b16 %v3914
  %v4521 = vunpack.c.l.b16 %v3915
  %v4522 = vunpack.c.h.b16 %v3915
  %v4523 = vunpack.c.l.b16 %v3916
  %v4524 = vunpack.c.h.b16 %v3916
  %v4525 = vunpack.c.l.b16 %v3917
  %v4526 = vunpack.c.h.b16 %v3917
  %v4527 = vunpack.c.l.b16 %v3918
  %v4528 = vunpack.c.h.b16 %v3918
  %v4529 = vunpack.c.l.b16 %v3919
  %v4530 = vunpack.c.h.b16 %v3919
  %v4531 = vunpack.c.l.b16 %v3920
  %v4532 = vunpack.c.h.b16 %v3920
  %v4533 = vunpack.c.l.b16 %v3921
  %v4534 = vunpack.c.h.b16 %v3921
  %v4535 = vunpack.c.l.b16 %v3922
  %v4536 = vunpack.c.h.b16 %v3922
  %v4537 = vunpack.c.l.b16 %v3923
  %v4538 = vunpack.c.h.b16 %v3923
  %v4539 = vunpack.c.l.b16 %v3924
  %v4540 = vunpack.c.h.b16 %v3924
  %v4541 = vunpack.c.l.b16 %v3925
  %v4542 = vunpack.c.h.b16 %v3925
  %v4543 = vunpack.c.l.b16 %v3926
  %v4544 = vunpack.c.h.b16 %v3926
  %v4545 = vunpack.c.l.b16 %v3927
  %v4546 = vunpack.c.h.b16 %v3927
  %v4547 = vunpack.c.l.b16 %v3928
  %v4548 = vunpack.c.h.b16 %v3928
  %v4549 = vunpack.c.l.b16 %v3929
  %v4550 = vunpack.c.h.b16 %v3929
  %v4551 = vunpack.c.l.b16 %v3930
  %v4552 = vunpack.c.h.b16 %v3930
  %v4553 = vunpack.c.l.b16 %v3931
  %v4554 = vunpack.c.h.b16 %v3931
  %v4555 = vunpack.c.l.b16 %v3932
  %v4556 = vunpack.c.h.b16 %v3932
  %v4557 = vunpack.c.l.b16 %v3933
  %v4558 = vunpack.c.h.b16 %v3933
  %v4559 = vunpack.c.l.b16 %v3934
  %v4560 = vunpack.c.h.b16 %v3934
  %v4561 = vunpack.c.l.b16 %v3935
  %v4562 = vunpack.c.h.b16 %v3935
  %v4563 = vunpack.c.l.b16 %v3936
  %v4564 = vunpack.c.h.b16 %v3936
  %v4565 = vunpack.c.l.b16 %v3937
  %v4566 = vunpack.c.h.b16 %v3937
  %v4567 = vunpack.c.l.b16 %v3938
  %v4568 = vunpack.c.h.b16 %v3938
  %v4569 = vunpack.c.l.b16 %v3939
  %v4570 = vunpack.c.h.b16 %v3939
  %v4571 = vunpack.c.l.b16 %v3940
  %v4572 = vunpack.c.h.b16 %v3940
  %v4573 = vunpack.c.l.b16 %v3941
  %v4574 = vunpack.c.h.b16 %v3941
  %v4575 = vunpack.c.l.b16 %v3942
  %v4576 = vunpack.c.h.b16 %v3942
  %v4577 = vunpack.c.l.b16 %v3943
  %v4578 = vunpack.c.h.b16 %v3943
  %v4579 = vunpack.c.l.b16 %v3944
  %v4580 = vunpack.c.h.b16 %v3944
  %v4581 = vunpack.c.l.b16 %v3945
  %v4582 = vunpack.c.h.b16 %v3945
  %v4583 = vunpack.c.l.b16 %v3946
  %v4584 = vunpack.c.h.b16 %v3946
  %v4585 = vunpack.c.l.b16 %v3947
  %v4586 = vunpack.c.h.b16 %v3947
  %v4587 = vunpack.c.l.b16 %v3948
  %v4588 = vunpack.c.h.b16 %v3948
  %v4589 = vunpack.c.l.b16 %v3949
  %v4590 = vunpack.c.h.b16 %v3949
  %v4591 = vunpack.c.l.b16 %v3950
  %v4592 = vunpack.c.h.b16 %v3950
  %v4593 = vunpack.c.l.b16 %v3951
  %v4594 = vunpack.c.h.b16 %v3951
  %v4595 = vunpack.c.l.b16 %v3952
  %v4596 = vunpack.c.h.b16 %v3952
  %v4597 = vunpack.c.l.b16 %v3953
  %v4598 = vunpack.c.h.b16 %v3953
  %v4599 = vunpack.c.l.b16 %v3954
  %v4600 = vunpack.c.h.b16 %v3954
  %v4601 = vunpack.c.l.b16 %v3955
  %v4602 = vunpack.c.h.b16 %v3955
  %v4603 = vunpack.c.l.b16 %v3956
  %v4604 = vunpack.c.h.b16 %v3956
  %v4605 = vunpack.c.l.b16 %v3957
  %v4606 = vunpack.c.h.b16 %v3957
  %v4607 = vunpack.c.l.b16 %v3958
  %v4608 = vunpack.c.h.b16 %v3958
  %v4609 = vunpack.c.l.b16 %v3959
  %v4610 = vunpack.c.h.b16 %v3959
  %v4611 = vunpack.c.l.b16 %v3960
  %v4612 = vunpack.c.h.b16 %v3960
  %v4613 = vunpack.c.l.b16 %v3961
  %v4614 = vunpack.c.h.b16 %v3961
  %v4615 = vunpack.c.l.b16 %v3962
  %v4616 = vunpack.c.h.b16 %v3962
  %v4617 = vunpack.c.l.b16 %v3963
  %v4618 = vunpack.c.h.b16 %v3963
  %v4619 = vunpack.c.l.b16 %v3964
  %v4620 = vunpack.c.h.b16 %v3964
  %v4621 = vunpack.c.l.b16 %v3965
  %v4622 = vunpack.c.h.b16 %v3965
  %v4623 = vunpack.c.l.b16 %v3966
  %v4624 = vunpack.c.h.b16 %v3966
  %v4625 = vunpack.c.l.b16 %v3967
  %v4626 = vunpack.c.h.b16 %v3967
  %v4627 = vunpack.c.l.b16 %v3968
  %v4628 = vunpack.c.h.b16 %v3968
  %v4629 = vunpack.c.l.b16 %v3969
  %v4630 = vunpack.c.h.b16 %v3969
  %v4631 = vunpack.c.l.b16 %v3970
  %v4632 = vunpack.c.h.b16 %v3970
  %v4633 = vunpack.c.l.b16 %v3971
  %v4634 = vunpack.c.h.b16 %v3971
  %v4635 = vunpack.c.l.b16 %v3972
  %v4636 = vunpack.c.h.b16 %v3972
  %v4637 = vunpack.c.l.b16 %v3973
  %v4638 = vunpack.c.h.b16 %v3973
  %v4639 = vunpack.c.l.b16 %v3974
  %v4640 = vunpack.c.h.b16 %v3974
  %v4641 = vunpack.c.l.b16 %v3975
  %v4642 = vunpack.c.h.b16 %v3975
  %v4643 = vunpack.c.l.b16 %v3976
  %v4644 = vunpack.c.h.b16 %v3976
  %v4645 = vunpack.c.l.b16 %v3977
  %v4646 = vunpack.c.h.b16 %v3977
  %v4647 = vunpack.c.l.b16 %v3978
  %v4648 = vunpack.c.h.b16 %v3978
  %v4649 = vunpack.c.l.b16 %v3979
  %v4650 = vunpack.c.h.b16 %v3979
  %v4651 = vunpack.c.l.b16 %v3980
  %v4652 = vunpack.c.h.b16 %v3980
  %v4653 = vunpack.c.l.b16 %v3981
  %v4654 = vunpack.c.h.b16 %v3981
  %v4655 = vunpack.c.l.b16 %v3982
  %v4656 = vunpack.c.h.b16 %v3982
  %v4657 = vunpack.c.l.b16 %v3983
  %v4658 = vunpack.c.h.b16 %v3983
  %v4659 = vunpack.c.l.b16 %v3984
  %v4660 = vunpack.c.h.b16 %v3984
  %v4661 = vunpack.c.l.b16 %v3985
  %v4662 = vunpack.c.h.b16 %v3985
  %v4663 = vunpack.c.l.b16 %v3986
  %v4664 = vunpack.c.h.b16 %v3986
  %v4665 = vunpack.c.l.b16 %v3987
  %v4666 = vunpack.c.h.b16 %v3987
  %v4667 = vunpack.c.l.b16 %v3988
  %v4668 = vunpack.c.h.b16 %v3988
  %v4669 = vunpack.c.l.b16 %v3989
  %v4670 = vunpack.c.h.b16 %v3989
  %v4671 = vunpack.c.l.b16 %v3990
  %v4672 = vunpack.c.h.b16 %v3990
  %v4673 = vunpack.c.l.b16 %v3991
  %v4674 = vunpack.c.h.b16 %v3991
  %v4675 = vunpack.c.l.b16 %v3992
  %v4676 = vunpack.c.h.b16 %v3992
  %v4677 = vunpack.c.l.b16 %v3993
  %v4678 = vunpack.c.h.b16 %v3993
  %v4679 = vunpack.c.l.b16 %v3994
  %v4680 = vunpack.c.h.b16 %v3994
  %v4681 = vunpack.c.l.b16 %v3995
  %v4682 = vunpack.c.h.b16 %v3995
  %v4683 = vunpack.c.l.b16 %v3996
  %v4684 = vunpack.c.h.b16 %v3996
  %v4685 = vunpack.c.l.b16 %v3997
  %v4686 = vunpack.c.h.b16 %v3997
  %v4687 = vunpack.c.l.b16 %v3998
  %v4688 = vunpack.c.h.b16 %v3998
  %v4689 = vunpack.c.l.b16 %v3999
  %v4690 = vunpack.c.h.b16 %v3999
  %v4691 = vunpack.c.l.b16 %v4000
  %v4692 = vunpack.c.h.b16 %v4000
  %v4693 = vunpack.c.l.b16 %v4001
  %v4694 = vunpack.c.h.b16 %v4001
  %v4695 = vunpack.c.l.b16 %v4002
  %v4696 = vunpack.c.h.b16 %v4002
  %v4697 = vunpack.c.l.b16 %v4003
  %v4698 = vunpack.c.h.b16 %v4003
  %v4699 = vunpack.c.l.b16 %v4004
  %v4700 = vunpack.c.h.b16 %v4004
  %v4701 = vunpack.c.l.b16 %v4005
  %v4702 = vunpack.c.h.b16 %v4005
  %v4703 = vunpack.c.l.b16 %v4006
  %v4704 = vunpack.c.h.b16 %v4006
  %v4705 = vunpack.c.l.b16 %v4007
  %v4706 = vunpack.c.h.b16 %v4007
  %v4707 = vunpack.c.l.b16 %v4008
  %v4708 = vunpack.c.h.b16 %v4008
  %v4709 = vunpack.c.l.b16 %v4009
  %v4710 = vunpack.c.h.b16 %v4009
  %v4711 = vunpack.c.l.b16 %v4010
  %v4712 = vunpack.c.h.b16 %v4010
  %v4713 = vunpack.c.l.b16 %v4011
  %v4714 = vunpack.c.h.b16 %v4011
  %v4715 = vunpack.c.l.b16 %v4012
  %v4716 = vunpack.c.h.b16 %v4012
  %v4717 = vunpack.c.l.b16 %v4013
  %v4718 = vunpack.c.h.b16 %v4013
  %v4719 = vunpack.c.l.b16 %v4014
  %v4720 = vunpack.c.h.b16 %v4014
  %v4721 = vunpack.c.l.b16 %v4015
  %v4722 = vunpack.c.h.b16 %v4015
  %v4723 = vunpack.c.l.b16 %v4016
  %v4724 = vunpack.c.h.b16 %v4016
  %v4725 = vunpack.c.l.b16 %v4017
  %v4726 = vunpack.c.h.b16 %v4017
  %v4727 = vunpack.c.l.b16 %v4018
  %v4728 = vunpack.c.h.b16 %v4018
  %v4729 = vunpack.c.l.b16 %v4019
  %v4730 = vunpack.c.h.b16 %v4019
  %v4731 = vunpack.c.l.b16 %v4020
  %v4732 = vunpack.c.h.b16 %v4020
  %v4733 = vunpack.c.l.b16 %v4021
  %v4734 = vunpack.c.h.b16 %v4021
  %v4735 = vunpack.c.l.b16 %v4022
  %v4736 = vunpack.c.h.b16 %v4022
  %v4737 = vunpack.c.l.b16 %v4023
  %v4738 = vunpack.c.h.b16 %v4023
  %v4739 = vunpack.c.l.b16 %v4024
  %v4740 = vunpack.c.h.b16 %v4024
  %v4741 = vunpack.c.l.b16 %v4025
  %v4742 = vunpack.c.h.b16 %v4025
  %v4743 = vunpack.c.l.b16 %v4026
  %v4744 = vunpack.c.h.b16 %v4026
  %v4745 = vunpack.c.l.b16 %v4027
  %v4746 = vunpack.c.h.b16 %v4027
  %v4747 = vunpack.c.l.b16 %v4028
  %v4748 = vunpack.c.h.b16 %v4028
  %v4749 = vunpack.c.l.b16 %v4029
  %v4750 = vunpack.c.h.b16 %v4029
  %v4751 = vunpack.c.l.b16 %v4030
  %v4752 = vunpack.c.h.b16 %v4030
  %v4753 = vunpack.c.l.b16 %v4031
  %v4754 = vunpack.c.h.b16 %v4031
  %v4755 = vunpack.c.l.b16 %v4032
  %v4756 = vunpack.c.h.b16 %v4032
  %v4757 = vunpack.c.l.b16 %v4033
  %v4758 = vunpack.c.h.b16 %v4033
  %v4759 = vunpack.c.l.b16 %v4034
  %v4760 = vunpack.c.h.b16 %v4034
  %v4761 = vunpack.c.l.b16 %v4035
  %v4762 = vunpack.c.h.b16 %v4035
  %v4763 = vunpack.c.l.b16 %v4036
  %v4764 = vunpack.c.h.b16 %v4036
  %v4765 = vunpack.c.l.b16 %v4037
  %v4766 = vunpack.c.h.b16 %v4037
  %v4767 = vunpack.c.l.b16 %v4038
  %v4768 = vunpack.c.h.b16 %v4038
  %v4769 = vunpack.c.l.b16 %v4039
  %v4770 = vunpack.c.h.b16 %v4039
  %v4771 = vunpack.c.l.b16 %v4040
  %v4772 = vunpack.c.h.b16 %v4040
  %v4773 = vunpack.c.l.b16 %v4041
  %v4774 = vunpack.c.h.b16 %v4041
  %v4775 = vunpack.c.l.b16 %v4042
  %v4776 = vunpack.c.h.b16 %v4042
  %v4777 = vunpack.c.l.b16 %v4043
  %v4778 = vunpack.c.h.b16 %v4043
  %v4779 = vunpack.c.l.b16 %v4044
  %v4780 = vunpack.c.h.b16 %v4044
  %v4781 = vunpack.c.l.b16 %v4045
  %v4782 = vunpack.c.h.b16 %v4045
  %v4783 = vunpack.c.l.b16 %v4046
  %v4784 = vunpack.c.h.b16 %v4046
  %v4785 = vunpack.c.l.b16 %v4047
  %v4786 = vunpack.c.h.b16 %v4047
  %v4787 = vunpack.c.l.b16 %v4048
  %v4788 = vunpack.c.h.b16 %v4048
  %v4789 = vunpack.c.l.b16 %v4049
  %v4790 = vunpack.c.h.b16 %v4049
  %v4791 = vunpack.c.l.b16 %v4050
  %v4792 = vunpack.c.h.b16 %v4050
  %v4793 = vunpack.c.l.b16 %v4051
  %v4794 = vunpack.c.h.b16 %v4051
  %v4795 = vunpack.c.l.b16 %v4052
  %v4796 = vunpack.c.h.b16 %v4052
  %v4797 = vunpack.c.l.b16 %v4053
  %v4798 = vunpack.c.h.b16 %v4053
  %v4799 = vunpack.c.l.b16 %v4054
  %v4800 = vunpack.c.h.b16 %v4054
  %v4801 = vunpack.c.l.b16 %v4055
  %v4802 = vunpack.c.h.b16 %v4055
  %v4803 = vunpack.c.l.b16 %v4056
  %v4804 = vunpack.c.h.b16 %v4056
  %v4805 = vunpack.c.l.b16 %v4057
  %v4806 = vunpack.c.h.b16 %v4057
  %v4807 = vunpack.c.l.b16 %v4058
  %v4808 = vunpack.c.h.b16 %v4058
  %v4809 = vunpack.c.l.b16 %v4059
  %v4810 = vunpack.c.h.b16 %v4059
  %v4811 = vunpack.c.l.b16 %v4060
  %v4812 = vunpack.c.h.b16 %v4060
  %v4813 = vunpack.c.l.b16 %v4061
  %v4814 = vunpack.c.h.b16 %v4061
  %v4815 = vunpack.c.l.b16 %v4062
  %v4816 = vunpack.c.h.b16 %v4062
  %v4817 = vunpack.c.l.b16 %v4063
  %v4818 = vunpack.c.h.b16 %v4063
  %v4819 = vunpack.c.l.b16 %v4064
  %v4820 = vunpack.c.h.b16 %v4064
  %v4821 = vunpack.c.l.b16 %v4065
  %v4822 = vunpack.c.h.b16 %v4065
  %v4823 = vunpack.c.l.b16 %v4066
  %v4824 = vunpack.c.h.b16 %v4066
  %v4825 = vunpack.c.l.b16 %v4067
  %v4826 = vunpack.c.h.b16 %v4067
  %v4827 = vunpack.c.l.b16 %v4068
  %v4828 = vunpack.c.h.b16 %v4068
  %v4829 = vunpack.c.l.b16 %v4069
  %v4830 = vunpack.c.h.b16 %v4069
  %v4831 = vunpack.c.l.b16 %v4070
  %v4832 = vunpack.c.h.b16 %v4070
  %v4833 = vunpack.c.l.b16 %v4071
  %v4834 = vunpack.c.h.b16 %v4071
  %v4835 = vunpack.c.l.b16 %v4072
  %v4836 = vunpack.c.h.b16 %v4072
  %v4837 = vunpack.c.l.b16 %v4073
  %v4838 = vunpack.c.h.b16 %v4073
  %v4839 = vunpack.c.l.b16 %v4074
  %v4840 = vunpack.c.h.b16 %v4074
  %v4841 = vunpack.c.l.b16 %v4075
  %v4842 = vunpack.c.h.b16 %v4075
  %v4843 = vunpack.c.l.b16 %v4076
  %v4844 = vunpack.c.h.b16 %v4076
  %v4845 = vunpack.c.l.b16 %v4077
  %v4846 = vunpack.c.h.b16 %v4077
  %v4847 = vunpack.c.l.b16 %v4078
  %v4848 = vunpack.c.h.b16 %v4078
  %v4849 = vunpack.c.l.b16 %v4079
  %v4850 = vunpack.c.h.b16 %v4079
  %v4851 = vunpack.c.l.b16 %v4080
  %v4852 = vunpack.c.h.b16 %v4080
  %v4853 = vunpack.c.l.b16 %v4081
  %v4854 = vunpack.c.h.b16 %v4081
  %v4855 = vunpack.c.l.b16 %v4082
  %v4856 = vunpack.c.h.b16 %v4082
  %v4857 = vunpack.c.l.b16 %v4083
  %v4858 = vunpack.c.h.b16 %v4083
  %v4859 = vunpack.c.l.b16 %v4084
  %v4860 = vunpack.c.h.b16 %v4084
  %v4861 = vunpack.c.l.b16 %v4085
  %v4862 = vunpack.c.h.b16 %v4085
  %v4863 = vunpack.c.l.b16 %v4086
  %v4864 = vunpack.c.h.b16 %v4086
  %v4865 = vunpack.c.l.b16 %v4087
  %v4866 = vunpack.c.h.b16 %v4087
  %v4867 = vunpack.c.l.b16 %v4088
  %v4868 = vunpack.c.h.b16 %v4088
  %v4869 = vunpack.c.l.b16 %v4089
  %v4870 = vunpack.c.h.b16 %v4089
  %v4871 = vunpack.c.l.b16 %v4090
  %v4872 = vunpack.c.h.b16 %v4090
  %v4873 = vunpack.c.l.b16 %v4091
  %v4874 = vunpack.c.h.b16 %v4091
  %v4875 = vunpack.c.l.b16 %v4092
  %v4876 = vunpack.c.h.b16 %v4092
  %v4877 = vunpack.c.l.b16 %v4093
  %v4878 = vunpack.c.h.b16 %v4093
  %v4879 = vunpack.c.l.b16 %v4094
  %v4880 = vunpack.c.h.b16 %v4094
  %v4881 = vunpack.c.l.b16 %v4095
  %v4882 = vunpack.c.h.b16 %v4095
  %v4883 = vunpack.c.l.b16 %v4096
  %v4884 = vunpack.c.h.b16 %v4096
  %v4885 = vunpack.c.l.b16 %v4097
  %v4886 = vunpack.c.h.b16 %v4097
  %v4887 = vunpack.c.l.b16 %v4098
  %v4888 = vunpack.c.h.b16 %v4098
  %v4889 = vpack.c.b16 %v4381, %v4377
  %v4890 = vpack.c.b16 %v4382, %v4378
  %v4891 = vpack.c.b16 %v4383, %v4379
  %v4892 = vpack.c.b16 %v4384, %v4380
  %v4893 = vpack.c.b16 %v4389, %v4385
  %v4894 = vpack.c.b16 %v4390, %v4386
  %v4895 = vpack.c.b16 %v4391, %v4387
  %v4896 = vpack.c.b16 %v4392, %v4388
  %v4897 = vpack.c.b16 %v4397, %v4393
  %v4898 = vpack.c.b16 %v4398, %v4394
  %v4899 = vpack.c.b16 %v4399, %v4395
  %v4900 = vpack.c.b16 %v4400, %v4396
  %v4901 = vpack.c.b16 %v4405, %v4401
  %v4902 = vpack.c.b16 %v4406, %v4402
  %v4903 = vpack.c.b16 %v4407, %v4403
  %v4904 = vpack.c.b16 %v4408, %v4404
  %v4905 = vpack.c.b16 %v4413, %v4409
  %v4906 = vpack.c.b16 %v4414, %v4410
  %v4907 = vpack.c.b16 %v4415, %v4411
  %v4908 = vpack.c.b16 %v4416, %v4412
  %v4909 = vpack.c.b16 %v4421, %v4417
  %v4910 = vpack.c.b16 %v4422, %v4418
  %v4911 = vpack.c.b16 %v4423, %v4419
  %v4912 = vpack.c.b16 %v4424, %v4420
  %v4913 = vpack.c.b16 %v4429, %v4425
  %v4914 = vpack.c.b16 %v4430, %v4426
  %v4915 = vpack.c.b16 %v4431, %v4427
  %v4916 = vpack.c.b16 %v4432, %v4428
  %v4917 = vpack.c.b16 %v4437, %v4433
  %v4918 = vpack.c.b16 %v4438, %v4434
  %v4919 = vpack.c.b16 %v4439, %v4435
  %v4920 = vpack.c.b16 %v4440, %v4436
  %v4921 = vpack.c.b16 %v4445, %v4441
  %v4922 = vpack.c.b16 %v4446, %v4442
  %v4923 = vpack.c.b16 %v4447, %v4443
  %v4924 = vpack.c.b16 %v4448, %v4444
  %v4925 = vpack.c.b16 %v4453, %v4449
  %v4926 = vpack.c.b16 %v4454, %v4450
  %v4927 = vpack.c.b16 %v4455, %v4451
  %v4928 = vpack.c.b16 %v4456, %v4452
  %v4929 = vpack.c.b16 %v4461, %v4457
  %v4930 = vpack.c.b16 %v4462, %v4458
  %v4931 = vpack.c.b16 %v4463, %v4459
  %v4932 = vpack.c.b16 %v4464, %v4460
  %v4933 = vpack.c.b16 %v4469, %v4465
  %v4934 = vpack.c.b16 %v4470, %v4466
  %v4935 = vpack.c.b16 %v4471, %v4467
  %v4936 = vpack.c.b16 %v4472, %v4468
  %v4937 = vpack.c.b16 %v4477, %v4473
  %v4938 = vpack.c.b16 %v4478, %v4474
  %v4939 = vpack.c.b16 %v4479, %v4475
  %v4940 = vpack.c.b16 %v4480, %v4476
  %v4941 = vpack.c.b16 %v4485, %v4481
  %v4942 = vpack.c.b16 %v4486, %v4482
  %v4943 = vpack.c.b16 %v4487, %v4483
  %v4944 = vpack.c.b16 %v4488, %v4484
  %v4945 = vpack.c.b16 %v4493, %v4489
  %v4946 = vpack.c.b16 %v4494, %v4490
  %v4947 = vpack.c.b16 %v4495, %v4491
  %v4948 = vpack.c.b16 %v4496, %v4492
  %v4949 = vpack.c.b16 %v4501, %v4497
  %v4950 = vpack.c.b16 %v4502, %v4498
  %v4951 = vpack.c.b16 %v4503, %v4499
  %v4952 = vpack.c.b16 %v4504, %v4500
  %v4953 = vpack.c.b16 %v4509, %v4505
  %v4954 = vpack.c.b16 %v4510, %v4506
  %v4955 = vpack.c.b16 %v4511, %v4507
  %v4956 = vpack.c.b16 %v4512, %v4508
  %v4957 = vpack.c.b16 %v4517, %v4513
  %v4958 = vpack.c.b16 %v4518, %v4514
  %v4959 = vpack.c.b16 %v4519, %v4515
  %v4960 = vpack.c.b16 %v4520, %v4516
  %v4961 = vpack.c.b16 %v4525, %v4521
  %v4962 = vpack.c.b16 %v4526, %v4522
  %v4963 = vpack.c.b16 %v4527, %v4523
  %v4964 = vpack.c.b16 %v4528, %v4524
  %v4965 = vpack.c.b16 %v4533, %v4529
  %v4966 = vpack.c.b16 %v4534, %v4530
  %v4967 = vpack.c.b16 %v4535, %v4531
  %v4968 = vpack.c.b16 %v4536, %v4532
  %v4969 = vpack.c.b16 %v4541, %v4537
  %v4970 = vpack.c.b16 %v4542, %v4538
  %v4971 = vpack.c.b16 %v4543, %v4539
  %v4972 = vpack.c.b16 %v4544, %v4540
  %v4973 = vpack.c.b16 %v4549, %v4545
  %v4974 = vpack.c.b16 %v4550, %v4546
  %v4975 = vpack.c.b16 %v4551, %v4547
  %v4976 = vpack.c.b16 %v4552, %v4548
  %v4977 = vpack.c.b16 %v4557, %v4553
  %v4978 = vpack.c.b16 %v4558, %v4554
  %v4979 = vpack.c.b16 %v4559, %v4555
  %v4980 = vpack.c.b16 %v4560, %v4556
  %v4981 = vpack.c.b16 %v4565, %v4561
  %v4982 = vpack.c.b16 %v4566, %v4562
  %v4983 = vpack.c.b16 %v4567, %v4563
  %v4984 = vpack.c.b16 %v4568, %v4564
  %v4985 = vpack.c.b16 %v4573, %v4569
  %v4986 = vpack.c.b16 %v4574, %v4570
  %v4987 = vpack.c.b16 %v4575, %v4571
  %v4988 = vpack.c.b16 %v4576, %v4572
  %v4989 = vpack.c.b16 %v4581, %v4577
  %v4990 = vpack.c.b16 %v4582, %v4578
  %v4991 = vpack.c.b16 %v4583, %v4579
  %v4992 = vpack.c.b16 %v4584, %v4580
  %v4993 = vpack.c.b16 %v4589, %v4585
  %v4994 = vpack.c.b16 %v4590, %v4586
  %v4995 = vpack.c.b16 %v4591, %v4587
  %v4996 = vpack.c.b16 %v4592, %v4588
  %v4997 = vpack.c.b16 %v4597, %v4593
  %v4998 = vpack.c.b16 %v4598, %v4594
  %v4999 = vpack.c.b16 %v4599, %v4595
  %v5000 = vpack.c.b16 %v4600, %v4596
  %v5001 = vpack.c.b16 %v4605, %v4601
  %v5002 = vpack.c.b16 %v4606, %v4602
  %v5003 = vpack.c.b16 %v4607, %v4603
  %v5004 = vpack.c.b16 %v4608, %v4604
  %v5005 = vpack.c.b16 %v4613, %v4609
  %v5006 = vpack.c.b16 %v4614, %v4610
  %v5007 = vpack.c.b16 %v4615, %v4611
  %v5008 = vpack.c.b16 %v4616, %v4612
  %v5009 = vpack.c.b16 %v4621, %v4617
  %v5010 = vpack.c.b16 %v4622, %v4618
  %v5011 = vpack.c.b16 %v4623, %v4619
  %v5012 = vpack.c.b16 %v4624, %v4620
  %v5013 = vpack.c.b16 %v4629, %v4625
  %v5014 = vpack.c.b16 %v4630, %v4626
  %v5015 = vpack.c.b16 %v4631, %v4627
  %v5016 = vpack.c.b16 %v4632, %v4628
  %v5017 = vpack.c.b16 %v4637, %v4633
  %v5018 = vpack.c.b16 %v4638, %v4634
  %v5019 = vpack.c.b16 %v4639, %v4635
  %v5020 = vpack.c.b16 %v4640, %v4636
  %v5021 = vpack.c.b16 %v4645, %v4641
  %v5022 = vpack.c.b16 %v4646, %v4642
  %v5023 = vpack.c.b16 %v4647, %v4643
  %v5024 = vpack.c.b16 %v4648, %v4644
  %v5025 = vpack.c.b16 %v4653, %v4649
  %v5026 = vpack.c.b16 %v4654, %v4650
  %v5027 = vpack.c.b16 %v4655, %v4651
  %v5028 = vpack.c.b16 %v4656, %v4652
  %v5029 = vpack.c.b16 %v4661, %v4657
  %v5030 = vpack.c.b16 %v4662, %v4658
  %v5031 = vpack.c.b16 %v4663, %v4659
  %v5032 = vpack.c.b16 %v4664, %v4660
  %v5033 = vpack.c.b16 %v4669, %v4665
  %v5034 = vpack.c.b16 %v4670, %v4666
  %v5035 = vpack.c.b16 %v4671, %v4667
  %v5036 = vpack.c.b16 %v4672, %v4668
  %v5037 = vpack.c.b16 %v4677, %v4673
  %v5038 = vpack.c.b16 %v4678, %v4674
  %v5039 = vpack.c.b16 %v4679, %v4675
  %v5040 = vpack.c.b16 %v4680, %v4676
  %v5041 = vpack.c.b16 %v4685, %v4681
  %v5042 = vpack.c.b16 %v4686, %v4682
  %v5043 = vpack.c.b16 %v4687, %v4683
  %v5044 = vpack.c.b16 %v4688, %v4684
  %v5045 = vpack.c.b16 %v4693, %v4689
  %v5046 = vpack.c.b16 %v4694, %v4690
  %v5047 = vpack.c.b16 %v4695, %v4691
  %v5048 = vpack.c.b16 %v4696, %v4692
  %v5049 = vpack.c.b16 %v4701, %v4697
  %v5050 = vpack.c.b16 %v4702, %v4698
  %v5051 = vpack.c.b16 %v4703, %v4699
  %v5052 = vpack.c.b16 %v4704, %v4700
  %v5053 = vpack.c.b16 %v4709, %v4705
  %v5054 = vpack.c.b16 %v4710, %v4706
  %v5055 = vpack.c.b16 %v4711, %v4707
  %v5056 = vpack.c.b16 %v4712, %v4708
  %v5057 = vpack.c.b16 %v4717, %v4713
  %v5058 = vpack.c.b16 %v4718, %v4714
  %v5059 = vpack.c.b16 %v4719, %v4715
  %v5060 = vpack.c.b16 %v4720, %v4716
  %v5061 = vpack.c.b16 %v4725, %v4721
  %v5062 = vpack.c.b16 %v4726, %v4722
  %v5063 = vpack.c.b16 %v4727, %v4723
  %v5064 = vpack.c.b16 %v4728, %v4724
  %v5065 = vpack.c.b16 %v4733, %v4729
  %v5066 = vpack.c.b16 %v4734, %v4730
  %v5067 = vpack.c.b16 %v4735, %v4731
  %v5068 = vpack.c.b16 %v4736, %v4732
  %v5069 = vpack.c.b16 %v4741, %v4737
  %v5070 = vpack.c.b16 %v4742, %v4738
  %v5071 = vpack.c.b16 %v4743, %v4739
  %v5072 = vpack.c.b16 %v4744, %v4740
  %v5073 = vpack.c.b16 %v4749, %v4745
  %v5074 = vpack.c.b16 %v4750, %v4746
  %v5075 = vpack.c.b16 %v4751, %v4747
  %v5076 = vpack.c.b16 %v4752, %v4748
  %v5077 = vpack.c.b16 %v4757, %v4753
  %v5078 = vpack.c.b16 %v4758, %v4754
  %v5079 = vpack.c.b16 %v4759, %v4755
  %v5080 = vpack.c.b16 %v4760, %v4756
  %v5081 = vpack.c.b16 %v4765, %v4761
  %v5082 = vpack.c.b16 %v4766, %v4762
  %v5083 = vpack.c.b16 %v4767, %v4763
  %v5084 = vpack.c.b16 %v4768, %v4764
  %v5085 = vpack.c.b16 %v4773, %v4769
  %v5086 = vpack.c.b16 %v4774, %v4770
  %v5087 = vpack.c.b16 %v4775, %v4771
  %v5088 = vpack.c.b16 %v4776, %v4772
  %v5089 = vpack.c.b16 %v4781, %v4777
  %v5090 = vpack.c.b16 %v4782, %v4778
  %v5091 = vpack.c.b16 %v4783, %v4779
  %v5092 = vpack.c.b16 %v4784, %v4780
  %v5093 = vpack.c.b16 %v4789, %v4785
  %v5094 = vpack.c.b16 %v4790, %v4786
  %v5095 = vpack.c.b16 %v4791, %v4787
  %v5096 = vpack.c.b16 %v4792, %v4788
  %v5097 = vpack.c.b16 %v4797, %v4793
  %v5098 = vpack.c.b16 %v4798, %v4794
  %v5099 = vpack.c.b16 %v4799, %v4795
  %v5100 = vpack.c.b16 %v4800, %v4796
  %v5101 = vpack.c.b16 %v4805, %v4801
  %v5102 = vpack.c.b16 %v4806, %v4802
  %v5103 = vpack.c.b16 %v4807, %v4803
  %v5104 = vpack.c.b16 %v4808, %v4804
  %v5105 = vpack.c.b16 %v4813, %v4809
  %v5106 = vpack.c.b16 %v4814, %v4810
  %v5107 = vpack.c.b16 %v4815, %v4811
  %v5108 = vpack.c.b16 %v4816, %v4812
  %v5109 = vpack.c.b16 %v4821, %v4817
  %v5110 = vpack.c.b16 %v4822, %v4818
  %v5111 = vpack.c.b16 %v4823, %v4819
  %v5112 = vpack.c.b16 %v4824, %v4820
  %v5113 = vpack.c.b16 %v4829, %v4825
  %v5114 = vpack.c.b16 %v4830, %v4826
  %v5115 = vpack.c.b16 %v4831, %v4827
  %v5116 = vpack.c.b16 %v4832, %v4828
  %v5117 = vpack.c.b16 %v4837, %v4833
  %v5118 = vpack.c.b16 %v4838, %v4834
  %v5119 = vpack.c.b16 %v4839, %v4835
  %v5120 = vpack.c.b16 %v4840, %v4836
  %v5121 = vpack.c.b16 %v4845, %v4841
  %v5122 = vpack.c.b16 %v4846, %v4842
  %v5123 = vpack.c.b16 %v4847, %v4843
  %v5124 = vpack.c.b16 %v4848, %v4844
  %v5125 = vpack.c.b16 %v4853, %v4849
  %v5126 = vpack.c.b16 %v4854, %v4850
  %v5127 = vpack.c.b16 %v4855, %v4851
  %v5128 = vpack.c.b16 %v4856, %v4852
  %v5129 = vpack.c.b16 %v4861, %v4857
  %v5130 = vpack.c.b16 %v4862, %v4858
  %v5131 = vpack.c.b16 %v4863, %v4859
  %v5132 = vpack.c.b16 %v4864, %v4860
  %v5133 = vpack.c.b16 %v4869, %v4865
  %v5134 = vpack.c.b16 %v4870, %v4866
  %v5135 = vpack.c.b16 %v4871, %v4867
  %v5136 = vpack.c.b16 %v4872, %v4868
  %v5137 = vpack.c.b16 %v4877, %v4873
  %v5138 = vpack.c.b16 %v4878, %v4874
  %v5139 = vpack.c.b16 %v4879, %v4875
  %v5140 = vpack.c.b16 %v4880, %v4876
  %v5141 = vpack.c.b16 %v4885, %v4881
  %v5142 = vpack.c.b16 %v4886, %v4882
  %v5143 = vpack.c.b16 %v4887, %v4883
  %v5144 = vpack.c.b16 %v4888, %v4884
  %5401 = vmatprep.subr.bf16.mxu0 %v4918
  %5402 = vmatpush1.bf16.msra.mxu0 %v4917
  %5403 = vmatprep.subr.bf16.mxu0 %v4914
  %5404 = vmatpush1.bf16.msra.mxu0 %v4913
  %5405 = vmatprep.subr.bf16.mxu0 %v4910
  %5406 = vmatpush1.bf16.msra.mxu0 %v4909
  %5407 = vmatprep.subr.bf16.mxu0 %v4906
  %5408 = vmatpush1.bf16.msra.mxu0 %v4905
  %5409 = vmatprep.subr.bf16.mxu0 %v4902
  %5410 = vmatpush1.bf16.msra.mxu0 %v4901
  %5411 = vmatprep.subr.bf16.mxu0 %v4898
  %5412 = vmatpush1.bf16.msra.mxu0 %v4897
  %5413 = vmatprep.subr.bf16.mxu0 %v4894
  %5414 = vmatpush1.bf16.msra.mxu0 %v4893
  %5415 = vmatprep.subr.bf16.mxu0 %v4890
  %5416 = vmatpush1.bf16.msra.mxu0 %v4889
  %5417 = vmatprep.subr.bf16.mxu0 %v4950
  %5418 = vmatpush2.bf16.msra.mxu0 %v4949
  %5419 = vmatprep.subr.bf16.mxu0 %v4946
  %5420 = vmatpush2.bf16.msra.mxu0 %v4945
  %5421 = vmatprep.subr.bf16.mxu0 %v4942
  %5422 = vmatpush2.bf16.msra.mxu0 %v4941
  %5423 = vmatprep.subr.bf16.mxu0 %v4938
  %5424 = vmatpush2.bf16.msra.mxu0 %v4937
  %5425 = vmatprep.subr.bf16.mxu0 %v4934
  %5426 = vmatpush2.bf16.msra.mxu0 %v4933
  %5427 = vmatprep.subr.bf16.mxu0 %v4930
  %5428 = vmatpush2.bf16.msra.mxu0 %v4929
  %5429 = vmatprep.subr.bf16.mxu0 %v4926
  %5430 = vmatpush2.bf16.msra.mxu0 %v4925
  %5431 = vmatprep.subr.bf16.mxu0 %v4922
  %5432 = vmatpush2.bf16.msra.mxu0 %v4921
  %5433 = vmatprep.mubr.bf16.mxu0 %v3812
  %5434 = vmatmul.mubr.bf16.gmra.mxu0 %v3811
  %v5435 = vpop.f32.mrf.mxu0
  %v5436 = vadd.f32 %v4104, %v5435
  %v5437 = vpop.f32.mrf.mxu0
  %v5438 = vadd.f32 %v4108, %v5437
  %v5439 = vpop.f32.mrf.mxu0
  %v5440 = vadd.f32 %v4104, %v5439
  %v5441 = vpop.f32.mrf.mxu0
  %v5442 = vadd.f32 %v4108, %v5441
  %5443 = vmatprep.mubr.bf16.mxu0 %v3820
  %5444 = vmatmul.mubr.bf16.gmra.mxu0 %v3819
  %v5445 = vpop.f32.mrf.mxu0
  %v5446 = vadd.f32 %v4104, %v5445
  %v5447 = vpop.f32.mrf.mxu0
  %v5448 = vadd.f32 %v4108, %v5447
  %v5449 = vpop.f32.mrf.mxu0
  %v5450 = vadd.f32 %v4104, %v5449
  %v5451 = vpop.f32.mrf.mxu0
  %v5452 = vadd.f32 %v4108, %v5451
  %5453 = vmatprep.mubr.bf16.mxu0 %v3828
  %5454 = vmatmul.mubr.bf16.gmra.mxu0 %v3827
  %v5455 = vpop.f32.mrf.mxu0
  %v5456 = vadd.f32 %v4104, %v5455
  %v5457 = vpop.f32.mrf.mxu0
  %v5458 = vadd.f32 %v4108, %v5457
  %v5459 = vpop.f32.mrf.mxu0
  %v5460 = vadd.f32 %v4104, %v5459
  %v5461 = vpop.f32.mrf.mxu0
  %v5462 = vadd.f32 %v4108, %v5461
  %5463 = vmatprep.mubr.bf16.mxu0 %v3836
  %5464 = vmatmul.mubr.bf16.gmra.mxu0 %v3835
  %v5465 = vpop.f32.mrf.mxu0
  %v5466 = vadd.f32 %v4104, %v5465
  %v5467 = vpop.f32.mrf.mxu0
  %v5468 = vadd.f32 %v4108, %v5467
  %v5469 = vpop.f32.mrf.mxu0
  %v5470 = vadd.f32 %v4104, %v5469
  %v5471 = vpop.f32.mrf.mxu0
  %v5472 = vadd.f32 %v4108, %v5471
  %5473 = vdwg.mxu0
  %5474 = vmatprep.subr.bf16.mxu0 %v4982
  %5475 = vmatpush1.bf16.msra.mxu0 %v4981
  %5476 = vmatprep.subr.bf16.mxu0 %v4978
  %5477 = vmatpush1.bf16.msra.mxu0 %v4977
  %5478 = vmatprep.subr.bf16.mxu0 %v4974
  %5479 = vmatpush1.bf16.msra.mxu0 %v4973
  %5480 = vmatprep.subr.bf16.mxu0 %v4970
  %5481 = vmatpush1.bf16.msra.mxu0 %v4969
  %5482 = vmatprep.subr.bf16.mxu0 %v4966
  %5483 = vmatpush1.bf16.msra.mxu0 %v4965
  %5484 = vmatprep.subr.bf16.mxu0 %v4962
  %5485 = vmatpush1.bf16.msra.mxu0 %v4961
  %5486 = vmatprep.subr.bf16.mxu0 %v4958
  %5487 = vmatpush1.bf16.msra.mxu0 %v4957
  %5488 = vmatprep.subr.bf16.mxu0 %v4954
  %5489 = vmatpush1.bf16.msra.mxu0 %v4953
  %5490 = vmatprep.subr.bf16.mxu0 %v5014
  %5491 = vmatpush2.bf16.msra.mxu0 %v5013
  %5492 = vmatprep.subr.bf16.mxu0 %v5010
  %5493 = vmatpush2.bf16.msra.mxu0 %v5009
  %5494 = vmatprep.subr.bf16.mxu0 %v5006
  %5495 = vmatpush2.bf16.msra.mxu0 %v5005
  %5496 = vmatprep.subr.bf16.mxu0 %v5002
  %5497 = vmatpush2.bf16.msra.mxu0 %v5001
  %5498 = vmatprep.subr.bf16.mxu0 %v4998
  %5499 = vmatpush2.bf16.msra.mxu0 %v4997
  %5500 = vmatprep.subr.bf16.mxu0 %v4994
  %5501 = vmatpush2.bf16.msra.mxu0 %v4993
  %5502 = vmatprep.subr.bf16.mxu0 %v4990
  %5503 = vmatpush2.bf16.msra.mxu0 %v4989
  %5504 = vmatprep.subr.bf16.mxu0 %v4986
  %5505 = vmatpush2.bf16.msra.mxu0 %v4985
  %5506 = vmatprep.mubr.bf16.mxu0 %v3814
  %5507 = vmatmul.mubr.bf16.gmra.mxu0 %v3813
  %v5508 = vpop.f32.mrf.mxu0
  %v5509 = vadd.f32 %v5436, %v5508
  %v5510 = vpop.f32.mrf.mxu0
  %v5511 = vadd.f32 %v5438, %v5510
  %v5512 = vpop.f32.mrf.mxu0
  %v5513 = vadd.f32 %v5440, %v5512
  %v5514 = vpop.f32.mrf.mxu0
  %v5515 = vadd.f32 %v5442, %v5514
  %5516 = vmatprep.mubr.bf16.mxu0 %v3822
  %5517 = vmatmul.mubr.bf16.gmra.mxu0 %v3821
  %v5518 = vpop.f32.mrf.mxu0
  %v5519 = vadd.f32 %v5446, %v5518
  %v5520 = vpop.f32.mrf.mxu0
  %v5521 = vadd.f32 %v5448, %v5520
  %v5522 = vpop.f32.mrf.mxu0
  %v5523 = vadd.f32 %v5450, %v5522
  %v5524 = vpop.f32.mrf.mxu0
  %v5525 = vadd.f32 %v5452, %v5524
  %5526 = vmatprep.mubr.bf16.mxu0 %v3830
  %5527 = vmatmul.mubr.bf16.gmra.mxu0 %v3829
  %v5528 = vpop.f32.mrf.mxu0
  %v5529 = vadd.f32 %v5456, %v5528
  %v5530 = vpop.f32.mrf.mxu0
  %v5531 = vadd.f32 %v5458, %v5530
  %v5532 = vpop.f32.mrf.mxu0
  %v5533 = vadd.f32 %v5460, %v5532
  %v5534 = vpop.f32.mrf.mxu0
  %v5535 = vadd.f32 %v5462, %v5534
  %5536 = vmatprep.mubr.bf16.mxu0 %v3838
  %5537 = vmatmul.mubr.bf16.gmra.mxu0 %v3837
  %v5538 = vpop.f32.mrf.mxu0
  %v5539 = vadd.f32 %v5466, %v5538
  %v5540 = vpop.f32.mrf.mxu0
  %v5541 = vadd.f32 %v5468, %v5540
  %v5542 = vpop.f32.mrf.mxu0
  %v5543 = vadd.f32 %v5470, %v5542
  %v5544 = vpop.f32.mrf.mxu0
  %v5545 = vadd.f32 %v5472, %v5544
  %5546 = vdwg.mxu0
  %5547 = vmatprep.subr.bf16.mxu0 %v5046
  %5548 = vmatpush1.bf16.msra.mxu0 %v5045
  %5549 = vmatprep.subr.bf16.mxu0 %v5042
  %5550 = vmatpush1.bf16.msra.mxu0 %v5041
  %5551 = vmatprep.subr.bf16.mxu0 %v5038
  %5552 = vmatpush1.bf16.msra.mxu0 %v5037
  %5553 = vmatprep.subr.bf16.mxu0 %v5034
  %5554 = vmatpush1.bf16.msra.mxu0 %v5033
  %5555 = vmatprep.subr.bf16.mxu0 %v5030
  %5556 = vmatpush1.bf16.msra.mxu0 %v5029
  %5557 = vmatprep.subr.bf16.mxu0 %v5026
  %5558 = vmatpush1.bf16.msra.mxu0 %v5025
  %5559 = vmatprep.subr.bf16.mxu0 %v5022
  %5560 = vmatpush1.bf16.msra.mxu0 %v5021
  %5561 = vmatprep.subr.bf16.mxu0 %v5018
  %5562 = vmatpush1.bf16.msra.mxu0 %v5017
  %5563 = vmatprep.subr.bf16.mxu0 %v5078
  %5564 = vmatpush2.bf16.msra.mxu0 %v5077
  %5565 = vmatprep.subr.bf16.mxu0 %v5074
  %5566 = vmatpush2.bf16.msra.mxu0 %v5073
  %5567 = vmatprep.subr.bf16.mxu0 %v5070
  %5568 = vmatpush2.bf16.msra.mxu0 %v5069
  %5569 = vmatprep.subr.bf16.mxu0 %v5066
  %5570 = vmatpush2.bf16.msra.mxu0 %v5065
  %5571 = vmatprep.subr.bf16.mxu0 %v5062
  %5572 = vmatpush2.bf16.msra.mxu0 %v5061
  %5573 = vmatprep.subr.bf16.mxu0 %v5058
  %5574 = vmatpush2.bf16.msra.mxu0 %v5057
  %5575 = vmatprep.subr.bf16.mxu0 %v5054
  %5576 = vmatpush2.bf16.msra.mxu0 %v5053
  %5577 = vmatprep.subr.bf16.mxu0 %v5050
  %5578 = vmatpush2.bf16.msra.mxu0 %v5049
  %5579 = vmatprep.mubr.bf16.mxu0 %v3816
  %5580 = vmatmul.mubr.bf16.gmra.mxu0 %v3815
  %v5581 = vpop.f32.mrf.mxu0
  %v5582 = vadd.f32 %v5509, %v5581
  %v5583 = vpop.f32.mrf.mxu0
  %v5584 = vadd.f32 %v5511, %v5583
  %v5585 = vpop.f32.mrf.mxu0
  %v5586 = vadd.f32 %v5513, %v5585
  %v5587 = vpop.f32.mrf.mxu0
  %v5588 = vadd.f32 %v5515, %v5587
  %5589 = vmatprep.mubr.bf16.mxu0 %v3824
  %5590 = vmatmul.mubr.bf16.gmra.mxu0 %v3823
  %v5591 = vpop.f32.mrf.mxu0
  %v5592 = vadd.f32 %v5519, %v5591
  %v5593 = vpop.f32.mrf.mxu0
  %v5594 = vadd.f32 %v5521, %v5593
  %v5595 = vpop.f32.mrf.mxu0
  %v5596 = vadd.f32 %v5523, %v5595
  %v5597 = vpop.f32.mrf.mxu0
  %v5598 = vadd.f32 %v5525, %v5597
  %5599 = vmatprep.mubr.bf16.mxu0 %v3832
  %5600 = vmatmul.mubr.bf16.gmra.mxu0 %v3831
  %v5601 = vpop.f32.mrf.mxu0
  %v5602 = vadd.f32 %v5529, %v5601
  %v5603 = vpop.f32.mrf.mxu0
  %v5604 = vadd.f32 %v5531, %v5603
  %v5605 = vpop.f32.mrf.mxu0
  %v5606 = vadd.f32 %v5533, %v5605
  %v5607 = vpop.f32.mrf.mxu0
  %v5608 = vadd.f32 %v5535, %v5607
  %5609 = vmatprep.mubr.bf16.mxu0 %v3840
  %5610 = vmatmul.mubr.bf16.gmra.mxu0 %v3839
  %v5611 = vpop.f32.mrf.mxu0
  %v5612 = vadd.f32 %v5539, %v5611
  %v5613 = vpop.f32.mrf.mxu0
  %v5614 = vadd.f32 %v5541, %v5613
  %v5615 = vpop.f32.mrf.mxu0
  %v5616 = vadd.f32 %v5543, %v5615
  %v5617 = vpop.f32.mrf.mxu0
  %v5618 = vadd.f32 %v5545, %v5617
  %5619 = vdwg.mxu0
  %5620 = vmatprep.subr.bf16.mxu0 %v5110
  %5621 = vmatpush1.bf16.msra.mxu0 %v5109
  %5622 = vmatprep.subr.bf16.mxu0 %v5106
  %5623 = vmatpush1.bf16.msra.mxu0 %v5105
  %5624 = vmatprep.subr.bf16.mxu0 %v5102
  %5625 = vmatpush1.bf16.msra.mxu0 %v5101
  %5626 = vmatprep.subr.bf16.mxu0 %v5098
  %5627 = vmatpush1.bf16.msra.mxu0 %v5097
  %5628 = vmatprep.subr.bf16.mxu0 %v5094
  %5629 = vmatpush1.bf16.msra.mxu0 %v5093
  %5630 = vmatprep.subr.bf16.mxu0 %v5090
  %5631 = vmatpush1.bf16.msra.mxu0 %v5089
  %5632 = vmatprep.subr.bf16.mxu0 %v5086
  %5633 = vmatpush1.bf16.msra.mxu0 %v5085
  %5634 = vmatprep.subr.bf16.mxu0 %v5082
  %5635 = vmatpush1.bf16.msra.mxu0 %v5081
  %5636 = vmatprep.subr.bf16.mxu0 %v5142
  %5637 = vmatpush2.bf16.msra.mxu0 %v5141
  %5638 = vmatprep.subr.bf16.mxu0 %v5138
  %5639 = vmatpush2.bf16.msra.mxu0 %v5137
  %5640 = vmatprep.subr.bf16.mxu0 %v5134
  %5641 = vmatpush2.bf16.msra.mxu0 %v5133
  %5642 = vmatprep.subr.bf16.mxu0 %v5130
  %5643 = vmatpush2.bf16.msra.mxu0 %v5129
  %5644 = vmatprep.subr.bf16.mxu0 %v5126
  %5645 = vmatpush2.bf16.msra.mxu0 %v5125
  %5646 = vmatprep.subr.bf16.mxu0 %v5122
  %5647 = vmatpush2.bf16.msra.mxu0 %v5121
  %5648 = vmatprep.subr.bf16.mxu0 %v5118
  %5649 = vmatpush2.bf16.msra.mxu0 %v5117
  %5650 = vmatprep.subr.bf16.mxu0 %v5114
  %5651 = vmatpush2.bf16.msra.mxu0 %v5113
  %5652 = vmatprep.mubr.bf16.mxu0 %v3818
  %5653 = vmatmul.mubr.bf16.gmra.mxu0 %v3817
  %v5654 = vpop.f32.mrf.mxu0
  %v5655 = vadd.f32 %v5582, %v5654
  %v5656 = vpop.f32.mrf.mxu0
  %v5657 = vadd.f32 %v5584, %v5656
  %v5658 = vpop.f32.mrf.mxu0
  %v5659 = vadd.f32 %v5586, %v5658
  %v5660 = vpop.f32.mrf.mxu0
  %v5661 = vadd.f32 %v5588, %v5660
  %5662 = vmatprep.mubr.bf16.mxu0 %v3826
  %5663 = vmatmul.mubr.bf16.gmra.mxu0 %v3825
  %v5664 = vpop.f32.mrf.mxu0
  %v5665 = vadd.f32 %v5592, %v5664
  %v5666 = vpop.f32.mrf.mxu0
  %v5667 = vadd.f32 %v5594, %v5666
  %v5668 = vpop.f32.mrf.mxu0
  %v5669 = vadd.f32 %v5596, %v5668
  %v5670 = vpop.f32.mrf.mxu0
  %v5671 = vadd.f32 %v5598, %v5670
  %5672 = vmatprep.mubr.bf16.mxu0 %v3834
  %5673 = vmatmul.mubr.bf16.gmra.mxu0 %v3833
  %v5674 = vpop.f32.mrf.mxu0
  %v5675 = vadd.f32 %v5602, %v5674
  %v5676 = vpop.f32.mrf.mxu0
  %v5677 = vadd.f32 %v5604, %v5676
  %v5678 = vpop.f32.mrf.mxu0
  %v5679 = vadd.f32 %v5606, %v5678
  %v5680 = vpop.f32.mrf.mxu0
  %v5681 = vadd.f32 %v5608, %v5680
  %5682 = vmatprep.mubr.bf16.mxu0 %v3842
  %5683 = vmatmul.mubr.bf16.gmra.mxu0 %v3841
  %v5684 = vpop.f32.mrf.mxu0
  %v5685 = vadd.f32 %v5612, %v5684
  %v5686 = vpop.f32.mrf.mxu0
  %v5687 = vadd.f32 %v5614, %v5686
  %v5688 = vpop.f32.mrf.mxu0
  %v5689 = vadd.f32 %v5616, %v5688
  %v5690 = vpop.f32.mrf.mxu0
  %v5691 = vadd.f32 %v5618, %v5690
  %5692 = vdwg.mxu0
  %5693 = vmatprep.subr.bf16.mxu0 %v4920
  %5694 = vmatpush1.bf16.msra.mxu0 %v4919
  %5695 = vmatprep.subr.bf16.mxu0 %v4916
  %5696 = vmatpush1.bf16.msra.mxu0 %v4915
  %5697 = vmatprep.subr.bf16.mxu0 %v4912
  %5698 = vmatpush1.bf16.msra.mxu0 %v4911
  %5699 = vmatprep.subr.bf16.mxu0 %v4908
  %5700 = vmatpush1.bf16.msra.mxu0 %v4907
  %5701 = vmatprep.subr.bf16.mxu0 %v4904
  %5702 = vmatpush1.bf16.msra.mxu0 %v4903
  %5703 = vmatprep.subr.bf16.mxu0 %v4900
  %5704 = vmatpush1.bf16.msra.mxu0 %v4899
  %5705 = vmatprep.subr.bf16.mxu0 %v4896
  %5706 = vmatpush1.bf16.msra.mxu0 %v4895
  %5707 = vmatprep.subr.bf16.mxu0 %v4892
  %5708 = vmatpush1.bf16.msra.mxu0 %v4891
  %5709 = vmatprep.subr.bf16.mxu0 %v4952
  %5710 = vmatpush2.bf16.msra.mxu0 %v4951
  %5711 = vmatprep.subr.bf16.mxu0 %v4948
  %5712 = vmatpush2.bf16.msra.mxu0 %v4947
  %5713 = vmatprep.subr.bf16.mxu0 %v4944
  %5714 = vmatpush2.bf16.msra.mxu0 %v4943
  %5715 = vmatprep.subr.bf16.mxu0 %v4940
  %5716 = vmatpush2.bf16.msra.mxu0 %v4939
  %5717 = vmatprep.subr.bf16.mxu0 %v4936
  %5718 = vmatpush2.bf16.msra.mxu0 %v4935
  %5719 = vmatprep.subr.bf16.mxu0 %v4932
  %5720 = vmatpush2.bf16.msra.mxu0 %v4931
  %5721 = vmatprep.subr.bf16.mxu0 %v4928
  %5722 = vmatpush2.bf16.msra.mxu0 %v4927
  %5723 = vmatprep.subr.bf16.mxu0 %v4924
  %5724 = vmatpush2.bf16.msra.mxu0 %v4923
  %5725 = vmatprep.mubr.bf16.mxu0 %v3812
  %5726 = vmatmul.mubr.bf16.gmra.mxu0 %v3811
  %v5727 = vpop.f32.mrf.mxu0
  %v5728 = vadd.f32 %v4112, %v5727
  %v5729 = vpop.f32.mrf.mxu0
  %v5730 = vadd.f32 %v4116, %v5729
  %v5731 = vpop.f32.mrf.mxu0
  %v5732 = vadd.f32 %v4112, %v5731
  %v5733 = vpop.f32.mrf.mxu0
  %v5734 = vadd.f32 %v4116, %v5733
  %5735 = vmatprep.mubr.bf16.mxu0 %v3820
  %5736 = vmatmul.mubr.bf16.gmra.mxu0 %v3819
  %v5737 = vpop.f32.mrf.mxu0
  %v5738 = vadd.f32 %v4112, %v5737
  %v5739 = vpop.f32.mrf.mxu0
  %v5740 = vadd.f32 %v4116, %v5739
  %v5741 = vpop.f32.mrf.mxu0
  %v5742 = vadd.f32 %v4112, %v5741
  %v5743 = vpop.f32.mrf.mxu0
  %v5744 = vadd.f32 %v4116, %v5743
  %5745 = vmatprep.mubr.bf16.mxu0 %v3828
  %5746 = vmatmul.mubr.bf16.gmra.mxu0 %v3827
  %v5747 = vpop.f32.mrf.mxu0
  %v5748 = vadd.f32 %v4112, %v5747
  %v5749 = vpop.f32.mrf.mxu0
  %v5750 = vadd.f32 %v4116, %v5749
  %v5751 = vpop.f32.mrf.mxu0
  %v5752 = vadd.f32 %v4112, %v5751
  %v5753 = vpop.f32.mrf.mxu0
  %v5754 = vadd.f32 %v4116, %v5753
  %5755 = vmatprep.mubr.bf16.mxu0 %v3836
  %5756 = vmatmul.mubr.bf16.gmra.mxu0 %v3835
  %v5757 = vpop.f32.mrf.mxu0
  %v5758 = vadd.f32 %v4112, %v5757
  %v5759 = vpop.f32.mrf.mxu0
  %v5760 = vadd.f32 %v4116, %v5759
  %v5761 = vpop.f32.mrf.mxu0
  %v5762 = vadd.f32 %v4112, %v5761
  %v5763 = vpop.f32.mrf.mxu0
  %v5764 = vadd.f32 %v4116, %v5763
  %5765 = vdwg.mxu0
  %5766 = vmatprep.subr.bf16.mxu0 %v4984
  %5767 = vmatpush1.bf16.msra.mxu0 %v4983
  %5768 = vmatprep.subr.bf16.mxu0 %v4980
  %5769 = vmatpush1.bf16.msra.mxu0 %v4979
  %5770 = vmatprep.subr.bf16.mxu0 %v4976
  %5771 = vmatpush1.bf16.msra.mxu0 %v4975
  %5772 = vmatprep.subr.bf16.mxu0 %v4972
  %5773 = vmatpush1.bf16.msra.mxu0 %v4971
  %5774 = vmatprep.subr.bf16.mxu0 %v4968
  %5775 = vmatpush1.bf16.msra.mxu0 %v4967
  %5776 = vmatprep.subr.bf16.mxu0 %v4964
  %5777 = vmatpush1.bf16.msra.mxu0 %v4963
  %5778 = vmatprep.subr.bf16.mxu0 %v4960
  %5779 = vmatpush1.bf16.msra.mxu0 %v4959
  %5780 = vmatprep.subr.bf16.mxu0 %v4956
  %5781 = vmatpush1.bf16.msra.mxu0 %v4955
  %5782 = vmatprep.subr.bf16.mxu0 %v5016
  %5783 = vmatpush2.bf16.msra.mxu0 %v5015
  %5784 = vmatprep.subr.bf16.mxu0 %v5012
  %5785 = vmatpush2.bf16.msra.mxu0 %v5011
  %5786 = vmatprep.subr.bf16.mxu0 %v5008
  %5787 = vmatpush2.bf16.msra.mxu0 %v5007
  %5788 = vmatprep.subr.bf16.mxu0 %v5004
  %5789 = vmatpush2.bf16.msra.mxu0 %v5003
  %5790 = vmatprep.subr.bf16.mxu0 %v5000
  %5791 = vmatpush2.bf16.msra.mxu0 %v4999
  %5792 = vmatprep.subr.bf16.mxu0 %v4996
  %5793 = vmatpush2.bf16.msra.mxu0 %v4995
  %5794 = vmatprep.subr.bf16.mxu0 %v4992
  %5795 = vmatpush2.bf16.msra.mxu0 %v4991
  %5796 = vmatprep.subr.bf16.mxu0 %v4988
  %5797 = vmatpush2.bf16.msra.mxu0 %v4987
  %5798 = vmatprep.mubr.bf16.mxu0 %v3814
  %5799 = vmatmul.mubr.bf16.gmra.mxu0 %v3813
  %v5800 = vpop.f32.mrf.mxu0
  %v5801 = vadd.f32 %v5728, %v5800
  %v5802 = vpop.f32.mrf.mxu0
  %v5803 = vadd.f32 %v5730, %v5802
  %v5804 = vpop.f32.mrf.mxu0
  %v5805 = vadd.f32 %v5732, %v5804
  %v5806 = vpop.f32.mrf.mxu0
  %v5807 = vadd.f32 %v5734, %v5806
  %5808 = vmatprep.mubr.bf16.mxu0 %v3822
  %5809 = vmatmul.mubr.bf16.gmra.mxu0 %v3821
  %v5810 = vpop.f32.mrf.mxu0
  %v5811 = vadd.f32 %v5738, %v5810
  %v5812 = vpop.f32.mrf.mxu0
  %v5813 = vadd.f32 %v5740, %v5812
  %v5814 = vpop.f32.mrf.mxu0
  %v5815 = vadd.f32 %v5742, %v5814
  %v5816 = vpop.f32.mrf.mxu0
  %v5817 = vadd.f32 %v5744, %v5816
  %5818 = vmatprep.mubr.bf16.mxu0 %v3830
  %5819 = vmatmul.mubr.bf16.gmra.mxu0 %v3829
  %v5820 = vpop.f32.mrf.mxu0
  %v5821 = vadd.f32 %v5748, %v5820
  %v5822 = vpop.f32.mrf.mxu0
  %v5823 = vadd.f32 %v5750, %v5822
  %v5824 = vpop.f32.mrf.mxu0
  %v5825 = vadd.f32 %v5752, %v5824
  %v5826 = vpop.f32.mrf.mxu0
  %v5827 = vadd.f32 %v5754, %v5826
  %5828 = vmatprep.mubr.bf16.mxu0 %v3838
  %5829 = vmatmul.mubr.bf16.gmra.mxu0 %v3837
  %v5830 = vpop.f32.mrf.mxu0
  %v5831 = vadd.f32 %v5758, %v5830
  %v5832 = vpop.f32.mrf.mxu0
  %v5833 = vadd.f32 %v5760, %v5832
  %v5834 = vpop.f32.mrf.mxu0
  %v5835 = vadd.f32 %v5762, %v5834
  %v5836 = vpop.f32.mrf.mxu0
  %v5837 = vadd.f32 %v5764, %v5836
  %5838 = vdwg.mxu0
  %5839 = vmatprep.subr.bf16.mxu0 %v5048
  %5840 = vmatpush1.bf16.msra.mxu0 %v5047
  %5841 = vmatprep.subr.bf16.mxu0 %v5044
  %5842 = vmatpush1.bf16.msra.mxu0 %v5043
  %5843 = vmatprep.subr.bf16.mxu0 %v5040
  %5844 = vmatpush1.bf16.msra.mxu0 %v5039
  %5845 = vmatprep.subr.bf16.mxu0 %v5036
  %5846 = vmatpush1.bf16.msra.mxu0 %v5035
  %5847 = vmatprep.subr.bf16.mxu0 %v5032
  %5848 = vmatpush1.bf16.msra.mxu0 %v5031
  %5849 = vmatprep.subr.bf16.mxu0 %v5028
  %5850 = vmatpush1.bf16.msra.mxu0 %v5027
  %5851 = vmatprep.subr.bf16.mxu0 %v5024
  %5852 = vmatpush1.bf16.msra.mxu0 %v5023
  %5853 = vmatprep.subr.bf16.mxu0 %v5020
  %5854 = vmatpush1.bf16.msra.mxu0 %v5019
  %5855 = vmatprep.subr.bf16.mxu0 %v5080
  %5856 = vmatpush2.bf16.msra.mxu0 %v5079
  %5857 = vmatprep.subr.bf16.mxu0 %v5076
  %5858 = vmatpush2.bf16.msra.mxu0 %v5075
  %5859 = vmatprep.subr.bf16.mxu0 %v5072
  %5860 = vmatpush2.bf16.msra.mxu0 %v5071
  %5861 = vmatprep.subr.bf16.mxu0 %v5068
  %5862 = vmatpush2.bf16.msra.mxu0 %v5067
  %5863 = vmatprep.subr.bf16.mxu0 %v5064
  %5864 = vmatpush2.bf16.msra.mxu0 %v5063
  %5865 = vmatprep.subr.bf16.mxu0 %v5060
  %5866 = vmatpush2.bf16.msra.mxu0 %v5059
  %5867 = vmatprep.subr.bf16.mxu0 %v5056
  %5868 = vmatpush2.bf16.msra.mxu0 %v5055
  %5869 = vmatprep.subr.bf16.mxu0 %v5052
  %5870 = vmatpush2.bf16.msra.mxu0 %v5051
  %5871 = vmatprep.mubr.bf16.mxu0 %v3816
  %5872 = vmatmul.mubr.bf16.gmra.mxu0 %v3815
  %v5873 = vpop.f32.mrf.mxu0
  %v5874 = vadd.f32 %v5801, %v5873
  %v5875 = vpop.f32.mrf.mxu0
  %v5876 = vadd.f32 %v5803, %v5875
  %v5877 = vpop.f32.mrf.mxu0
  %v5878 = vadd.f32 %v5805, %v5877
  %v5879 = vpop.f32.mrf.mxu0
  %v5880 = vadd.f32 %v5807, %v5879
  %5881 = vmatprep.mubr.bf16.mxu0 %v3824
  %5882 = vmatmul.mubr.bf16.gmra.mxu0 %v3823
  %v5883 = vpop.f32.mrf.mxu0
  %v5884 = vadd.f32 %v5811, %v5883
  %v5885 = vpop.f32.mrf.mxu0
  %v5886 = vadd.f32 %v5813, %v5885
  %v5887 = vpop.f32.mrf.mxu0
  %v5888 = vadd.f32 %v5815, %v5887
  %v5889 = vpop.f32.mrf.mxu0
  %v5890 = vadd.f32 %v5817, %v5889
  %5891 = vmatprep.mubr.bf16.mxu0 %v3832
  %5892 = vmatmul.mubr.bf16.gmra.mxu0 %v3831
  %v5893 = vpop.f32.mrf.mxu0
  %v5894 = vadd.f32 %v5821, %v5893
  %v5895 = vpop.f32.mrf.mxu0
  %v5896 = vadd.f32 %v5823, %v5895
  %v5897 = vpop.f32.mrf.mxu0
  %v5898 = vadd.f32 %v5825, %v5897
  %v5899 = vpop.f32.mrf.mxu0
  %v5900 = vadd.f32 %v5827, %v5899
  %5901 = vmatprep.mubr.bf16.mxu0 %v3840
  %5902 = vmatmul.mubr.bf16.gmra.mxu0 %v3839
  %v5903 = vpop.f32.mrf.mxu0
  %v5904 = vadd.f32 %v5831, %v5903
  %v5905 = vpop.f32.mrf.mxu0
  %v5906 = vadd.f32 %v5833, %v5905
  %v5907 = vpop.f32.mrf.mxu0
  %v5908 = vadd.f32 %v5835, %v5907
  %v5909 = vpop.f32.mrf.mxu0
  %v5910 = vadd.f32 %v5837, %v5909
  %5911 = vdwg.mxu0
  %5912 = vmatprep.subr.bf16.mxu0 %v5112
  %5913 = vmatpush1.bf16.msra.mxu0 %v5111
  %5914 = vmatprep.subr.bf16.mxu0 %v5108
  %5915 = vmatpush1.bf16.msra.mxu0 %v5107
  %5916 = vmatprep.subr.bf16.mxu0 %v5104
  %5917 = vmatpush1.bf16.msra.mxu0 %v5103
  %5918 = vmatprep.subr.bf16.mxu0 %v5100
  %5919 = vmatpush1.bf16.msra.mxu0 %v5099
  %5920 = vmatprep.subr.bf16.mxu0 %v5096
  %5921 = vmatpush1.bf16.msra.mxu0 %v5095
  %5922 = vmatprep.subr.bf16.mxu0 %v5092
  %5923 = vmatpush1.bf16.msra.mxu0 %v5091
  %5924 = vmatprep.subr.bf16.mxu0 %v5088
  %5925 = vmatpush1.bf16.msra.mxu0 %v5087
  %5926 = vmatprep.subr.bf16.mxu0 %v5084
  %5927 = vmatpush1.bf16.msra.mxu0 %v5083
  %5928 = vmatprep.subr.bf16.mxu0 %v5144
  %5929 = vmatpush2.bf16.msra.mxu0 %v5143
  %5930 = vmatprep.subr.bf16.mxu0 %v5140
  %5931 = vmatpush2.bf16.msra.mxu0 %v5139
  %5932 = vmatprep.subr.bf16.mxu0 %v5136
  %5933 = vmatpush2.bf16.msra.mxu0 %v5135
  %5934 = vmatprep.subr.bf16.mxu0 %v5132
  %5935 = vmatpush2.bf16.msra.mxu0 %v5131
  %5936 = vmatprep.subr.bf16.mxu0 %v5128
  %5937 = vmatpush2.bf16.msra.mxu0 %v5127
  %5938 = vmatprep.subr.bf16.mxu0 %v5124
  %5939 = vmatpush2.bf16.msra.mxu0 %v5123
  %5940 = vmatprep.subr.bf16.mxu0 %v5120
  %5941 = vmatpush2.bf16.msra.mxu0 %v5119
  %5942 = vmatprep.subr.bf16.mxu0 %v5116
  %5943 = vmatpush2.bf16.msra.mxu0 %v5115
  %5944 = vmatprep.mubr.bf16.mxu0 %v3818
  %5945 = vmatmul.mubr.bf16.gmra.mxu0 %v3817
  %v5946 = vpop.f32.mrf.mxu0
  %v5947 = vadd.f32 %v5874, %v5946
  %v5948 = vpop.f32.mrf.mxu0
  %v5949 = vadd.f32 %v5876, %v5948
  %v5950 = vpop.f32.mrf.mxu0
  %v5951 = vadd.f32 %v5878, %v5950
  %v5952 = vpop.f32.mrf.mxu0
  %v5953 = vadd.f32 %v5880, %v5952
  %5954 = vmatprep.mubr.bf16.mxu0 %v3826
  %5955 = vmatmul.mubr.bf16.gmra.mxu0 %v3825
  %v5956 = vpop.f32.mrf.mxu0
  %v5957 = vadd.f32 %v5884, %v5956
  %v5958 = vpop.f32.mrf.mxu0
  %v5959 = vadd.f32 %v5886, %v5958
  %v5960 = vpop.f32.mrf.mxu0
  %v5961 = vadd.f32 %v5888, %v5960
  %v5962 = vpop.f32.mrf.mxu0
  %v5963 = vadd.f32 %v5890, %v5962
  %5964 = vmatprep.mubr.bf16.mxu0 %v3834
  %5965 = vmatmul.mubr.bf16.gmra.mxu0 %v3833
  %v5966 = vpop.f32.mrf.mxu0
  %v5967 = vadd.f32 %v5894, %v5966
  %v5968 = vpop.f32.mrf.mxu0
  %v5969 = vadd.f32 %v5896, %v5968
  %v5970 = vpop.f32.mrf.mxu0
  %v5971 = vadd.f32 %v5898, %v5970
  %v5972 = vpop.f32.mrf.mxu0
  %v5973 = vadd.f32 %v5900, %v5972
  %5974 = vmatprep.mubr.bf16.mxu0 %v3842
  %5975 = vmatmul.mubr.bf16.gmra.mxu0 %v3841
  %v5976 = vpop.f32.mrf.mxu0
  %v5977 = vadd.f32 %v5904, %v5976
  %v5978 = vpop.f32.mrf.mxu0
  %v5979 = vadd.f32 %v5906, %v5978
  %v5980 = vpop.f32.mrf.mxu0
  %v5981 = vadd.f32 %v5908, %v5980
  %v5982 = vpop.f32.mrf.mxu0
  %v5983 = vadd.f32 %v5910, %v5982
  %5984 = vdwg.mxu0
  %v5985 = vmax.f32 %v5655, 0.0
  %v5986 = vmax.f32 %v5657, 0.0
  %v5987 = vmax.f32 %v5947, 0.0
  %v5988 = vmax.f32 %v5949, 0.0
  %v5989 = vmax.f32 %v5659, 0.0
  %v5990 = vmax.f32 %v5661, 0.0
  %v5991 = vmax.f32 %v5951, 0.0
  %v5992 = vmax.f32 %v5953, 0.0
  %v5993 = vmax.f32 %v5665, 0.0
  %v5994 = vmax.f32 %v5667, 0.0
  %v5995 = vmax.f32 %v5957, 0.0
  %v5996 = vmax.f32 %v5959, 0.0
  %v5997 = vmax.f32 %v5669, 0.0
  %v5998 = vmax.f32 %v5671, 0.0
  %v5999 = vmax.f32 %v5961, 0.0
  %v6000 = vmax.f32 %v5963, 0.0
  %v6001 = vmax.f32 %v5675, 0.0
  %v6002 = vmax.f32 %v5677, 0.0
  %v6003 = vmax.f32 %v5967, 0.0
  %v6004 = vmax.f32 %v5969, 0.0
  %v6005 = vmax.f32 %v5679, 0.0
  %v6006 = vmax.f32 %v5681, 0.0
  %v6007 = vmax.f32 %v5971, 0.0
  %v6008 = vmax.f32 %v5973, 0.0
  %v6009 = vmax.f32 %v5685, 0.0
  %v6010 = vmax.f32 %v5687, 0.0
  %v6011 = vmax.f32 %v5977, 0.0
  %v6012 = vmax.f32 %v5979, 0.0
  %v6013 = vmax.f32 %v5689, 0.0
  %v6014 = vmax.f32 %v5691, 0.0
  %v6015 = vmax.f32 %v5981, 0.0
  %v6016 = vmax.f32 %v5983, 0.0
  %v6017 = vpack.c.bf16 %v5989, %v5985
  %v6018 = vpack.c.bf16 %v5990, %v5986
  %v6019 = vpack.c.bf16 %v5991, %v5987
  %v6020 = vpack.c.bf16 %v5992, %v5988
  %v6021 = vpack.c.bf16 %v5997, %v5993
  %v6022 = vpack.c.bf16 %v5998, %v5994
  %v6023 = vpack.c.bf16 %v5999, %v5995
  %v6024 = vpack.c.bf16 %v6000, %v5996
  %v6025 = vpack.c.bf16 %v6005, %v6001
  %v6026 = vpack.c.bf16 %v6006, %v6002
  %v6027 = vpack.c.bf16 %v6007, %v6003
  %v6028 = vpack.c.bf16 %v6008, %v6004
  %v6029 = vpack.c.bf16 %v6013, %v6009
  %v6030 = vpack.c.bf16 %v6014, %v6010
  %v6031 = vpack.c.bf16 %v6015, %v6011
  %v6032 = vpack.c.bf16 %v6016, %v6012
  %v6033 = vld [vmem:[%s16] sm:$0xff]
  %v6034 = vld [vmem:[%s16 + $0x8] sm:$0xff]
  %v6035 = vld [vmem:[%s16 + $0x10] sm:$0xff]
  %v6036 = vld [vmem:[%s16 + $0x18] sm:$0xff]
  %v6037 = vld [vmem:[%s16 + $0x20] sm:$0xff]
  %v6038 = vld [vmem:[%s16 + $0x28] sm:$0xff]
  %v6039 = vld [vmem:[%s16 + $0x30] sm:$0xff]
  %v6040 = vld [vmem:[%s16 + $0x38] sm:$0xff]
  %v6041 = vld [vmem:[%s16 + $0x40] sm:$0xff]
  %v6042 = vld [vmem:[%s16 + $0x48] sm:$0xff]
  %v6043 = vld [vmem:[%s16 + $0x50] sm:$0xff]
  %v6044 = vld [vmem:[%s16 + $0x58] sm:$0xff]
  %v6045 = vld [vmem:[%s16 + $0x60] sm:$0xff]
  %v6046 = vld [vmem:[%s16 + $0x68] sm:$0xff]
  %v6047 = vld [vmem:[%s16 + $0x70] sm:$0xff]
  %v6048 = vld [vmem:[%s16 + $0x78] sm:$0xff]
  %v6049 = vld [vmem:[%s16 + $0x80] sm:$0xff]
  %v6050 = vld [vmem:[%s16 + $0x88] sm:$0xff]
  %v6051 = vld [vmem:[%s16 + $0x90] sm:$0xff]
  %v6052 = vld [vmem:[%s16 + $0x98] sm:$0xff]
  %v6053 = vld [vmem:[%s16 + $0xa0] sm:$0xff]
  %v6054 = vld [vmem:[%s16 + $0xa8] sm:$0xff]
  %v6055 = vld [vmem:[%s16 + $0xb0] sm:$0xff]
  %v6056 = vld [vmem:[%s16 + $0xb8] sm:$0xff]
  %v6057 = vld [vmem:[%s16 + $0xc0] sm:$0xff]
  %v6058 = vld [vmem:[%s16 + $0xc8] sm:$0xff]
  %v6059 = vld [vmem:[%s16 + $0xd0] sm:$0xff]
  %v6060 = vld [vmem:[%s16 + $0xd8] sm:$0xff]
  %v6061 = vld [vmem:[%s16 + $0xe0] sm:$0xff]
  %v6062 = vld [vmem:[%s16 + $0xe8] sm:$0xff]
  %v6063 = vld [vmem:[%s16 + $0xf0] sm:$0xff]
  %v6064 = vld [vmem:[%s16 + $0xf8] sm:$0xff]
  %v6065 = vld [vmem:[%s16 + $0x100] sm:$0xff]
  %v6066 = vld [vmem:[%s16 + $0x108] sm:$0xff]
  %v6067 = vld [vmem:[%s16 + $0x110] sm:$0xff]
  %v6068 = vld [vmem:[%s16 + $0x118] sm:$0xff]
  %v6069 = vld [vmem:[%s16 + $0x120] sm:$0xff]
  %v6070 = vld [vmem:[%s16 + $0x128] sm:$0xff]
  %v6071 = vld [vmem:[%s16 + $0x130] sm:$0xff]
  %v6072 = vld [vmem:[%s16 + $0x138] sm:$0xff]
  %v6073 = vld [vmem:[%s16 + $0x140] sm:$0xff]
  %v6074 = vld [vmem:[%s16 + $0x148] sm:$0xff]
  %v6075 = vld [vmem:[%s16 + $0x150] sm:$0xff]
  %v6076 = vld [vmem:[%s16 + $0x158] sm:$0xff]
  %v6077 = vld [vmem:[%s16 + $0x160] sm:$0xff]
  %v6078 = vld [vmem:[%s16 + $0x168] sm:$0xff]
  %v6079 = vld [vmem:[%s16 + $0x170] sm:$0xff]
  %v6080 = vld [vmem:[%s16 + $0x178] sm:$0xff]
  %v6081 = vld [vmem:[%s16 + $0x180] sm:$0xff]
  %v6082 = vld [vmem:[%s16 + $0x188] sm:$0xff]
  %v6083 = vld [vmem:[%s16 + $0x190] sm:$0xff]
  %v6084 = vld [vmem:[%s16 + $0x198] sm:$0xff]
  %v6085 = vld [vmem:[%s16 + $0x1a0] sm:$0xff]
  %v6086 = vld [vmem:[%s16 + $0x1a8] sm:$0xff]
  %v6087 = vld [vmem:[%s16 + $0x1b0] sm:$0xff]
  %v6088 = vld [vmem:[%s16 + $0x1b8] sm:$0xff]
  %v6089 = vld [vmem:[%s16 + $0x1c0] sm:$0xff]
  %v6090 = vld [vmem:[%s16 + $0x1c8] sm:$0xff]
  %v6091 = vld [vmem:[%s16 + $0x1d0] sm:$0xff]
  %v6092 = vld [vmem:[%s16 + $0x1d8] sm:$0xff]
  %v6093 = vld [vmem:[%s16 + $0x1e0] sm:$0xff]
  %v6094 = vld [vmem:[%s16 + $0x1e8] sm:$0xff]
  %v6095 = vld [vmem:[%s16 + $0x1f0] sm:$0xff]
  %v6096 = vld [vmem:[%s16 + $0x1f8] sm:$0xff]
  %v6097 = vld [vmem:[%s17] sm:$0x3]
  %v6099 = vlaneseq
  %v6100 = vshrl.u32 %v6099, 7
  %v6101 = vsub.s32 0, %v6100
  %v6102 = vrot.slane %v6097, %v6101
  %v6103 = vlaneseq
  %v6104 = vshrl.u32 %v6103, 7
  %v6105 = vsub.s32 1, %v6104
  %v6106 = vrot.slane %v6097, %v6105
  %v6173 = vunpack.c.l.b16 %v6033
  %v6174 = vunpack.c.h.b16 %v6033
  %v6175 = vunpack.c.l.b16 %v6034
  %v6176 = vunpack.c.h.b16 %v6034
  %v6177 = vunpack.c.l.b16 %v6035
  %v6178 = vunpack.c.h.b16 %v6035
  %v6179 = vunpack.c.l.b16 %v6036
  %v6180 = vunpack.c.h.b16 %v6036
  %v6181 = vunpack.c.l.b16 %v6037
  %v6182 = vunpack.c.h.b16 %v6037
  %v6183 = vunpack.c.l.b16 %v6038
  %v6184 = vunpack.c.h.b16 %v6038
  %v6185 = vunpack.c.l.b16 %v6039
  %v6186 = vunpack.c.h.b16 %v6039
  %v6187 = vunpack.c.l.b16 %v6040
  %v6188 = vunpack.c.h.b16 %v6040
  %v6189 = vunpack.c.l.b16 %v6041
  %v6190 = vunpack.c.h.b16 %v6041
  %v6191 = vunpack.c.l.b16 %v6042
  %v6192 = vunpack.c.h.b16 %v6042
  %v6193 = vunpack.c.l.b16 %v6043
  %v6194 = vunpack.c.h.b16 %v6043
  %v6195 = vunpack.c.l.b16 %v6044
  %v6196 = vunpack.c.h.b16 %v6044
  %v6197 = vunpack.c.l.b16 %v6045
  %v6198 = vunpack.c.h.b16 %v6045
  %v6199 = vunpack.c.l.b16 %v6046
  %v6200 = vunpack.c.h.b16 %v6046
  %v6201 = vunpack.c.l.b16 %v6047
  %v6202 = vunpack.c.h.b16 %v6047
  %v6203 = vunpack.c.l.b16 %v6048
  %v6204 = vunpack.c.h.b16 %v6048
  %v6205 = vunpack.c.l.b16 %v6049
  %v6206 = vunpack.c.h.b16 %v6049
  %v6207 = vunpack.c.l.b16 %v6050
  %v6208 = vunpack.c.h.b16 %v6050
  %v6209 = vunpack.c.l.b16 %v6051
  %v6210 = vunpack.c.h.b16 %v6051
  %v6211 = vunpack.c.l.b16 %v6052
  %v6212 = vunpack.c.h.b16 %v6052
  %v6213 = vunpack.c.l.b16 %v6053
  %v6214 = vunpack.c.h.b16 %v6053
  %v6215 = vunpack.c.l.b16 %v6054
  %v6216 = vunpack.c.h.b16 %v6054
  %v6217 = vunpack.c.l.b16 %v6055
  %v6218 = vunpack.c.h.b16 %v6055
  %v6219 = vunpack.c.l.b16 %v6056
  %v6220 = vunpack.c.h.b16 %v6056
  %v6221 = vunpack.c.l.b16 %v6057
  %v6222 = vunpack.c.h.b16 %v6057
  %v6223 = vunpack.c.l.b16 %v6058
  %v6224 = vunpack.c.h.b16 %v6058
  %v6225 = vunpack.c.l.b16 %v6059
  %v6226 = vunpack.c.h.b16 %v6059
  %v6227 = vunpack.c.l.b16 %v6060
  %v6228 = vunpack.c.h.b16 %v6060
  %v6229 = vunpack.c.l.b16 %v6061
  %v6230 = vunpack.c.h.b16 %v6061
  %v6231 = vunpack.c.l.b16 %v6062
  %v6232 = vunpack.c.h.b16 %v6062
  %v6233 = vunpack.c.l.b16 %v6063
  %v6234 = vunpack.c.h.b16 %v6063
  %v6235 = vunpack.c.l.b16 %v6064
  %v6236 = vunpack.c.h.b16 %v6064
  %v6237 = vunpack.c.l.b16 %v6065
  %v6238 = vunpack.c.h.b16 %v6065
  %v6239 = vunpack.c.l.b16 %v6066
  %v6240 = vunpack.c.h.b16 %v6066
  %v6241 = vunpack.c.l.b16 %v6067
  %v6242 = vunpack.c.h.b16 %v6067
  %v6243 = vunpack.c.l.b16 %v6068
  %v6244 = vunpack.c.h.b16 %v6068
  %v6245 = vunpack.c.l.b16 %v6069
  %v6246 = vunpack.c.h.b16 %v6069
  %v6247 = vunpack.c.l.b16 %v6070
  %v6248 = vunpack.c.h.b16 %v6070
  %v6249 = vunpack.c.l.b16 %v6071
  %v6250 = vunpack.c.h.b16 %v6071
  %v6251 = vunpack.c.l.b16 %v6072
  %v6252 = vunpack.c.h.b16 %v6072
  %v6253 = vunpack.c.l.b16 %v6073
  %v6254 = vunpack.c.h.b16 %v6073
  %v6255 = vunpack.c.l.b16 %v6074
  %v6256 = vunpack.c.h.b16 %v6074
  %v6257 = vunpack.c.l.b16 %v6075
  %v6258 = vunpack.c.h.b16 %v6075
  %v6259 = vunpack.c.l.b16 %v6076
  %v6260 = vunpack.c.h.b16 %v6076
  %v6261 = vunpack.c.l.b16 %v6077
  %v6262 = vunpack.c.h.b16 %v6077
  %v6263 = vunpack.c.l.b16 %v6078
  %v6264 = vunpack.c.h.b16 %v6078
  %v6265 = vunpack.c.l.b16 %v6079
  %v6266 = vunpack.c.h.b16 %v6079
  %v6267 = vunpack.c.l.b16 %v6080
  %v6268 = vunpack.c.h.b16 %v6080
  %v6269 = vunpack.c.l.b16 %v6081
  %v6270 = vunpack.c.h.b16 %v6081
  %v6271 = vunpack.c.l.b16 %v6082
  %v6272 = vunpack.c.h.b16 %v6082
  %v6273 = vunpack.c.l.b16 %v6083
  %v6274 = vunpack.c.h.b16 %v6083
  %v6275 = vunpack.c.l.b16 %v6084
  %v6276 = vunpack.c.h.b16 %v6084
  %v6277 = vunpack.c.l.b16 %v6085
  %v6278 = vunpack.c.h.b16 %v6085
  %v6279 = vunpack.c.l.b16 %v6086
  %v6280 = vunpack.c.h.b16 %v6086
  %v6281 = vunpack.c.l.b16 %v6087
  %v6282 = vunpack.c.h.b16 %v6087
  %v6283 = vunpack.c.l.b16 %v6088
  %v6284 = vunpack.c.h.b16 %v6088
  %v6285 = vunpack.c.l.b16 %v6089
  %v6286 = vunpack.c.h.b16 %v6089
  %v6287 = vunpack.c.l.b16 %v6090
  %v6288 = vunpack.c.h.b16 %v6090
  %v6289 = vunpack.c.l.b16 %v6091
  %v6290 = vunpack.c.h.b16 %v6091
  %v6291 = vunpack.c.l.b16 %v6092
  %v6292 = vunpack.c.h.b16 %v6092
  %v6293 = vunpack.c.l.b16 %v6093
  %v6294 = vunpack.c.h.b16 %v6093
  %v6295 = vunpack.c.l.b16 %v6094
  %v6296 = vunpack.c.h.b16 %v6094
  %v6297 = vunpack.c.l.b16 %v6095
  %v6298 = vunpack.c.h.b16 %v6095
  %v6299 = vunpack.c.l.b16 %v6096
  %v6300 = vunpack.c.h.b16 %v6096
  %v6301 = vpack.c.b16 %v6175, %v6173
  %v6302 = vpack.c.b16 %v6176, %v6174
  %v6303 = vpack.c.b16 %v6179, %v6177
  %v6304 = vpack.c.b16 %v6180, %v6178
  %v6305 = vpack.c.b16 %v6183, %v6181
  %v6306 = vpack.c.b16 %v6184, %v6182
  %v6307 = vpack.c.b16 %v6187, %v6185
  %v6308 = vpack.c.b16 %v6188, %v6186
  %v6309 = vpack.c.b16 %v6191, %v6189
  %v6310 = vpack.c.b16 %v6192, %v6190
  %v6311 = vpack.c.b16 %v6195, %v6193
  %v6312 = vpack.c.b16 %v6196, %v6194
  %v6313 = vpack.c.b16 %v6199, %v6197
  %v6314 = vpack.c.b16 %v6200, %v6198
  %v6315 = vpack.c.b16 %v6203, %v6201
  %v6316 = vpack.c.b16 %v6204, %v6202
  %v6317 = vpack.c.b16 %v6207, %v6205
  %v6318 = vpack.c.b16 %v6208, %v6206
  %v6319 = vpack.c.b16 %v6211, %v6209
  %v6320 = vpack.c.b16 %v6212, %v6210
  %v6321 = vpack.c.b16 %v6215, %v6213
  %v6322 = vpack.c.b16 %v6216, %v6214
  %v6323 = vpack.c.b16 %v6219, %v6217
  %v6324 = vpack.c.b16 %v6220, %v6218
  %v6325 = vpack.c.b16 %v6223, %v6221
  %v6326 = vpack.c.b16 %v6224, %v6222
  %v6327 = vpack.c.b16 %v6227, %v6225
  %v6328 = vpack.c.b16 %v6228, %v6226
  %v6329 = vpack.c.b16 %v6231, %v6229
  %v6330 = vpack.c.b16 %v6232, %v6230
  %v6331 = vpack.c.b16 %v6235, %v6233
  %v6332 = vpack.c.b16 %v6236, %v6234
  %v6333 = vpack.c.b16 %v6239, %v6237
  %v6334 = vpack.c.b16 %v6240, %v6238
  %v6335 = vpack.c.b16 %v6243, %v6241
  %v6336 = vpack.c.b16 %v6244, %v6242
  %v6337 = vpack.c.b16 %v6247, %v6245
  %v6338 = vpack.c.b16 %v6248, %v6246
  %v6339 = vpack.c.b16 %v6251, %v6249
  %v6340 = vpack.c.b16 %v6252, %v6250
  %v6341 = vpack.c.b16 %v6255, %v6253
  %v6342 = vpack.c.b16 %v6256, %v6254
  %v6343 = vpack.c.b16 %v6259, %v6257
  %v6344 = vpack.c.b16 %v6260, %v6258
  %v6345 = vpack.c.b16 %v6263, %v6261
  %v6346 = vpack.c.b16 %v6264, %v6262
  %v6347 = vpack.c.b16 %v6267, %v6265
  %v6348 = vpack.c.b16 %v6268, %v6266
  %v6349 = vpack.c.b16 %v6271, %v6269
  %v6350 = vpack.c.b16 %v6272, %v6270
  %v6351 = vpack.c.b16 %v6275, %v6273
  %v6352 = vpack.c.b16 %v6276, %v6274
  %v6353 = vpack.c.b16 %v6279, %v6277
  %v6354 = vpack.c.b16 %v6280, %v6278
  %v6355 = vpack.c.b16 %v6283, %v6281
  %v6356 = vpack.c.b16 %v6284, %v6282
  %v6357 = vpack.c.b16 %v6287, %v6285
  %v6358 = vpack.c.b16 %v6288, %v6286
  %v6359 = vpack.c.b16 %v6291, %v6289
  %v6360 = vpack.c.b16 %v6292, %v6290
  %v6361 = vpack.c.b16 %v6295, %v6293
  %v6362 = vpack.c.b16 %v6296, %v6294
  %v6363 = vpack.c.b16 %v6299, %v6297
  %v6364 = vpack.c.b16 %v6300, %v6298
  %6429 = vmatprep.subr.bf16.mxu0 %v6316
  %6430 = vmatpush1.bf16.msra.mxu0 %v6315
  %6431 = vmatprep.subr.bf16.mxu0 %v6314
  %6432 = vmatpush1.bf16.msra.mxu0 %v6313
  %6433 = vmatprep.subr.bf16.mxu0 %v6312
  %6434 = vmatpush1.bf16.msra.mxu0 %v6311
  %6435 = vmatprep.subr.bf16.mxu0 %v6310
  %6436 = vmatpush1.bf16.msra.mxu0 %v6309
  %6437 = vmatprep.subr.bf16.mxu0 %v6308
  %6438 = vmatpush1.bf16.msra.mxu0 %v6307
  %6439 = vmatprep.subr.bf16.mxu0 %v6306
  %6440 = vmatpush1.bf16.msra.mxu0 %v6305
  %6441 = vmatprep.subr.bf16.mxu0 %v6304
  %6442 = vmatpush1.bf16.msra.mxu0 %v6303
  %6443 = vmatprep.subr.bf16.mxu0 %v6302
  %6444 = vmatpush1.bf16.msra.mxu0 %v6301
  %6445 = vmatprep.subr.bf16.mxu0 %v6332
  %6446 = vmatpush2.bf16.msra.mxu0 %v6331
  %6447 = vmatprep.subr.bf16.mxu0 %v6330
  %6448 = vmatpush2.bf16.msra.mxu0 %v6329
  %6449 = vmatprep.subr.bf16.mxu0 %v6328
  %6450 = vmatpush2.bf16.msra.mxu0 %v6327
  %6451 = vmatprep.subr.bf16.mxu0 %v6326
  %6452 = vmatpush2.bf16.msra.mxu0 %v6325
  %6453 = vmatprep.subr.bf16.mxu0 %v6324
  %6454 = vmatpush2.bf16.msra.mxu0 %v6323
  %6455 = vmatprep.subr.bf16.mxu0 %v6322
  %6456 = vmatpush2.bf16.msra.mxu0 %v6321
  %6457 = vmatprep.subr.bf16.mxu0 %v6320
  %6458 = vmatpush2.bf16.msra.mxu0 %v6319
  %6459 = vmatprep.subr.bf16.mxu0 %v6318
  %6460 = vmatpush2.bf16.msra.mxu0 %v6317
  %6461 = vmatprep.mubr.bf16.mxu0 %v6018
  %6462 = vmatmul.mubr.bf16.gmra.mxu0 %v6017
  %v6463 = vpop.f32.mrf.mxu0
  %v6464 = vadd.f32 %v6102, %v6463
  %v6465 = vpop.f32.mrf.mxu0
  %v6466 = vadd.f32 %v6106, %v6465
  %v6467 = vpop.f32.mrf.mxu0
  %v6468 = vadd.f32 %v6102, %v6467
  %v6469 = vpop.f32.mrf.mxu0
  %v6470 = vadd.f32 %v6106, %v6469
  %6471 = vmatprep.mubr.bf16.mxu0 %v6022
  %6472 = vmatmul.mubr.bf16.gmra.mxu0 %v6021
  %v6473 = vpop.f32.mrf.mxu0
  %v6474 = vadd.f32 %v6102, %v6473
  %v6475 = vpop.f32.mrf.mxu0
  %v6476 = vadd.f32 %v6106, %v6475
  %v6477 = vpop.f32.mrf.mxu0
  %v6478 = vadd.f32 %v6102, %v6477
  %v6479 = vpop.f32.mrf.mxu0
  %v6480 = vadd.f32 %v6106, %v6479
  %6481 = vmatprep.mubr.bf16.mxu0 %v6026
  %6482 = vmatmul.mubr.bf16.gmra.mxu0 %v6025
  %v6483 = vpop.f32.mrf.mxu0
  %v6484 = vadd.f32 %v6102, %v6483
  %v6485 = vpop.f32.mrf.mxu0
  %v6486 = vadd.f32 %v6106, %v6485
  %v6487 = vpop.f32.mrf.mxu0
  %v6488 = vadd.f32 %v6102, %v6487
  %v6489 = vpop.f32.mrf.mxu0
  %v6490 = vadd.f32 %v6106, %v6489
  %6491 = vmatprep.mubr.bf16.mxu0 %v6030
  %6492 = vmatmul.mubr.bf16.gmra.mxu0 %v6029
  %v6493 = vpop.f32.mrf.mxu0
  %v6494 = vadd.f32 %v6102, %v6493
  %v6495 = vpop.f32.mrf.mxu0
  %v6496 = vadd.f32 %v6106, %v6495
  %v6497 = vpop.f32.mrf.mxu0
  %v6498 = vadd.f32 %v6102, %v6497
  %v6499 = vpop.f32.mrf.mxu0
  %v6500 = vadd.f32 %v6106, %v6499
  %6501 = vdwg.mxu0
  %6502 = vmatprep.subr.bf16.mxu0 %v6348
  %6503 = vmatpush1.bf16.msra.mxu0 %v6347
  %6504 = vmatprep.subr.bf16.mxu0 %v6346
  %6505 = vmatpush1.bf16.msra.mxu0 %v6345
  %6506 = vmatprep.subr.bf16.mxu0 %v6344
  %6507 = vmatpush1.bf16.msra.mxu0 %v6343
  %6508 = vmatprep.subr.bf16.mxu0 %v6342
  %6509 = vmatpush1.bf16.msra.mxu0 %v6341
  %6510 = vmatprep.subr.bf16.mxu0 %v6340
  %6511 = vmatpush1.bf16.msra.mxu0 %v6339
  %6512 = vmatprep.subr.bf16.mxu0 %v6338
  %6513 = vmatpush1.bf16.msra.mxu0 %v6337
  %6514 = vmatprep.subr.bf16.mxu0 %v6336
  %6515 = vmatpush1.bf16.msra.mxu0 %v6335
  %6516 = vmatprep.subr.bf16.mxu0 %v6334
  %6517 = vmatpush1.bf16.msra.mxu0 %v6333
  %6518 = vmatprep.subr.bf16.mxu0 %v6364
  %6519 = vmatpush2.bf16.msra.mxu0 %v6363
  %6520 = vmatprep.subr.bf16.mxu0 %v6362
  %6521 = vmatpush2.bf16.msra.mxu0 %v6361
  %6522 = vmatprep.subr.bf16.mxu0 %v6360
  %6523 = vmatpush2.bf16.msra.mxu0 %v6359
  %6524 = vmatprep.subr.bf16.mxu0 %v6358
  %6525 = vmatpush2.bf16.msra.mxu0 %v6357
  %6526 = vmatprep.subr.bf16.mxu0 %v6356
  %6527 = vmatpush2.bf16.msra.mxu0 %v6355
  %6528 = vmatprep.subr.bf16.mxu0 %v6354
  %6529 = vmatpush2.bf16.msra.mxu0 %v6353
  %6530 = vmatprep.subr.bf16.mxu0 %v6352
  %6531 = vmatpush2.bf16.msra.mxu0 %v6351
  %6532 = vmatprep.subr.bf16.mxu0 %v6350
  %6533 = vmatpush2.bf16.msra.mxu0 %v6349
  %6534 = vmatprep.mubr.bf16.mxu0 %v6020
  %6535 = vmatmul.mubr.bf16.gmra.mxu0 %v6019
  %v6536 = vpop.f32.mrf.mxu0
  %v6537 = vadd.f32 %v6464, %v6536
  %v6538 = vpop.f32.mrf.mxu0
  %v6539 = vadd.f32 %v6466, %v6538
  %v6540 = vpop.f32.mrf.mxu0
  %v6541 = vadd.f32 %v6468, %v6540
  %v6542 = vpop.f32.mrf.mxu0
  %v6543 = vadd.f32 %v6470, %v6542
  %6544 = vmatprep.mubr.bf16.mxu0 %v6024
  %6545 = vmatmul.mubr.bf16.gmra.mxu0 %v6023
  %v6546 = vpop.f32.mrf.mxu0
  %v6547 = vadd.f32 %v6474, %v6546
  %v6548 = vpop.f32.mrf.mxu0
  %v6549 = vadd.f32 %v6476, %v6548
  %v6550 = vpop.f32.mrf.mxu0
  %v6551 = vadd.f32 %v6478, %v6550
  %v6552 = vpop.f32.mrf.mxu0
  %v6553 = vadd.f32 %v6480, %v6552
  %6554 = vmatprep.mubr.bf16.mxu0 %v6028
  %6555 = vmatmul.mubr.bf16.gmra.mxu0 %v6027
  %v6556 = vpop.f32.mrf.mxu0
  %v6557 = vadd.f32 %v6484, %v6556
  %v6558 = vpop.f32.mrf.mxu0
  %v6559 = vadd.f32 %v6486, %v6558
  %v6560 = vpop.f32.mrf.mxu0
  %v6561 = vadd.f32 %v6488, %v6560
  %v6562 = vpop.f32.mrf.mxu0
  %v6563 = vadd.f32 %v6490, %v6562
  %6564 = vmatprep.mubr.bf16.mxu0 %v6032
  %6565 = vmatmul.mubr.bf16.gmra.mxu0 %v6031
  %v6566 = vpop.f32.mrf.mxu0
  %v6567 = vadd.f32 %v6494, %v6566
  %v6568 = vpop.f32.mrf.mxu0
  %v6569 = vadd.f32 %v6496, %v6568
  %v6570 = vpop.f32.mrf.mxu0
  %v6571 = vadd.f32 %v6498, %v6570
  %v6572 = vpop.f32.mrf.mxu0
  %v6573 = vadd.f32 %v6500, %v6572
  %6574 = vdwg.mxu0
  %v6575 = vmax.f32 %v6537, 0.0
  %v6576 = vmax.f32 %v6539, 0.0
  %v6577 = vmax.f32 %v6541, 0.0
  %v6578 = vmax.f32 %v6543, 0.0
  %v6579 = vmax.f32 %v6547, 0.0
  %v6580 = vmax.f32 %v6549, 0.0
  %v6581 = vmax.f32 %v6551, 0.0
  %v6582 = vmax.f32 %v6553, 0.0
  %v6583 = vmax.f32 %v6557, 0.0
  %v6584 = vmax.f32 %v6559, 0.0
  %v6585 = vmax.f32 %v6561, 0.0
  %v6586 = vmax.f32 %v6563, 0.0
  %v6587 = vmax.f32 %v6567, 0.0
  %v6588 = vmax.f32 %v6569, 0.0
  %v6589 = vmax.f32 %v6571, 0.0
  %v6590 = vmax.f32 %v6573, 0.0
  %v6591 = vpack.c.bf16 %v6577, %v6575
  %v6592 = vpack.c.bf16 %v6578, %v6576
  %v6593 = vpack.c.bf16 %v6581, %v6579
  %v6594 = vpack.c.bf16 %v6582, %v6580
  %v6595 = vpack.c.bf16 %v6585, %v6583
  %v6596 = vpack.c.bf16 %v6586, %v6584
  %v6597 = vpack.c.bf16 %v6589, %v6587
  %v6598 = vpack.c.bf16 %v6590, %v6588
  %v6599 = vld [vmem:[%s18] sm:$0xf]
  %v6600 = vld [vmem:[%s18 + $0x4] sm:$0xf]
  %v6601 = vld [vmem:[%s18 + $0x8] sm:$0xf]
  %v6602 = vld [vmem:[%s18 + $0xc] sm:$0xf]
  %v6603 = vld [vmem:[%s18 + $0x10] sm:$0xf]
  %v6604 = vld [vmem:[%s18 + $0x14] sm:$0xf]
  %v6605 = vld [vmem:[%s18 + $0x18] sm:$0xf]
  %v6606 = vld [vmem:[%s18 + $0x1c] sm:$0xf]
  %v6607 = vld [vmem:[%s18 + $0x20] sm:$0xf]
  %v6608 = vld [vmem:[%s18 + $0x24] sm:$0xf]
  %v6609 = vld [vmem:[%s18 + $0x28] sm:$0xf]
  %v6610 = vld [vmem:[%s18 + $0x2c] sm:$0xf]
  %v6611 = vld [vmem:[%s18 + $0x30] sm:$0xf]
  %v6612 = vld [vmem:[%s18 + $0x34] sm:$0xf]
  %v6613 = vld [vmem:[%s18 + $0x38] sm:$0xf]
  %v6614 = vld [vmem:[%s18 + $0x3c] sm:$0xf]
  %v6615 = vld [vmem:[%s18 + $0x40] sm:$0xf]
  %v6616 = vld [vmem:[%s18 + $0x44] sm:$0xf]
  %v6617 = vld [vmem:[%s18 + $0x48] sm:$0xf]
  %v6618 = vld [vmem:[%s18 + $0x4c] sm:$0xf]
  %v6619 = vld [vmem:[%s18 + $0x50] sm:$0xf]
  %v6620 = vld [vmem:[%s18 + $0x54] sm:$0xf]
  %v6621 = vld [vmem:[%s18 + $0x58] sm:$0xf]
  %v6622 = vld [vmem:[%s18 + $0x5c] sm:$0xf]
  %v6623 = vld [vmem:[%s18 + $0x60] sm:$0xf]
  %v6624 = vld [vmem:[%s18 + $0x64] sm:$0xf]
  %v6625 = vld [vmem:[%s18 + $0x68] sm:$0xf]
  %v6626 = vld [vmem:[%s18 + $0x6c] sm:$0xf]
  %v6627 = vld [vmem:[%s18 + $0x70] sm:$0xf]
  %v6628 = vld [vmem:[%s18 + $0x74] sm:$0xf]
  %v6629 = vld [vmem:[%s18 + $0x78] sm:$0xf]
  %v6630 = vld [vmem:[%s18 + $0x7c] sm:$0xf]
  %v6631 = vld [vmem:[%s19] sm:$0x1]
  %v6633 = vlaneseq
  %v6634 = vshrl.u32 %v6633, 7
  %v6635 = vsub.s32 0, %v6634
  %v6636 = vrot.slane %v6631, %v6635
  %v6670 = vunpack.c.l.b16 %v6599
  %v6671 = vunpack.c.l.b16 %v6600
  %v6672 = vunpack.c.l.b16 %v6601
  %v6673 = vunpack.c.l.b16 %v6602
  %v6674 = vunpack.c.l.b16 %v6603
  %v6675 = vunpack.c.l.b16 %v6604
  %v6676 = vunpack.c.l.b16 %v6605
  %v6677 = vunpack.c.l.b16 %v6606
  %v6678 = vunpack.c.l.b16 %v6607
  %v6679 = vunpack.c.l.b16 %v6608
  %v6680 = vunpack.c.l.b16 %v6609
  %v6681 = vunpack.c.l.b16 %v6610
  %v6682 = vunpack.c.l.b16 %v6611
  %v6683 = vunpack.c.l.b16 %v6612
  %v6684 = vunpack.c.l.b16 %v6613
  %v6685 = vunpack.c.l.b16 %v6614
  %v6686 = vunpack.c.l.b16 %v6615
  %v6687 = vunpack.c.l.b16 %v6616
  %v6688 = vunpack.c.l.b16 %v6617
  %v6689 = vunpack.c.l.b16 %v6618
  %v6690 = vunpack.c.l.b16 %v6619
  %v6691 = vunpack.c.l.b16 %v6620
  %v6692 = vunpack.c.l.b16 %v6621
  %v6693 = vunpack.c.l.b16 %v6622
  %v6694 = vunpack.c.l.b16 %v6623
  %v6695 = vunpack.c.l.b16 %v6624
  %v6696 = vunpack.c.l.b16 %v6625
  %v6697 = vunpack.c.l.b16 %v6626
  %v6698 = vunpack.c.l.b16 %v6627
  %v6699 = vunpack.c.l.b16 %v6628
  %v6700 = vunpack.c.l.b16 %v6629
  %v6701 = vunpack.c.l.b16 %v6630
  %v6702 = vpack.c.b16 %v6671, %v6670
  %v6703 = vpack.c.b16 %v6673, %v6672
  %v6704 = vpack.c.b16 %v6675, %v6674
  %v6705 = vpack.c.b16 %v6677, %v6676
  %v6706 = vpack.c.b16 %v6679, %v6678
  %v6707 = vpack.c.b16 %v6681, %v6680
  %v6708 = vpack.c.b16 %v6683, %v6682
  %v6709 = vpack.c.b16 %v6685, %v6684
  %v6710 = vpack.c.b16 %v6687, %v6686
  %v6711 = vpack.c.b16 %v6689, %v6688
  %v6712 = vpack.c.b16 %v6691, %v6690
  %v6713 = vpack.c.b16 %v6693, %v6692
  %v6714 = vpack.c.b16 %v6695, %v6694
  %v6715 = vpack.c.b16 %v6697, %v6696
  %v6716 = vpack.c.b16 %v6699, %v6698
  %v6717 = vpack.c.b16 %v6701, %v6700
  %6734 = vmatprep.subr.bf16.mxu0 0
  %6735 = vmatpush1.bf16.msra.mxu0 %v6709
  %6736 = vmatprep.subr.bf16.mxu0 0
  %6737 = vmatpush1.bf16.msra.mxu0 %v6708
  %6738 = vmatprep.subr.bf16.mxu0 0
  %6739 = vmatpush1.bf16.msra.mxu0 %v6707
  %6740 = vmatprep.subr.bf16.mxu0 0
  %6741 = vmatpush1.bf16.msra.mxu0 %v6706
  %6742 = vmatprep.subr.bf16.mxu0 0
  %6743 = vmatpush1.bf16.msra.mxu0 %v6705
  %6744 = vmatprep.subr.bf16.mxu0 0
  %6745 = vmatpush1.bf16.msra.mxu0 %v6704
  %6746 = vmatprep.subr.bf16.mxu0 0
  %6747 = vmatpush1.bf16.msra.mxu0 %v6703
  %6748 = vmatprep.subr.bf16.mxu0 0
  %6749 = vmatpush1.bf16.msra.mxu0 %v6702
  %6750 = vmatprep.subr.bf16.mxu0 0
  %6751 = vmatpush2.bf16.msra.mxu0 %v6717
  %6752 = vmatprep.subr.bf16.mxu0 0
  %6753 = vmatpush2.bf16.msra.mxu0 %v6716
  %6754 = vmatprep.subr.bf16.mxu0 0
  %6755 = vmatpush2.bf16.msra.mxu0 %v6715
  %6756 = vmatprep.subr.bf16.mxu0 0
  %6757 = vmatpush2.bf16.msra.mxu0 %v6714
  %6758 = vmatprep.subr.bf16.mxu0 0
  %6759 = vmatpush2.bf16.msra.mxu0 %v6713
  %6760 = vmatprep.subr.bf16.mxu0 0
  %6761 = vmatpush2.bf16.msra.mxu0 %v6712
  %6762 = vmatprep.subr.bf16.mxu0 0
  %6763 = vmatpush2.bf16.msra.mxu0 %v6711
  %6764 = vmatprep.subr.bf16.mxu0 0
  %6765 = vmatpush2.bf16.msra.mxu0 %v6710
  %6766 = vmatprep.mubr.bf16.mxu0 %v6592
  %6767 = vmatmul.mubr.bf16.gmra.mxu0 %v6591
  %v6768 = vpop.f32.mrf.mxu0
  %v6769 = vadd.f32 %v6636, %v6768
  %v6770 = vpop.f32.mrf.mxu0
  %v6771 = vpop.f32.mrf.mxu0
  %v6772 = vadd.f32 %v6636, %v6771
  %v6773 = vpop.f32.mrf.mxu0
  %6774 = vmatprep.mubr.bf16.mxu0 %v6594
  %6775 = vmatmul.mubr.bf16.gmra.mxu0 %v6593
  %v6776 = vpop.f32.mrf.mxu0
  %v6777 = vadd.f32 %v6636, %v6776
  %v6778 = vpop.f32.mrf.mxu0
  %v6779 = vpop.f32.mrf.mxu0
  %v6780 = vadd.f32 %v6636, %v6779
  %v6781 = vpop.f32.mrf.mxu0
  %6782 = vmatprep.mubr.bf16.mxu0 %v6596
  %6783 = vmatmul.mubr.bf16.gmra.mxu0 %v6595
  %v6784 = vpop.f32.mrf.mxu0
  %v6785 = vadd.f32 %v6636, %v6784
  %v6786 = vpop.f32.mrf.mxu0
  %v6787 = vpop.f32.mrf.mxu0
  %v6788 = vadd.f32 %v6636, %v6787
  %v6789 = vpop.f32.mrf.mxu0
  %6790 = vmatprep.mubr.bf16.mxu0 %v6598
  %6791 = vmatmul.mubr.bf16.gmra.mxu0 %v6597
  %v6792 = vpop.f32.mrf.mxu0
  %v6793 = vadd.f32 %v6636, %v6792
  %v6794 = vpop.f32.mrf.mxu0
  %v6795 = vpop.f32.mrf.mxu0
  %v6796 = vadd.f32 %v6636, %v6795
  %v6797 = vpop.f32.mrf.mxu0
  %6798 = vdwg.mxu0
  %v6799 = vmax.f32 %v6769, 0.0
  %v6800 = vmax.f32 %v6772, 0.0
  %v6801 = vmax.f32 %v6777, 0.0
  %v6802 = vmax.f32 %v6780, 0.0
  %v6803 = vmax.f32 %v6785, 0.0
  %v6804 = vmax.f32 %v6788, 0.0
  %v6805 = vmax.f32 %v6793, 0.0
  %v6806 = vmax.f32 %v6796, 0.0
  %v6807 = vpack.c.bf16 %v6800, %v6799
  %v6808 = vpack.c.bf16 %v6802, %v6801
  %v6809 = vpack.c.bf16 %v6804, %v6803
  %v6810 = vpack.c.bf16 %v6806, %v6805
  %v6811 = vld [vmem:[%s20] sm:$0xf]
  %v6812 = vld [vmem:[%s20 + $0x4] sm:$0xf]
  %v6813 = vld [vmem:[%s20 + $0x8] sm:$0xf]
  %v6814 = vld [vmem:[%s20 + $0xc] sm:$0xf]
  %v6815 = vld [vmem:[%s20 + $0x10] sm:$0xf]
  %v6816 = vld [vmem:[%s20 + $0x14] sm:$0xf]
  %v6817 = vld [vmem:[%s20 + $0x18] sm:$0xf]
  %v6818 = vld [vmem:[%s20 + $0x1c] sm:$0xf]
  %v6819 = vld [vmem:[%s20 + $0x20] sm:$0xf]
  %v6820 = vld [vmem:[%s20 + $0x24] sm:$0xf]
  %v6821 = vld [vmem:[%s20 + $0x28] sm:$0xf]
  %v6822 = vld [vmem:[%s20 + $0x2c] sm:$0xf]
  %v6823 = vld [vmem:[%s20 + $0x30] sm:$0xf]
  %v6824 = vld [vmem:[%s20 + $0x34] sm:$0xf]
  %v6825 = vld [vmem:[%s20 + $0x38] sm:$0xf]
  %v6826 = vld [vmem:[%s20 + $0x3c] sm:$0xf]
  %v6827 = vld [vmem:[%s21] sm:$0x1]
  %v6829 = vlaneseq
  %v6830 = vshrl.u32 %v6829, 7
  %v6831 = vsub.s32 0, %v6830
  %v6832 = vrot.slane %v6827, %v6831
  %v6850 = vunpack.c.l.b16 %v6811
  %v6851 = vunpack.c.l.b16 %v6812
  %v6852 = vunpack.c.l.b16 %v6813
  %v6853 = vunpack.c.l.b16 %v6814
  %v6854 = vunpack.c.l.b16 %v6815
  %v6855 = vunpack.c.l.b16 %v6816
  %v6856 = vunpack.c.l.b16 %v6817
  %v6857 = vunpack.c.l.b16 %v6818
  %v6858 = vunpack.c.l.b16 %v6819
  %v6859 = vunpack.c.l.b16 %v6820
  %v6860 = vunpack.c.l.b16 %v6821
  %v6861 = vunpack.c.l.b16 %v6822
  %v6862 = vunpack.c.l.b16 %v6823
  %v6863 = vunpack.c.l.b16 %v6824
  %v6864 = vunpack.c.l.b16 %v6825
  %v6865 = vunpack.c.l.b16 %v6826
  %v6866 = vpack.c.b16 %v6851, %v6850
  %v6867 = vpack.c.b16 %v6853, %v6852
  %v6868 = vpack.c.b16 %v6855, %v6854
  %v6869 = vpack.c.b16 %v6857, %v6856
  %v6870 = vpack.c.b16 %v6859, %v6858
  %v6871 = vpack.c.b16 %v6861, %v6860
  %v6872 = vpack.c.b16 %v6863, %v6862
  %v6873 = vpack.c.b16 %v6865, %v6864
  %6882 = vmatprep.subr.bf16.mxu0 0
  %6883 = vmatpush1.bf16.msra.mxu0 %v6873
  %6884 = vmatprep.subr.bf16.mxu0 0
  %6885 = vmatpush1.bf16.msra.mxu0 %v6872
  %6886 = vmatprep.subr.bf16.mxu0 0
  %6887 = vmatpush1.bf16.msra.mxu0 %v6871
  %6888 = vmatprep.subr.bf16.mxu0 0
  %6889 = vmatpush1.bf16.msra.mxu0 %v6870
  %6890 = vmatprep.subr.bf16.mxu0 0
  %6891 = vmatpush1.bf16.msra.mxu0 %v6869
  %6892 = vmatprep.subr.bf16.mxu0 0
  %6893 = vmatpush1.bf16.msra.mxu0 %v6868
  %6894 = vmatprep.subr.bf16.mxu0 0
  %6895 = vmatpush1.bf16.msra.mxu0 %v6867
  %6896 = vmatprep.subr.bf16.mxu0 0
  %6897 = vmatpush1.bf16.msra.mxu0 %v6866
  %6898 = vmatprep.subr.bf16.mxu0 0
  %6899 = vmatpush2.bf16.msra.mxu0 0
  %6900 = vmatprep.subr.bf16.mxu0 0
  %6901 = vmatpush2.bf16.msra.mxu0 0
  %6902 = vmatprep.subr.bf16.mxu0 0
  %6903 = vmatpush2.bf16.msra.mxu0 0
  %6904 = vmatprep.subr.bf16.mxu0 0
  %6905 = vmatpush2.bf16.msra.mxu0 0
  %6906 = vmatprep.subr.bf16.mxu0 0
  %6907 = vmatpush2.bf16.msra.mxu0 0
  %6908 = vmatprep.subr.bf16.mxu0 0
  %6909 = vmatpush2.bf16.msra.mxu0 0
  %6910 = vmatprep.subr.bf16.mxu0 0
  %6911 = vmatpush2.bf16.msra.mxu0 0
  %6912 = vmatprep.subr.bf16.mxu0 0
  %6913 = vmatpush2.bf16.msra.mxu0 0
  %6914 = vmatprep.mubr.bf16.mxu0 0
  %6915 = vmatmul.mubr.bf16.gmra.mxu0 %v6807
  %v6916 = vpop.f32.mrf.mxu0
  %v6917 = vadd.f32 %v6832, %v6916
  %v6918 = vpop.f32.mrf.mxu0
  %v6919 = vpop.f32.mrf.mxu0
  %v6920 = vadd.f32 %v6832, %v6919
  %v6921 = vpop.f32.mrf.mxu0
  %6922 = vmatprep.mubr.bf16.mxu0 0
  %6923 = vmatmul.mubr.bf16.gmra.mxu0 %v6808
  %v6924 = vpop.f32.mrf.mxu0
  %v6925 = vadd.f32 %v6832, %v6924
  %v6926 = vpop.f32.mrf.mxu0
  %v6927 = vpop.f32.mrf.mxu0
  %v6928 = vadd.f32 %v6832, %v6927
  %v6929 = vpop.f32.mrf.mxu0
  %6930 = vmatprep.mubr.bf16.mxu0 0
  %6931 = vmatmul.mubr.bf16.gmra.mxu0 %v6809
  %v6932 = vpop.f32.mrf.mxu0
  %v6933 = vadd.f32 %v6832, %v6932
  %v6934 = vpop.f32.mrf.mxu0
  %v6935 = vpop.f32.mrf.mxu0
  %v6936 = vadd.f32 %v6832, %v6935
  %v6937 = vpop.f32.mrf.mxu0
  %6938 = vmatprep.mubr.bf16.mxu0 0
  %6939 = vmatmul.mubr.bf16.gmra.mxu0 %v6810
  %v6940 = vpop.f32.mrf.mxu0
  %v6941 = vadd.f32 %v6832, %v6940
  %v6942 = vpop.f32.mrf.mxu0
  %v6943 = vpop.f32.mrf.mxu0
  %v6944 = vadd.f32 %v6832, %v6943
  %v6945 = vpop.f32.mrf.mxu0
  %6946 = vdwg.mxu0
  %6947 = vmax.xlane.f32.xlu0 %v6917
  %v6948 = vpop.xlane.xlu0 %6947
  %6949 = vmax.xlane.f32.xlu0 %v6920
  %v6950 = vpop.xlane.xlu0 %6949
  %6951 = vmax.xlane.f32.xlu0 %v6925
  %v6952 = vpop.xlane.xlu0 %6951
  %6953 = vmax.xlane.f32.xlu0 %v6928
  %v6954 = vpop.xlane.xlu0 %6953
  %6955 = vmax.xlane.f32.xlu0 %v6933
  %v6956 = vpop.xlane.xlu0 %6955
  %6957 = vmax.xlane.f32.xlu0 %v6936
  %v6958 = vpop.xlane.xlu0 %6957
  %6959 = vmax.xlane.f32.xlu0 %v6941
  %v6960 = vpop.xlane.xlu0 %6959
  %6961 = vmax.xlane.f32.xlu0 %v6944
  %v6962 = vpop.xlane.xlu0 %6961
  %v6963 = vsub.f32 %v6917, %v6948
  %v6964 = vsub.f32 %v6920, %v6950
  %v6965 = vsub.f32 %v6925, %v6952
  %v6966 = vsub.f32 %v6928, %v6954
  %v6967 = vsub.f32 %v6933, %v6956
  %v6968 = vsub.f32 %v6936, %v6958
  %v6969 = vsub.f32 %v6941, %v6960
  %v6970 = vsub.f32 %v6944, %v6962
  %v6971 = vmul.f32 %v6963, 1.442695
  %v6972 = vpow.pop %v6971
  %v6973 = vmul.f32 %v6964, 1.442695
  %v6974 = vpow.pop %v6973
  %v6975 = vmul.f32 %v6965, 1.442695
  %v6976 = vpow.pop %v6975
  %v6977 = vmul.f32 %v6966, 1.442695
  %v6978 = vpow.pop %v6977
  %v6979 = vmul.f32 %v6967, 1.442695
  %v6980 = vpow.pop %v6979
  %v6981 = vmul.f32 %v6968, 1.442695
  %v6982 = vpow.pop %v6981
  %v6983 = vmul.f32 %v6969, 1.442695
  %v6984 = vpow.pop %v6983
  %v6985 = vmul.f32 %v6970, 1.442695
  %v6986 = vpow.pop %v6985
  %6987 = vadd.xlane.f32.xlu0 %v6972
  %v6988 = vpop.xlane.xlu0 %6987
  %6989 = vadd.xlane.f32.xlu0 %v6974
  %v6990 = vpop.xlane.xlu0 %6989
  %6991 = vadd.xlane.f32.xlu0 %v6976
  %v6992 = vpop.xlane.xlu0 %6991
  %6993 = vadd.xlane.f32.xlu0 %v6978
  %v6994 = vpop.xlane.xlu0 %6993
  %6995 = vadd.xlane.f32.xlu0 %v6980
  %v6996 = vpop.xlane.xlu0 %6995
  %6997 = vadd.xlane.f32.xlu0 %v6982
  %v6998 = vpop.xlane.xlu0 %6997
  %6999 = vadd.xlane.f32.xlu0 %v6984
  %v7000 = vpop.xlane.xlu0 %6999
  %7001 = vadd.xlane.f32.xlu0 %v6986
  %v7002 = vpop.xlane.xlu0 %7001
  %v7003 = vrcp.pop %v6988
  %v7004 = vmul.f32 %v6972, %v7003
  %v7005 = vrcp.pop %v6990
  %v7006 = vmul.f32 %v6974, %v7005
  %v7007 = vrcp.pop %v6992
  %v7008 = vmul.f32 %v6976, %v7007
  %v7009 = vrcp.pop %v6994
  %v7010 = vmul.f32 %v6978, %v7009
  %v7011 = vrcp.pop %v6996
  %v7012 = vmul.f32 %v6980, %v7011
  %v7013 = vrcp.pop %v6998
  %v7014 = vmul.f32 %v6982, %v7013
  %v7015 = vrcp.pop %v7000
  %v7016 = vmul.f32 %v6984, %v7015
  %v7017 = vrcp.pop %v7002
  %v7018 = vmul.f32 %v6986, %v7017
  %7019 = vst [vmem:[%s22] sm:$0xff] %v7004
  %7020 = vst [vmem:[%s22 + $0x8] sm:$0xff] %v7006
  %7021 = vst [vmem:[%s22 + $0x10] sm:$0xff] %v7008
  %7022 = vst [vmem:[%s22 + $0x18] sm:$0xff] %v7010
  %7023 = vst [vmem:[%s22 + $0x20] sm:$0xff] %v7012
  %7024 = vst [vmem:[%s22 + $0x28] sm:$0xff] %v7014
  %7025 = vst [vmem:[%s22 + $0x30] sm:$0xff] %v7016
  %7026 = vst [vmem:[%s22 + $0x38] sm:$0xff] %v7018
  // Predicated region
  $region90: #{_lambda_.1} parent=0 // pred_check
    _
  $region91: #{_lambda_.1} parent=0 // pred_check_branch
    %7028 = sbr.rel (0) target = $region93
  $region92: #{_lambda_.1} parent=0 // pred_region
    _
  $region93: #{_lambda_.1} parent=0 // pred_fallthru
    _
  // Predicated region
  $region94: #{_lambda_.1} parent=0 // pred_check
    _
  $region95: #{_lambda_.1} parent=0 // pred_check_branch
    %7030 = sbr.rel (0) target = $region97
  $region96: #{_lambda_.1} parent=0 // pred_region
    _
  $region97: #{_lambda_.1} parent=0 // pred_fallthru
    _

</llo_original>
